<compile_context>
chip_gen: v6e
topology: v6e:2x2x1
jax: 0.10.0
libtpu: 0.0.40
codegen_flags: <defaults>
</compile_context>

<pallas_src>
import jax
import jax.numpy as jnp
from jax.experimental import pallas as pl
from jax.experimental.pallas import tpu as pltpu

# ----------------------- configuration (small synthetic sizes) -----------------------
B = 2              # batch size
N_PTS = 64         # points per cloud
NUM_GROUP = 8      # G
GROUP_SIZE = 16    # M (KNN neighbourhood size)
ENCODER_DIM = 32   # pc_encoder_dim
TRANS_DIM = 32     # pc_feat_dim
EMBED_DIM = 48     # embed_dim (trans2embed exists in __init__ but is unused in forward)
MASK_RATIO = 0.5
NUM_HEADS = 4
DEPTH = 2
MLP_RATIO = 4
BN_EPS = 1e-5
LN_EPS = 1e-5

NUM_MASK = int(MASK_RATIO * NUM_GROUP)          # 4
T_REAL = NUM_GROUP - NUM_MASK + 1               # visible groups + cls token = 5
T_PAD = 8                                       # padded to one sublane
VMEM_LIMIT = 32 * 1024 * 1024


# ------------------------------- small shared helpers --------------------------------
def _gelu(x):
    # tanh-approx GELU (f32). TODO(synk): exact erf GELU for bit-closer parity.
    return 0.5 * x * (1.0 + jnp.tanh(0.7978845608028654 * (x + 0.044715 * x * x * x)))


def _layer_norm(x, g, b, eps=LN_EPS):
    mu = jnp.mean(x, axis=-1, keepdims=True)
    var = jnp.mean((x - mu) ** 2, axis=-1, keepdims=True)
    return (x - mu) * jax.lax.rsqrt(var + eps) * g + b


def _const_spec(shape):
    """Grid-invariant operand: full-array block, constant index map (any grid rank).
    Pallas skips the re-DMA when the block index does not change between steps."""
    nd = len(shape)
    return pl.BlockSpec(shape, lambda *_, _nd=nd: (0,) * _nd)


def _depth_spec(shape):
    """Per-transformer-block weight: leading depth axis selected by the single grid axis."""
    nd = len(shape)
    return pl.BlockSpec((1,) + tuple(shape[1:]),
                        lambda d, _nd=nd: (d,) + (0,) * (_nd - 1))


# =====================================================================================
# Parameter preprocessing — run ONCE outside the jitted forward.
#   * fold eval-mode BatchNorm into per-channel scale/shift (f32)
#   * split second_conv w3 into global/local halves (concat == split matmul)
#   * cast all matmul weights to bf16 (halves weight DMA, 1-pass MXU)
#   * stack transformer block weights over depth
#   * build the additive attention bias (pad keys / cross-batch keys -> -1e30)
# =====================================================================================
def prepare_params(params):
    bf = lambda w: w.astype(jnp.bfloat16)
    enc_p, e2t_p, pe_p = params["enc"], params["encoder2trans"], params["pos_embed"]

    s1 = enc_p["bn1_g"] * jax.lax.rsqrt(enc_p["bn1_v"] + BN_EPS)
    t1 = enc_p["bn1_b"] - enc_p["bn1_m"] * s1
    s3 = enc_p["bn3_g"] * jax.lax.rsqrt(enc_p["bn3_v"] + BN_EPS)
    t3 = enc_p["bn3_b"] - enc_p["bn3_m"] * s3
    w3a, w3b = enc_p["w3"][:256], enc_p["w3"][256:]

    enc_args = (bf(enc_p["w1"]), enc_p["b1"], s1, t1,
                bf(enc_p["w2"]), enc_p["b2"],
                bf(w3a), bf(w3b), enc_p["b3"], s3, t3,
                bf(enc_p["w4"]), enc_p["b4"],
                bf(e2t_p["w"]), e2t_p["b"],
                bf(pe_p["w1"]), pe_p["b1"], bf(pe_p["w2"]), pe_p["b2"])

    D = TRANS_DIM
    keys = ("ln1_g", "ln1_b", "wqkv", "bqkv", "wp", "bp",
            "ln2_g", "ln2_b", "wfc1", "bfc1", "wfc2", "bfc2")
    stacked = {k: [] for k in keys}
    for blk in params["blocks"]:
        stacked["ln1_g"].append(blk["ln1_g"].reshape(1, D))
        stacked["ln1_b"].append(blk["ln1_b"].reshape(1, D))
        stacked["wqkv"].append(bf(blk["w_qkv"]))            # (D, 3D) bf16
        stacked["bqkv"].append(blk["b_qkv"])                # (1, 3D) f32
        stacked["wp"].append(bf(blk["w_proj"]))             # (D, D)  bf16
        stacked["bp"].append(blk["b_proj"])                 # (1, D)  f32
        stacked["ln2_g"].append(blk["ln2_g"].reshape(1, D))
        stacked["ln2_b"].append(blk["ln2_b"].reshape(1, D))
        stacked["wfc1"].append(bf(blk["w_fc1"]))            # (D, 4D) bf16
        stacked["bfc1"].append(blk["b_fc1"])
        stacked["wfc2"].append(bf(blk["w_fc2"]))            # (4D, D) bf16
        stacked["bfc2"].append(blk["b_fc2"])
    stacked = {k: jnp.stack(v) for k, v in stacked.items()}

    # additive attention bias over the batch-collapsed padded token axis
    TT = B * T_PAD
    r = jnp.arange(TT)[:, None]
    c = jnp.arange(TT)[None, :]
    valid = ((r // T_PAD) == (c // T_PAD)) & ((c % T_PAD) < T_REAL)
    attn_bias = jnp.where(valid, 0.0, -1e30).astype(jnp.float32)

    return dict(enc=enc_args, vit=stacked, attn_bias=attn_bias,
                cls_token=params["cls_token"], cls_pos=params["cls_pos"],
                fcn_g=params["fc_norm_g"].reshape(1, D),
                fcn_b=params["fc_norm_b"].reshape(1, D))


# =====================================================================================
# Pallas kernel 1: fused per-batch "tokenizer"
#   PointNet Encoder (conv/BN/ReLU/max x2) over all G*M rows  ->  per-group features
#   + encoder2trans linear + pos_embed MLP, written as ONE slab [G, 2*TRANS] = tok|pos.
#   grid=(B,) "parallel" (2-way TC split on v7x; 128-row bf16 MXU matmuls per step).
# =====================================================================================
def encoder_tokens_pallas(features, center, enc_args):
    Bb, GM, Cin = features.shape
    G = center.shape[1]
    M = GM // G
    TD = TRANS_DIM

    def kernel(x_ref, c_ref,
               w1, b1, s1r, t1r, w2, b2, w3ar, w3br, b3, s3r, t3r, w4, b4,
               e2tw, e2tb, pw1, pb1, pw2, pb2,
               out_ref):
        x = x_ref[0]                                                     # (G*M, 6) f32
        # first_conv: Conv1d(6,128) -> BN -> ReLU -> Conv1d(128,256)
        h = jnp.dot(x.astype(jnp.bfloat16), w1[...],
                    preferred_element_type=jnp.float32) + b1[...]
        h = jnp.maximum(h * s1r[...] + t1r[...], 0.0)
        f = jnp.dot(h.astype(jnp.bfloat16), w2[...],
                    preferred_element_type=jnp.float32) + b2[...]        # (G*M, 256)
        C2 = f.shape[-1]
        # per-group max pool. NOTE: these (G*M,C) <-> (G,M,C) reshapes only split the
        # sublane axis on 8-aligned boundaries (M=16) with the lane dim untouched, so
        # they are tile-layout no-ops (no VMEM copy).
        fg = jnp.max(f.reshape(G, M, C2), axis=1)                        # (G, 256)
        # second_conv on concat([global, local]) == fg@w3a (broadcast over M) + f@w3b
        g1 = jnp.dot(fg.astype(jnp.bfloat16), w3ar[...],
                     preferred_element_type=jnp.float32)                 # (G, 512)
        fb = jnp.dot(f.astype(jnp.bfloat16), w3br[...],
                     preferred_element_type=jnp.float32)                 # (G*M, 512)
        C3 = g1.shape[-1]
        h2 = fb.reshape(G, M, C3) + g1[:, None, :] + b3[...]
        h2 = jnp.maximum(h2 * s3r[...] + t3r[...], 0.0)
        out = jnp.dot(h2.reshape(G * M, C3).astype(jnp.bfloat16), w4[...],
                      preferred_element_type=jnp.float32) + b4[...]      # (G*M, ENC)
        tok_g = jnp.max(out.reshape(G, M, -1), axis=1)                   # (G, ENC)
        # encoder2trans (per-token linear; visible-token gather happens later)
        tok = jnp.dot(tok_g.astype(jnp.bfloat16), e2tw[...],
                      preferred_element_type=jnp.float32) + e2tb[...]    # (G, TD)
        # pos_embed MLP on centers: Linear(3,128) -> GELU -> Linear(128, TD)
        c = c_ref[0]                                                     # (G, 3)
        p1 = _gelu(jnp.dot(c.astype(jnp.bfloat16), pw1[...],
                           preferred_element_type=jnp.float32) + pb1[...])
        pos = jnp.dot(p1.astype(jnp.bfloat16), pw2[...],
                      preferred_element_type=jnp.float32) + pb2[...]     # (G, TD)
        # single lane-denser output slab: [tok | pos]
        out_ref[0] = jnp.concatenate([tok, pos], axis=-1)                # (G, 2*TD)

    in_specs = ([pl.BlockSpec((1, GM, Cin), lambda b: (b, 0, 0)),
                 pl.BlockSpec((1, G, 3), lambda b: (b, 0, 0))]
                + [_const_spec(w.shape) for w in enc_args])
    out_spec = pl.BlockSpec((1, G, 2 * TD), lambda b: (b, 0, 0))

    return pl.pallas_call(
        kernel,
        out_shape=jax.ShapeDtypeStruct((Bb, G, 2 * TD), jnp.float32),
        grid=(Bb,),
        in_specs=in_specs,
        out_specs=out_spec,
        compiler_params=pltpu.CompilerParams(
            dimension_semantics=("parallel",),
            vmem_limit_bytes=VMEM_LIMIT),
    )(features, center, *enc_args)


# =====================================================================================
# Pallas kernel 2: fused ViT — ALL blocks in one kernel, batch collapsed into rows.
#   grid = (DEPTH,); the (B*T_PAD, D) activation lives in the output block (resident
#   VMEM accumulator across depth); per-block weights are indexed by depth and stream
#   exactly once each. fc_norm is applied on the last depth step.
# =====================================================================================
def vit_blocks_pallas(x_flat, attn_bias, stacked, fcn_g, fcn_b):
    BT, D = x_flat.shape
    depth = stacked["wqkv"].shape[0]
    H = NUM_HEADS
    Dh = D // H
    scale = Dh ** -0.5

    names = ("ln1_g", "ln1_b", "wqkv", "bqkv", "wp", "bp",
             "ln2_g", "ln2_b", "wfc1", "bfc1", "wfc2", "bfc2")
    weights = tuple(stacked[n] for n in names)

    def kernel(x_ref, bias_ref, ln1g, ln1b, wqkv, bqkv, wp, bp,
               ln2g, ln2b, wfc1, bfc1, wfc2, bfc2, fcng, fcnb, o_ref):
        d = pl.program_id(0)

        @pl.when(d == 0)
        def _():                                   # seed the resident accumulator
            o_ref[...] = x_ref[...]

        x0 = o_ref[...]                            # (B*T_PAD, D) f32, carried over depth
        h = _layer_norm(x0, ln1g[0], ln1b[0])
        # fused qkv projection: one (BT, D) @ (D, 3D) matmul
        qkv = jnp.dot(h.astype(jnp.bfloat16), wqkv[0],
                      preferred_element_type=jnp.float32) + bqkv[0]      # (BT, 3D)
        bias = bias_ref[...]                       # -1e30 on pad / cross-batch keys
        heads = []
        for hd in range(H):                        # static unroll over heads
            lo = hd * Dh
            qh = qkv[:, lo:lo + Dh].astype(jnp.bfloat16)
            kh = qkv[:, D + lo:D + lo + Dh].astype(jnp.bfloat16)
            vh = qkv[:, 2 * D + lo:2 * D + lo + Dh].astype(jnp.bfloat16)
            s = jax.lax.dot_general(qh, kh, (((1,), (1,)), ((), ())),
                                    preferred_element_type=jnp.float32) * scale + bias
            s = s - jnp.max(s, axis=-1, keepdims=True)
            e = jnp.exp(s)
            a = e * pl.reciprocal(jnp.sum(e, axis=-1, keepdims=True), approx=True)
            heads.append(jnp.dot(a.astype(jnp.bfloat16), vh,
                                 preferred_element_type=jnp.float32))    # (BT, Dh)
        attn = jnp.concatenate(heads, axis=-1)                           # (BT, D)
        # fused output projection: one (BT, D) @ (D, D) matmul
        x1 = x0 + jnp.dot(attn.astype(jnp.bfloat16), wp[0],
                          preferred_element_type=jnp.float32) + bp[0]
        h2 = _layer_norm(x1, ln2g[0], ln2b[0])
        h2 = _gelu(jnp.dot(h2.astype(jnp.bfloat16), wfc1[0],
                           preferred_element_type=jnp.float32) + bfc1[0])
        res = x1 + jnp.dot(h2.astype(jnp.bfloat16), wfc2[0],
                           preferred_element_type=jnp.float32) + bfc2[0]
        o_ref[...] = res

        @pl.when(d == pl.num_programs(0) - 1)
        def _():                                   # fused visual.fc_norm
            o_ref[...] = _layer_norm(res, fcng[...], fcnb[...])

    in_specs = ([pl.BlockSpec((BT, D), lambda d: (0, 0)),
                 pl.BlockSpec(attn_bias.shape, lambda d: (0, 0))]
                + [_depth_spec(w.shape) for w in weights]
                + [_const_spec(fcn_g.shape), _const_spec(fcn_b.shape)])
    out_spec = pl.BlockSpec((BT, D), lambda d: (0, 0))

    return pl.pallas_call(
        kernel,
        out_shape=jax.ShapeDtypeStruct((BT, D), jnp.float32),
        grid=(depth,),
        in_specs=in_specs,
        out_specs=out_spec,
        compiler_params=pltpu.CompilerParams(
            dimension_semantics=("arbitrary",),
            vmem_limit_bytes=VMEM_LIMIT),
    )(x_flat, attn_bias, *weights, fcn_g, fcn_b)


# =====================================================================================
# Glue: FPS, grouping (square_distance in plain JAX), masking
# =====================================================================================
def fps_jax(xyz, n_samples):
    """Furthest point sampling (starts from point 0). xyz: [B, N, 3] -> centers."""
    def single(pts):
        N = pts.shape[0]

        def body(i, carry):
            idxs, dists = carry
            last = pts[idxs[i - 1]]
            d = jnp.sum((pts - last) ** 2, axis=-1)
            dists = jnp.minimum(dists, d)
            idxs = idxs.at[i].set(jnp.argmax(dists).astype(jnp.int32))
            return idxs, dists

        idxs0 = jnp.zeros((n_samples,), jnp.int32)
        dists0 = jnp.full((N,), 1e10, jnp.float32)
        idxs, _ = jax.lax.fori_loop(1, n_samples, body, (idxs0, dists0))
        return idxs

    idx = jax.vmap(single)(xyz)
    return jax.vmap(lambda p, i: p[i])(xyz, idx)


def square_distance(src, dst):
    """src: [B,G,3], dst: [B,N,3] -> [B,G,N]. Plain JAX: XLA fuses with top_k/gathers."""
    prod = jnp.einsum("bgc,bnc->bgn", src, dst)
    return (-2.0 * prod
            + jnp.sum(src ** 2, axis=-1)[:, :, None]
            + jnp.sum(dst ** 2, axis=-1)[:, None, :])


def group_divider(xyz, color):
    center = fps_jax(xyz, NUM_GROUP)
    sqrdists = square_distance(center, xyz)                    # [B, G, N]
    _, idx = jax.lax.top_k(-sqrdists, GROUP_SIZE)              # KNN: smallest distances
    gather = jax.vmap(lambda pts, ind: pts[ind])               # [N,3],[G,M] -> [G,M,3]
    neighborhood = gather(xyz, idx) - center[:, :, None, :]
    neighborhood_color = gather(color, idx)
    features = jnp.concatenate([neighborhood, neighborhood_color], axis=-1)
    return neighborhood, center, features


def mask_center_rand(key, Bb, G):
    base = jnp.concatenate([jnp.zeros((G - NUM_MASK,), bool), jnp.ones((NUM_MASK,), bool)])
    keys = jax.random.split(key, Bb)
    mask = jax.vmap(lambda k: jax.random.permutation(k, base))(keys)
    return mask


# =====================================================================================
# Parameters (deterministic synthetic init; mirrors the module's __init__ shapes)
# =====================================================================================
def init_params(key):
    ks = iter(jax.random.split(key, 64))
    w = lambda shape, s=0.02: s * jax.random.normal(next(ks), shape, jnp.float32)

    params = {}
    params["enc"] = dict(
        w1=w((6, 128)), b1=w((1, 128)),
        bn1_g=1.0 + 0.1 * jax.random.normal(next(ks), (1, 128), jnp.float32),
        bn1_b=w((1, 128)), bn1_m=jnp.zeros((1, 128)), bn1_v=jnp.ones((1, 128)),
        w2=w((128, 256)), b2=w((1, 256)),
        w3=w((512, 512)), b3=w((1, 512)),
        bn3_g=1.0 + 0.1 * jax.random.normal(next(ks), (1, 512), jnp.float32),
        bn3_b=w((1, 512)), bn3_m=jnp.zeros((1, 512)), bn3_v=jnp.ones((1, 512)),
        w4=w((512, ENCODER_DIM)), b4=w((1, ENCODER_DIM)),
    )
    params["encoder2trans"] = dict(w=w((ENCODER_DIM, TRANS_DIM)), b=w((1, TRANS_DIM)))
    params["trans2embed"] = dict(w=w((TRANS_DIM, EMBED_DIM)), b=w((1, EMBED_DIM)))  # unused in fwd
    params["cls_token"] = jnp.zeros((1, 1, TRANS_DIM), jnp.float32)
    params["cls_pos"] = jax.random.normal(next(ks), (1, 1, TRANS_DIM), jnp.float32)
    params["pos_embed"] = dict(w1=w((3, 128)), b1=w((1, 128)),
                               w2=w((128, TRANS_DIM)), b2=w((1, TRANS_DIM)))
    blocks = []
    D = TRANS_DIM
    for _ in range(DEPTH):
        blocks.append(dict(
            ln1_g=jnp.ones((D,)), ln1_b=jnp.zeros((D,)),
            w_qkv=w((D, 3 * D)), b_qkv=w((1, 3 * D)),
            w_proj=w((D, D)), b_proj=w((1, D)),
            ln2_g=jnp.ones((D,)), ln2_b=jnp.zeros((D,)),
            w_fc1=w((D, MLP_RATIO * D)), b_fc1=w((1, MLP_RATIO * D)),
            w_fc2=w((MLP_RATIO * D, D)), b_fc2=w((1, D)),
        ))
    params["blocks"] = blocks
    params["fc_norm_g"] = jnp.ones((D,))
    params["fc_norm_b"] = jnp.zeros((D,))
    return params


# =====================================================================================
# Full PointcloudEncoder.forward
# =====================================================================================
def pointcloud_encoder_forward(pts, feats, prep, mask_key):
    colors = feats[:, :, 3:]                                           # [B, N, 3]
    neighborhood, center, features = group_divider(pts, colors)
    bool_masked_pos = mask_center_rand(mask_key, B, NUM_GROUP)

    # kernel 1: PointNet encoder + encoder2trans + pos_embed for all groups
    feats_flat = features.reshape(B, NUM_GROUP * GROUP_SIZE, 6)
    slab = encoder_tokens_pallas(feats_flat, center, prep["enc"])      # [B, G, 2*TD]
    tokens = slab[..., :TRANS_DIM]
    pos_all = slab[..., TRANS_DIM:]

    # gather visible groups (same order as boolean-mask selection in the original)
    V = NUM_GROUP - NUM_MASK
    order = jnp.argsort(bool_masked_pos.astype(jnp.int32), axis=1, stable=True)
    vis_idx = order[:, :V]                                             # [B, V]
    take = jax.vmap(lambda t, i: t[i])
    tok_vis = take(tokens, vis_idx)                                    # [B, V, TD]
    pos_vis = take(pos_all, vis_idx)                                   # [B, V, TD]

    cls_tokens = jnp.broadcast_to(prep["cls_token"], (B, 1, TRANS_DIM))
    cls_pos = jnp.broadcast_to(prep["cls_pos"], (B, 1, TRANS_DIM))
    x = (jnp.concatenate([cls_tokens, tok_vis], axis=1)
         + jnp.concatenate([cls_pos, pos_vis], axis=1))                # [B, T_REAL, TD]
    # visual.pos_drop: dropout -> identity at inference

    # pad token dim to a full sublane and collapse batch into rows for kernel 2
    x_pad = jnp.pad(x, ((0, 0), (0, T_PAD - T_REAL), (0, 0)))
    x_flat = x_pad.reshape(B * T_PAD, TRANS_DIM)

    # kernel 2: all transformer blocks + fc_norm
    y = vit_blocks_pallas(x_flat, prep["attn_bias"], prep["vit"],
                          prep["fcn_g"], prep["fcn_b"])
    y = y.reshape(B, T_PAD, TRANS_DIM)[:, :T_REAL]                     # trim pad rows
    return neighborhood, center, y, bool_masked_pos


if __name__ == "__main__":
    key = jax.random.PRNGKey(0)
    k_pts, k_feats, k_params, k_mask = jax.random.split(key, 4)
    pts = jax.random.normal(k_pts, (B, N_PTS, 3), jnp.float32)
    feats = jax.random.normal(k_feats, (B, N_PTS, 6), jnp.float32)     # last 3 cols = colors
    params = init_params(k_params)
    prep = prepare_params(params)                                      # one-off prep, outside jit

    forward = jax.jit(pointcloud_encoder_forward)
    neighborhood, center, x, mask = forward(pts, feats, prep, k_mask)
    jax.block_until_ready((neighborhood, center, x, mask))
    assert neighborhood.shape == (B, NUM_GROUP, GROUP_SIZE, 3)
    assert center.shape == (B, NUM_GROUP, 3)
    assert x.shape == (B, NUM_GROUP - NUM_MASK + 1, TRANS_DIM)
    assert mask.shape == (B, NUM_GROUP)
    assert bool(jnp.all(jnp.isfinite(x)))
    print("KERNEL_OK")
</pallas_src>

<mosaic_0001>
module attributes {stable_mosaic.version = 11 : i64} {
  func.func @kernel(%arg0: i32, %arg1: memref<1x128x6xf32, #tpu.memory_space<vmem>>, %arg2: memref<1x8x3xf32, #tpu.memory_space<vmem>>, %arg3: memref<6x128xbf16, #tpu.memory_space<vmem>>, %arg4: memref<1x128xf32, #tpu.memory_space<vmem>>, %arg5: memref<1x128xf32, #tpu.memory_space<vmem>>, %arg6: memref<1x128xf32, #tpu.memory_space<vmem>>, %arg7: memref<128x256xbf16, #tpu.memory_space<vmem>>, %arg8: memref<1x256xf32, #tpu.memory_space<vmem>>, %arg9: memref<256x512xbf16, #tpu.memory_space<vmem>>, %arg10: memref<256x512xbf16, #tpu.memory_space<vmem>>, %arg11: memref<1x512xf32, #tpu.memory_space<vmem>>, %arg12: memref<1x512xf32, #tpu.memory_space<vmem>>, %arg13: memref<1x512xf32, #tpu.memory_space<vmem>>, %arg14: memref<512x32xbf16, #tpu.memory_space<vmem>>, %arg15: memref<1x32xf32, #tpu.memory_space<vmem>>, %arg16: memref<32x32xbf16, #tpu.memory_space<vmem>>, %arg17: memref<1x32xf32, #tpu.memory_space<vmem>>, %arg18: memref<3x128xbf16, #tpu.memory_space<vmem>>, %arg19: memref<1x128xf32, #tpu.memory_space<vmem>>, %arg20: memref<128x32xbf16, #tpu.memory_space<vmem>>, %arg21: memref<1x32xf32, #tpu.memory_space<vmem>>, %arg22: memref<1x8x64xf32, #tpu.memory_space<vmem>>) attributes {dimension_semantics = [#tpu.dimension_semantics<parallel>], iteration_bounds = array<i64: 2>, scalar_prefetch = 0 : i64, scratch_operands = 0 : i64, tpu.core_type = #tpu.core_type<tc>, window_params = [{transform_indices = @transform_0, window_bounds = array<i64: 1, 128, 6>}, {transform_indices = @transform_1, window_bounds = array<i64: 1, 8, 3>}, {pipeline_mode = #tpu.pipeline_mode<synchronous>, transform_indices = @transform_2, window_bounds = array<i64: 6, 128>}, {pipeline_mode = #tpu.pipeline_mode<synchronous>, transform_indices = @transform_3, window_bounds = array<i64: 1, 128>}, {pipeline_mode = #tpu.pipeline_mode<synchronous>, transform_indices = @transform_4, window_bounds = array<i64: 1, 128>}, {pipeline_mode = #tpu.pipeline_mode<synchronous>, transform_indices = @transform_5, window_bounds = array<i64: 1, 128>}, {pipeline_mode = #tpu.pipeline_mode<synchronous>, transform_indices = @transform_6, window_bounds = array<i64: 128, 256>}, {pipeline_mode = #tpu.pipeline_mode<synchronous>, transform_indices = @transform_7, window_bounds = array<i64: 1, 256>}, {pipeline_mode = #tpu.pipeline_mode<synchronous>, transform_indices = @transform_8, window_bounds = array<i64: 256, 512>}, {pipeline_mode = #tpu.pipeline_mode<synchronous>, transform_indices = @transform_9, window_bounds = array<i64: 256, 512>}, {pipeline_mode = #tpu.pipeline_mode<synchronous>, transform_indices = @transform_10, window_bounds = array<i64: 1, 512>}, {pipeline_mode = #tpu.pipeline_mode<synchronous>, transform_indices = @transform_11, window_bounds = array<i64: 1, 512>}, {pipeline_mode = #tpu.pipeline_mode<synchronous>, transform_indices = @transform_12, window_bounds = array<i64: 1, 512>}, {pipeline_mode = #tpu.pipeline_mode<synchronous>, transform_indices = @transform_13, window_bounds = array<i64: 512, 32>}, {pipeline_mode = #tpu.pipeline_mode<synchronous>, transform_indices = @transform_14, window_bounds = array<i64: 1, 32>}, {pipeline_mode = #tpu.pipeline_mode<synchronous>, transform_indices = @transform_15, window_bounds = array<i64: 32, 32>}, {pipeline_mode = #tpu.pipeline_mode<synchronous>, transform_indices = @transform_16, window_bounds = array<i64: 1, 32>}, {pipeline_mode = #tpu.pipeline_mode<synchronous>, transform_indices = @transform_17, window_bounds = array<i64: 3, 128>}, {pipeline_mode = #tpu.pipeline_mode<synchronous>, transform_indices = @transform_18, window_bounds = array<i64: 1, 128>}, {pipeline_mode = #tpu.pipeline_mode<synchronous>, transform_indices = @transform_19, window_bounds = array<i64: 128, 32>}, {pipeline_mode = #tpu.pipeline_mode<synchronous>, transform_indices = @transform_20, window_bounds = array<i64: 1, 32>}, {transform_indices = @transform_21, window_bounds = array<i64: 1, 8, 64>}]} {
    %c0 = arith.constant 0 : index
    %c0_0 = arith.constant 0 : index
    %c0_1 = arith.constant 0 : index
    %0 = vector.load %arg1[%c0, %c0_0, %c0_1] : memref<1x128x6xf32, #tpu.memory_space<vmem>>, vector<1x128x6xf32>
    %1 = vector.shape_cast %0 : vector<1x128x6xf32> to vector<128x6xf32>
    %2 = arith.truncf %1 : vector<128x6xf32> to vector<128x6xbf16>
    %c0_2 = arith.constant 0 : index
    %c0_3 = arith.constant 0 : index
    %3 = vector.load %arg3[%c0_2, %c0_3] : memref<6x128xbf16, #tpu.memory_space<vmem>>, vector<6x128xbf16>
    %cst = arith.constant dense<0.000000e+00> : vector<128x128xf32>
    %4 = tpu.matmul %2, %3, %cst {dimension_numbers = #tpu.dot_dimension_numbers<[1], [0], [0], [1], [0, 0, 1, 1], [], []>} : vector<128x6xbf16>, vector<6x128xbf16>, vector<128x128xf32> -> vector<128x128xf32>
    %c0_4 = arith.constant 0 : index
    %c0_5 = arith.constant 0 : index
    %5 = vector.load %arg4[%c0_4, %c0_5] : memref<1x128xf32, #tpu.memory_space<vmem>>, vector<1x128xf32>
    %6 = vector.broadcast %5 : vector<1x128xf32> to vector<128x128xf32>
    %7 = arith.addf %4, %6 : vector<128x128xf32>
    %c0_6 = arith.constant 0 : index
    %c0_7 = arith.constant 0 : index
    %8 = vector.load %arg5[%c0_6, %c0_7] : memref<1x128xf32, #tpu.memory_space<vmem>>, vector<1x128xf32>
    %9 = vector.broadcast %8 : vector<1x128xf32> to vector<128x128xf32>
    %10 = arith.mulf %7, %9 : vector<128x128xf32>
    %c0_8 = arith.constant 0 : index
    %c0_9 = arith.constant 0 : index
    %11 = vector.load %arg6[%c0_8, %c0_9] : memref<1x128xf32, #tpu.memory_space<vmem>>, vector<1x128xf32>
    %12 = vector.broadcast %11 : vector<1x128xf32> to vector<128x128xf32>
    %13 = arith.addf %10, %12 : vector<128x128xf32>
    %cst_10 = arith.constant 0.000000e+00 : f32
    %14 = vector.broadcast %cst_10 : f32 to vector<128x128xf32>
    %15 = arith.maximumf %13, %14 : vector<128x128xf32>
    %16 = arith.truncf %15 : vector<128x128xf32> to vector<128x128xbf16>
    %c0_11 = arith.constant 0 : index
    %c0_12 = arith.constant 0 : index
    %17 = vector.load %arg7[%c0_11, %c0_12] : memref<128x256xbf16, #tpu.memory_space<vmem>>, vector<128x256xbf16>
    %cst_13 = arith.constant dense<0.000000e+00> : vector<128x256xf32>
    %18 = tpu.matmul %16, %17, %cst_13 {dimension_numbers = #tpu.dot_dimension_numbers<[1], [0], [0], [1], [0, 0, 1, 1], [], []>} : vector<128x128xbf16>, vector<128x256xbf16>, vector<128x256xf32> -> vector<128x256xf32>
    %c0_14 = arith.constant 0 : index
    %c0_15 = arith.constant 0 : index
    %19 = vector.load %arg8[%c0_14, %c0_15] : memref<1x256xf32, #tpu.memory_space<vmem>>, vector<1x256xf32>
    %20 = vector.broadcast %19 : vector<1x256xf32> to vector<128x256xf32>
    %21 = arith.addf %18, %20 : vector<128x256xf32>
    %22 = vector.shape_cast %21 : vector<128x256xf32> to vector<8x16x256xf32>
    %cst_16 = arith.constant dense<0xFF800000> : vector<8x256xf32>
    %23 = vector.multi_reduction <maximumf>, %22, %cst_16 [1] : vector<8x16x256xf32> to vector<8x256xf32>
    %24 = arith.truncf %23 : vector<8x256xf32> to vector<8x256xbf16>
    %c0_17 = arith.constant 0 : index
    %c0_18 = arith.constant 0 : index
    %25 = vector.load %arg9[%c0_17, %c0_18] : memref<256x512xbf16, #tpu.memory_space<vmem>>, vector<256x512xbf16>
    %cst_19 = arith.constant dense<0.000000e+00> : vector<8x512xf32>
    %26 = tpu.matmul %24, %25, %cst_19 {dimension_numbers = #tpu.dot_dimension_numbers<[1], [0], [0], [1], [0, 0, 1, 1], [], []>} : vector<8x256xbf16>, vector<256x512xbf16>, vector<8x512xf32> -> vector<8x512xf32>
    %27 = arith.truncf %21 : vector<128x256xf32> to vector<128x256xbf16>
    %c0_20 = arith.constant 0 : index
    %c0_21 = arith.constant 0 : index
    %28 = vector.load %arg10[%c0_20, %c0_21] : memref<256x512xbf16, #tpu.memory_space<vmem>>, vector<256x512xbf16>
    %cst_22 = arith.constant dense<0.000000e+00> : vector<128x512xf32>
    %29 = tpu.matmul %27, %28, %cst_22 {dimension_numbers = #tpu.dot_dimension_numbers<[1], [0], [0], [1], [0, 0, 1, 1], [], []>} : vector<128x256xbf16>, vector<256x512xbf16>, vector<128x512xf32> -> vector<128x512xf32>
    %30 = vector.shape_cast %29 : vector<128x512xf32> to vector<8x16x512xf32>
    %31 = vector.shape_cast %26 : vector<8x512xf32> to vector<8x1x512xf32>
    %32 = vector.broadcast %31 : vector<8x1x512xf32> to vector<8x16x512xf32>
    %33 = arith.addf %30, %32 : vector<8x16x512xf32>
    %c0_23 = arith.constant 0 : index
    %c0_24 = arith.constant 0 : index
    %34 = vector.load %arg11[%c0_23, %c0_24] : memref<1x512xf32, #tpu.memory_space<vmem>>, vector<1x512xf32>
    %35 = vector.shape_cast %34 : vector<1x512xf32> to vector<1x1x512xf32>
    %36 = vector.broadcast %35 : vector<1x1x512xf32> to vector<8x16x512xf32>
    %37 = arith.addf %33, %36 : vector<8x16x512xf32>
    %c0_25 = arith.constant 0 : index
    %c0_26 = arith.constant 0 : index
    %38 = vector.load %arg12[%c0_25, %c0_26] : memref<1x512xf32, #tpu.memory_space<vmem>>, vector<1x512xf32>
    %39 = vector.shape_cast %38 : vector<1x512xf32> to vector<1x1x512xf32>
    %40 = vector.broadcast %39 : vector<1x1x512xf32> to vector<8x16x512xf32>
    %41 = arith.mulf %37, %40 : vector<8x16x512xf32>
    %c0_27 = arith.constant 0 : index
    %c0_28 = arith.constant 0 : index
    %42 = vector.load %arg13[%c0_27, %c0_28] : memref<1x512xf32, #tpu.memory_space<vmem>>, vector<1x512xf32>
    %43 = vector.shape_cast %42 : vector<1x512xf32> to vector<1x1x512xf32>
    %44 = vector.broadcast %43 : vector<1x1x512xf32> to vector<8x16x512xf32>
    %45 = arith.addf %41, %44 : vector<8x16x512xf32>
    %cst_29 = arith.constant 0.000000e+00 : f32
    %46 = vector.broadcast %cst_29 : f32 to vector<8x16x512xf32>
    %47 = arith.maximumf %45, %46 : vector<8x16x512xf32>
    %48 = vector.shape_cast %47 : vector<8x16x512xf32> to vector<128x512xf32>
    %49 = arith.truncf %48 : vector<128x512xf32> to vector<128x512xbf16>
    %c0_30 = arith.constant 0 : index
    %c0_31 = arith.constant 0 : index
    %50 = vector.load %arg14[%c0_30, %c0_31] : memref<512x32xbf16, #tpu.memory_space<vmem>>, vector<512x32xbf16>
    %cst_32 = arith.constant dense<0.000000e+00> : vector<128x32xf32>
    %51 = tpu.matmul %49, %50, %cst_32 {dimension_numbers = #tpu.dot_dimension_numbers<[1], [0], [0], [1], [0, 0, 1, 1], [], []>} : vector<128x512xbf16>, vector<512x32xbf16>, vector<128x32xf32> -> vector<128x32xf32>
    %c0_33 = arith.constant 0 : index
    %c0_34 = arith.constant 0 : index
    %52 = vector.load %arg15[%c0_33, %c0_34] : memref<1x32xf32, #tpu.memory_space<vmem>>, vector<1x32xf32>
    %53 = vector.broadcast %52 : vector<1x32xf32> to vector<128x32xf32>
    %54 = arith.addf %51, %53 : vector<128x32xf32>
    %55 = vector.shape_cast %54 : vector<128x32xf32> to vector<8x16x32xf32>
    %cst_35 = arith.constant dense<0xFF800000> : vector<8x32xf32>
    %56 = vector.multi_reduction <maximumf>, %55, %cst_35 [1] : vector<8x16x32xf32> to vector<8x32xf32>
    %57 = arith.truncf %56 : vector<8x32xf32> to vector<8x32xbf16>
    %c0_36 = arith.constant 0 : index
    %c0_37 = arith.constant 0 : index
    %58 = vector.load %arg16[%c0_36, %c0_37] : memref<32x32xbf16, #tpu.memory_space<vmem>>, vector<32x32xbf16>
    %cst_38 = arith.constant dense<0.000000e+00> : vector<8x32xf32>
    %59 = tpu.matmul %57, %58, %cst_38 {dimension_numbers = #tpu.dot_dimension_numbers<[1], [0], [0], [1], [0, 0, 1, 1], [], []>} : vector<8x32xbf16>, vector<32x32xbf16>, vector<8x32xf32> -> vector<8x32xf32>
    %c0_39 = arith.constant 0 : index
    %c0_40 = arith.constant 0 : index
    %60 = vector.load %arg17[%c0_39, %c0_40] : memref<1x32xf32, #tpu.memory_space<vmem>>, vector<1x32xf32>
    %61 = vector.broadcast %60 : vector<1x32xf32> to vector<8x32xf32>
    %62 = arith.addf %59, %61 : vector<8x32xf32>
    %c0_41 = arith.constant 0 : index
    %c0_42 = arith.constant 0 : index
    %c0_43 = arith.constant 0 : index
    %63 = vector.load %arg2[%c0_41, %c0_42, %c0_43] : memref<1x8x3xf32, #tpu.memory_space<vmem>>, vector<1x8x3xf32>
    %64 = vector.shape_cast %63 : vector<1x8x3xf32> to vector<8x3xf32>
    %65 = arith.truncf %64 : vector<8x3xf32> to vector<8x3xbf16>
    %c0_44 = arith.constant 0 : index
    %c0_45 = arith.constant 0 : index
    %66 = vector.load %arg18[%c0_44, %c0_45] : memref<3x128xbf16, #tpu.memory_space<vmem>>, vector<3x128xbf16>
    %cst_46 = arith.constant dense<0.000000e+00> : vector<8x128xf32>
    %67 = tpu.matmul %65, %66, %cst_46 {dimension_numbers = #tpu.dot_dimension_numbers<[1], [0], [0], [1], [0, 0, 1, 1], [], []>} : vector<8x3xbf16>, vector<3x128xbf16>, vector<8x128xf32> -> vector<8x128xf32>
    %c0_47 = arith.constant 0 : index
    %c0_48 = arith.constant 0 : index
    %68 = vector.load %arg19[%c0_47, %c0_48] : memref<1x128xf32, #tpu.memory_space<vmem>>, vector<1x128xf32>
    %69 = vector.broadcast %68 : vector<1x128xf32> to vector<8x128xf32>
    %70 = arith.addf %67, %69 : vector<8x128xf32>
    %cst_49 = arith.constant 5.000000e-01 : f32
    %71 = vector.broadcast %cst_49 : f32 to vector<8x128xf32>
    %72 = arith.mulf %71, %70 : vector<8x128xf32>
    %cst_50 = arith.constant 4.471500e-02 : f32
    %73 = vector.broadcast %cst_50 : f32 to vector<8x128xf32>
    %74 = arith.mulf %73, %70 : vector<8x128xf32>
    %75 = arith.mulf %74, %70 : vector<8x128xf32>
    %76 = arith.mulf %75, %70 : vector<8x128xf32>
    %77 = arith.addf %70, %76 : vector<8x128xf32>
    %cst_51 = arith.constant 0.797884583 : f32
    %78 = vector.broadcast %cst_51 : f32 to vector<8x128xf32>
    %79 = arith.mulf %78, %77 : vector<8x128xf32>
    %80 = math.tanh %79 : vector<8x128xf32>
    %cst_52 = arith.constant 1.000000e+00 : f32
    %81 = vector.broadcast %cst_52 : f32 to vector<8x128xf32>
    %82 = arith.addf %81, %80 : vector<8x128xf32>
    %83 = arith.mulf %72, %82 : vector<8x128xf32>
    %84 = arith.truncf %83 : vector<8x128xf32> to vector<8x128xbf16>
    %c0_53 = arith.constant 0 : index
    %c0_54 = arith.constant 0 : index
    %85 = vector.load %arg20[%c0_53, %c0_54] : memref<128x32xbf16, #tpu.memory_space<vmem>>, vector<128x32xbf16>
    %cst_55 = arith.constant dense<0.000000e+00> : vector<8x32xf32>
    %86 = tpu.matmul %84, %85, %cst_55 {dimension_numbers = #tpu.dot_dimension_numbers<[1], [0], [0], [1], [0, 0, 1, 1], [], []>} : vector<8x128xbf16>, vector<128x32xbf16>, vector<8x32xf32> -> vector<8x32xf32>
    %c0_56 = arith.constant 0 : index
    %c0_57 = arith.constant 0 : index
    %87 = vector.load %arg21[%c0_56, %c0_57] : memref<1x32xf32, #tpu.memory_space<vmem>>, vector<1x32xf32>
    %88 = vector.broadcast %87 : vector<1x32xf32> to vector<8x32xf32>
    %89 = arith.addf %86, %88 : vector<8x32xf32>
    %90 = tpu.concatenate %62, %89 in 1 : vector<8x32xf32>, vector<8x32xf32> -> vector<8x64xf32>
    %c0_58 = arith.constant 0 : index
    %c0_59 = arith.constant 0 : index
    %c0_60 = arith.constant 0 : index
    %91 = vector.load %arg22[%c0_58, %c0_59, %c0_60] : memref<1x8x64xf32, #tpu.memory_space<vmem>>, vector<1x8x64xf32>
    %92 = vector.shape_cast %91 : vector<1x8x64xf32> to vector<8x64xf32>
    %93 = vector.shape_cast %90 : vector<8x64xf32> to vector<1x8x64xf32>
    tpu.vector_store %arg22[%c0_58, %c0_59, %c0_60], %93 {strides = array<i32>} : memref<1x8x64xf32, #tpu.memory_space<vmem>>, vector<1x8x64xf32>,
    return
  }
  func.func @transform_0(%arg0: i32) -> (i32, i32, i32) {
    %c0_i32 = arith.constant 0 : i32
    %c0_i32_0 = arith.constant 0 : i32
    %c0_i32_1 = arith.constant 0 : i32
    return %arg0, %c0_i32, %c0_i32_0 : i32, i32, i32
  }
  func.func @transform_1(%arg0: i32) -> (i32, i32, i32) {
    %c0_i32 = arith.constant 0 : i32
    %c0_i32_0 = arith.constant 0 : i32
    %c0_i32_1 = arith.constant 0 : i32
    return %arg0, %c0_i32, %c0_i32_0 : i32, i32, i32
  }
  func.func @transform_2(%arg0: i32) -> (i32, i32) {
    %c0_i32 = arith.constant 0 : i32
    %c0_i32_0 = arith.constant 0 : i32
    %c0_i32_1 = arith.constant 0 : i32
    return %c0_i32, %c0_i32_0 : i32, i32
  }
  func.func @transform_3(%arg0: i32) -> (i32, i32) {
    %c0_i32 = arith.constant 0 : i32
    %c0_i32_0 = arith.constant 0 : i32
    %c0_i32_1 = arith.constant 0 : i32
    return %c0_i32, %c0_i32_0 : i32, i32
  }
  func.func @transform_4(%arg0: i32) -> (i32, i32) {
    %c0_i32 = arith.constant 0 : i32
    %c0_i32_0 = arith.constant 0 : i32
    %c0_i32_1 = arith.constant 0 : i32
    return %c0_i32, %c0_i32_0 : i32, i32
  }
  func.func @transform_5(%arg0: i32) -> (i32, i32) {
    %c0_i32 = arith.constant 0 : i32
    %c0_i32_0 = arith.constant 0 : i32
    %c0_i32_1 = arith.constant 0 : i32
    return %c0_i32, %c0_i32_0 : i32, i32
  }
  func.func @transform_6(%arg0: i32) -> (i32, i32) {
    %c0_i32 = arith.constant 0 : i32
    %c0_i32_0 = arith.constant 0 : i32
    %c0_i32_1 = arith.constant 0 : i32
    return %c0_i32, %c0_i32_0 : i32, i32
  }
  func.func @transform_7(%arg0: i32) -> (i32, i32) {
    %c0_i32 = arith.constant 0 : i32
    %c0_i32_0 = arith.constant 0 : i32
    %c0_i32_1 = arith.constant 0 : i32
    return %c0_i32, %c0_i32_0 : i32, i32
  }
  func.func @transform_8(%arg0: i32) -> (i32, i32) {
    %c0_i32 = arith.constant 0 : i32
    %c0_i32_0 = arith.constant 0 : i32
    %c0_i32_1 = arith.constant 0 : i32
    return %c0_i32, %c0_i32_0 : i32, i32
  }
  func.func @transform_9(%arg0: i32) -> (i32, i32) {
    %c0_i32 = arith.constant 0 : i32
    %c0_i32_0 = arith.constant 0 : i32
    %c0_i32_1 = arith.constant 0 : i32
    return %c0_i32, %c0_i32_0 : i32, i32
  }
  func.func @transform_10(%arg0: i32) -> (i32, i32) {
    %c0_i32 = arith.constant 0 : i32
    %c0_i32_0 = arith.constant 0 : i32
    %c0_i32_1 = arith.constant 0 : i32
    return %c0_i32, %c0_i32_0 : i32, i32
  }
  func.func @transform_11(%arg0: i32) -> (i32, i32) {
    %c0_i32 = arith.constant 0 : i32
    %c0_i32_0 = arith.constant 0 : i32
    %c0_i32_1 = arith.constant 0 : i32
    return %c0_i32, %c0_i32_0 : i32, i32
  }
  func.func @transform_12(%arg0: i32) -> (i32, i32) {
    %c0_i32 = arith.constant 0 : i32
    %c0_i32_0 = arith.constant 0 : i32
    %c0_i32_1 = arith.constant 0 : i32
    return %c0_i32, %c0_i32_0 : i32, i32
  }
  func.func @transform_13(%arg0: i32) -> (i32, i32) {
    %c0_i32 = arith.constant 0 : i32
    %c0_i32_0 = arith.constant 0 : i32
    %c0_i32_1 = arith.constant 0 : i32
    return %c0_i32, %c0_i32_0 : i32, i32
  }
  func.func @transform_14(%arg0: i32) -> (i32, i32) {
    %c0_i32 = arith.constant 0 : i32
    %c0_i32_0 = arith.constant 0 : i32
    %c0_i32_1 = arith.constant 0 : i32
    return %c0_i32, %c0_i32_0 : i32, i32
  }
  func.func @transform_15(%arg0: i32) -> (i32, i32) {
    %c0_i32 = arith.constant 0 : i32
    %c0_i32_0 = arith.constant 0 : i32
    %c0_i32_1 = arith.constant 0 : i32
    return %c0_i32, %c0_i32_0 : i32, i32
  }
  func.func @transform_16(%arg0: i32) -> (i32, i32) {
    %c0_i32 = arith.constant 0 : i32
    %c0_i32_0 = arith.constant 0 : i32
    %c0_i32_1 = arith.constant 0 : i32
    return %c0_i32, %c0_i32_0 : i32, i32
  }
  func.func @transform_17(%arg0: i32) -> (i32, i32) {
    %c0_i32 = arith.constant 0 : i32
    %c0_i32_0 = arith.constant 0 : i32
    %c0_i32_1 = arith.constant 0 : i32
    return %c0_i32, %c0_i32_0 : i32, i32
  }
  func.func @transform_18(%arg0: i32) -> (i32, i32) {
    %c0_i32 = arith.constant 0 : i32
    %c0_i32_0 = arith.constant 0 : i32
    %c0_i32_1 = arith.constant 0 : i32
    return %c0_i32, %c0_i32_0 : i32, i32
  }
  func.func @transform_19(%arg0: i32) -> (i32, i32) {
    %c0_i32 = arith.constant 0 : i32
    %c0_i32_0 = arith.constant 0 : i32
    %c0_i32_1 = arith.constant 0 : i32
    return %c0_i32, %c0_i32_0 : i32, i32
  }
  func.func @transform_20(%arg0: i32) -> (i32, i32) {
    %c0_i32 = arith.constant 0 : i32
    %c0_i32_0 = arith.constant 0 : i32
    %c0_i32_1 = arith.constant 0 : i32
    return %c0_i32, %c0_i32_0 : i32, i32
  }
  func.func @transform_21(%arg0: i32) -> (i32, i32, i32) {
    %c0_i32 = arith.constant 0 : i32
    %c0_i32_0 = arith.constant 0 : i32
    %c0_i32_1 = arith.constant 0 : i32
    return %arg0, %c0_i32, %c0_i32_0 : i32, i32, i32
  }
}

module attributes {stable_mosaic.version = 11 : i64} {
  func.func @kernel(%arg0: i32, %arg1: memref<16x32xf32, #tpu.memory_space<vmem>>, %arg2: memref<16x16xf32, #tpu.memory_space<vmem>>, %arg3: memref<1x1x32xf32, #tpu.memory_space<vmem>>, %arg4: memref<1x1x32xf32, #tpu.memory_space<vmem>>, %arg5: memref<1x32x96xbf16, #tpu.memory_space<vmem>>, %arg6: memref<1x1x96xf32, #tpu.memory_space<vmem>>, %arg7: memref<1x32x32xbf16, #tpu.memory_space<vmem>>, %arg8: memref<1x1x32xf32, #tpu.memory_space<vmem>>, %arg9: memref<1x1x32xf32, #tpu.memory_space<vmem>>, %arg10: memref<1x1x32xf32, #tpu.memory_space<vmem>>, %arg11: memref<1x32x128xbf16, #tpu.memory_space<vmem>>, %arg12: memref<1x1x128xf32, #tpu.memory_space<vmem>>, %arg13: memref<1x128x32xbf16, #tpu.memory_space<vmem>>, %arg14: memref<1x1x32xf32, #tpu.memory_space<vmem>>, %arg15: memref<1x32xf32, #tpu.memory_space<vmem>>, %arg16: memref<1x32xf32, #tpu.memory_space<vmem>>, %arg17: memref<16x32xf32, #tpu.memory_space<vmem>>) attributes {dimension_semantics = [#tpu.dimension_semantics<arbitrary>], iteration_bounds = array<i64: 2>, scalar_prefetch = 0 : i64, scratch_operands = 0 : i64, tpu.core_type = #tpu.core_type<tc>, window_params = [{pipeline_mode = #tpu.pipeline_mode<synchronous>, transform_indices = @transform_0, window_bounds = array<i64: 16, 32>}, {pipeline_mode = #tpu.pipeline_mode<synchronous>, transform_indices = @transform_1, window_bounds = array<i64: 16, 16>}, {transform_indices = @transform_2, window_bounds = array<i64: 1, 1, 32>}, {transform_indices = @transform_3, window_bounds = array<i64: 1, 1, 32>}, {transform_indices = @transform_4, window_bounds = array<i64: 1, 32, 96>}, {transform_indices = @transform_5, window_bounds = array<i64: 1, 1, 96>}, {transform_indices = @transform_6, window_bounds = array<i64: 1, 32, 32>}, {transform_indices = @transform_7, window_bounds = array<i64: 1, 1, 32>}, {transform_indices = @transform_8, window_bounds = array<i64: 1, 1, 32>}, {transform_indices = @transform_9, window_bounds = array<i64: 1, 1, 32>}, {transform_indices = @transform_10, window_bounds = array<i64: 1, 32, 128>}, {transform_indices = @transform_11, window_bounds = array<i64: 1, 1, 128>}, {transform_indices = @transform_12, window_bounds = array<i64: 1, 128, 32>}, {transform_indices = @transform_13, window_bounds = array<i64: 1, 1, 32>}, {pipeline_mode = #tpu.pipeline_mode<synchronous>, transform_indices = @transform_14, window_bounds = array<i64: 1, 32>}, {pipeline_mode = #tpu.pipeline_mode<synchronous>, transform_indices = @transform_15, window_bounds = array<i64: 1, 32>}, {pipeline_mode = #tpu.pipeline_mode<synchronous>, transform_indices = @transform_16, window_bounds = array<i64: 16, 32>}]} {
    %c0_i32 = arith.constant 0 : i32
    %0 = arith.cmpi eq, %arg0, %c0_i32 : i32
    %1 = arith.extui %0 : i1 to i32
    %c0_i32_0 = arith.constant 0 : i32
    %2 = arith.cmpi ne, %1, %c0_i32_0 : i32
    scf.if %2 {
      %c0_80 = arith.constant 0 : index
      %c0_81 = arith.constant 0 : index
      %197 = vector.load %arg1[%c0_80, %c0_81] : memref<16x32xf32, #tpu.memory_space<vmem>>, vector<16x32xf32>
      %c0_82 = arith.constant 0 : index
      %c0_83 = arith.constant 0 : index
      %198 = vector.load %arg17[%c0_82, %c0_83] : memref<16x32xf32, #tpu.memory_space<vmem>>, vector<16x32xf32>
      tpu.vector_store %arg17[%c0_82, %c0_83], %197 {strides = array<i32>} : memref<16x32xf32, #tpu.memory_space<vmem>>, vector<16x32xf32>,
    } else {
    }
    %c0 = arith.constant 0 : index
    %c0_1 = arith.constant 0 : index
    %3 = vector.load %arg17[%c0, %c0_1] : memref<16x32xf32, #tpu.memory_space<vmem>>, vector<16x32xf32>
    %c0_2 = arith.constant 0 : index
    %c0_3 = arith.constant 0 : index
    %c0_4 = arith.constant 0 : index
    %4 = vector.load %arg3[%c0_2, %c0_3, %c0_4] : memref<1x1x32xf32, #tpu.memory_space<vmem>>, vector<1x1x32xf32>
    %5 = vector.shape_cast %4 : vector<1x1x32xf32> to vector<1x32xf32>
    %c0_5 = arith.constant 0 : index
    %c0_6 = arith.constant 0 : index
    %c0_7 = arith.constant 0 : index
    %6 = vector.load %arg4[%c0_5, %c0_6, %c0_7] : memref<1x1x32xf32, #tpu.memory_space<vmem>>, vector<1x1x32xf32>
    %7 = vector.shape_cast %6 : vector<1x1x32xf32> to vector<1x32xf32>
    %cst = arith.constant dense<0.000000e+00> : vector<16xf32>
    %8 = vector.multi_reduction <add>, %3, %cst [1] : vector<16x32xf32> to vector<16xf32>
    %9 = vector.shape_cast %8 : vector<16xf32> to vector<16x1xf32>
    %cst_8 = arith.constant 3.200000e+01 : f32
    %10 = vector.broadcast %cst_8 : f32 to vector<16x1xf32>
    %11 = arith.divf %9, %10 : vector<16x1xf32>
    %12 = vector.broadcast %11 : vector<16x1xf32> to vector<16x32xf32>
    %13 = arith.subf %3, %12 : vector<16x32xf32>
    %14 = arith.mulf %13, %13 : vector<16x32xf32>
    %cst_9 = arith.constant dense<0.000000e+00> : vector<16xf32>
    %15 = vector.multi_reduction <add>, %14, %cst_9 [1] : vector<16x32xf32> to vector<16xf32>
    %16 = vector.shape_cast %15 : vector<16xf32> to vector<16x1xf32>
    %cst_10 = arith.constant 3.200000e+01 : f32
    %17 = vector.broadcast %cst_10 : f32 to vector<16x1xf32>
    %18 = arith.divf %16, %17 : vector<16x1xf32>
    %19 = vector.broadcast %11 : vector<16x1xf32> to vector<16x32xf32>
    %20 = arith.subf %3, %19 : vector<16x32xf32>
    %cst_11 = arith.constant 9.99999974E-6 : f32
    %21 = vector.broadcast %cst_11 : f32 to vector<16x1xf32>
    %22 = arith.addf %18, %21 : vector<16x1xf32>
    %23 = math.rsqrt %22 : vector<16x1xf32>
    %24 = vector.broadcast %23 : vector<16x1xf32> to vector<16x32xf32>
    %25 = arith.mulf %20, %24 : vector<16x32xf32>
    %26 = vector.broadcast %5 : vector<1x32xf32> to vector<16x32xf32>
    %27 = arith.mulf %25, %26 : vector<16x32xf32>
    %28 = vector.broadcast %7 : vector<1x32xf32> to vector<16x32xf32>
    %29 = arith.addf %27, %28 : vector<16x32xf32>
    %30 = arith.truncf %29 : vector<16x32xf32> to vector<16x32xbf16>
    %c0_12 = arith.constant 0 : index
    %c0_13 = arith.constant 0 : index
    %c0_14 = arith.constant 0 : index
    %31 = vector.load %arg5[%c0_12, %c0_13, %c0_14] : memref<1x32x96xbf16, #tpu.memory_space<vmem>>, vector<1x32x96xbf16>
    %32 = vector.shape_cast %31 : vector<1x32x96xbf16> to vector<32x96xbf16>
    %cst_15 = arith.constant dense<0.000000e+00> : vector<16x96xf32>
    %33 = tpu.matmul %30, %32, %cst_15 {dimension_numbers = #tpu.dot_dimension_numbers<[1], [0], [0], [1], [0, 0, 1, 1], [], []>} : vector<16x32xbf16>, vector<32x96xbf16>, vector<16x96xf32> -> vector<16x96xf32>
    %c0_16 = arith.constant 0 : index
    %c0_17 = arith.constant 0 : index
    %c0_18 = arith.constant 0 : index
    %34 = vector.load %arg6[%c0_16, %c0_17, %c0_18] : memref<1x1x96xf32, #tpu.memory_space<vmem>>, vector<1x1x96xf32>
    %35 = vector.shape_cast %34 : vector<1x1x96xf32> to vector<1x96xf32>
    %36 = vector.broadcast %35 : vector<1x96xf32> to vector<16x96xf32>
    %37 = arith.addf %33, %36 : vector<16x96xf32>
    %c0_19 = arith.constant 0 : index
    %c0_20 = arith.constant 0 : index
    %38 = vector.load %arg2[%c0_19, %c0_20] : memref<16x16xf32, #tpu.memory_space<vmem>>, vector<16x16xf32>
    %39 = vector.extract_strided_slice %37 {offsets = [0, 0], sizes = [16, 8], strides = [1, 1]} : vector<16x96xf32> to vector<16x8xf32>
    %40 = arith.truncf %39 : vector<16x8xf32> to vector<16x8xbf16>
    %41 = vector.extract_strided_slice %37 {offsets = [0, 32], sizes = [16, 8], strides = [1, 1]} : vector<16x96xf32> to vector<16x8xf32>
    %42 = arith.truncf %41 : vector<16x8xf32> to vector<16x8xbf16>
    %43 = vector.extract_strided_slice %37 {offsets = [0, 64], sizes = [16, 8], strides = [1, 1]} : vector<16x96xf32> to vector<16x8xf32>
    %44 = arith.truncf %43 : vector<16x8xf32> to vector<16x8xbf16>
    %cst_21 = arith.constant dense<0.000000e+00> : vector<16x16xf32>
    %45 = tpu.matmul %40, %42, %cst_21 {dimension_numbers = #tpu.dot_dimension_numbers<[1], [1], [0], [0], [0, 0, 1, 0], [], []>} : vector<16x8xbf16>, vector<16x8xbf16>, vector<16x16xf32> -> vector<16x16xf32>
    %cst_22 = arith.constant 0.353553385 : f32
    %46 = vector.broadcast %cst_22 : f32 to vector<16x16xf32>
    %47 = arith.mulf %45, %46 : vector<16x16xf32>
    %48 = arith.addf %47, %38 : vector<16x16xf32>
    %cst_23 = arith.constant dense<0xFF800000> : vector<16xf32>
    %49 = vector.multi_reduction <maximumf>, %48, %cst_23 [1] : vector<16x16xf32> to vector<16xf32>
    %50 = vector.shape_cast %49 : vector<16xf32> to vector<16x1xf32>
    %51 = vector.broadcast %50 : vector<16x1xf32> to vector<16x16xf32>
    %52 = arith.subf %48, %51 : vector<16x16xf32>
    %53 = math.exp %52 : vector<16x16xf32>
    %cst_24 = arith.constant dense<0.000000e+00> : vector<16xf32>
    %54 = vector.multi_reduction <add>, %53, %cst_24 [1] : vector<16x16xf32> to vector<16xf32>
    %55 = vector.shape_cast %54 : vector<16xf32> to vector<16x1xf32>
    %56 = tpu.reciprocal %55 {approx = true} : vector<16x1xf32> -> vector<16x1xf32>
    %57 = vector.broadcast %56 : vector<16x1xf32> to vector<16x16xf32>
    %58 = arith.mulf %53, %57 : vector<16x16xf32>
    %59 = arith.truncf %58 : vector<16x16xf32> to vector<16x16xbf16>
    %cst_25 = arith.constant dense<0.000000e+00> : vector<16x8xf32>
    %60 = tpu.matmul %59, %44, %cst_25 {dimension_numbers = #tpu.dot_dimension_numbers<[1], [0], [0], [1], [0, 0, 1, 1], [], []>} : vector<16x16xbf16>, vector<16x8xbf16>, vector<16x8xf32> -> vector<16x8xf32>
    %61 = vector.extract_strided_slice %37 {offsets = [0, 8], sizes = [16, 8], strides = [1, 1]} : vector<16x96xf32> to vector<16x8xf32>
    %62 = arith.truncf %61 : vector<16x8xf32> to vector<16x8xbf16>
    %63 = vector.extract_strided_slice %37 {offsets = [0, 40], sizes = [16, 8], strides = [1, 1]} : vector<16x96xf32> to vector<16x8xf32>
    %64 = arith.truncf %63 : vector<16x8xf32> to vector<16x8xbf16>
    %65 = vector.extract_strided_slice %37 {offsets = [0, 72], sizes = [16, 8], strides = [1, 1]} : vector<16x96xf32> to vector<16x8xf32>
    %66 = arith.truncf %65 : vector<16x8xf32> to vector<16x8xbf16>
    %cst_26 = arith.constant dense<0.000000e+00> : vector<16x16xf32>
    %67 = tpu.matmul %62, %64, %cst_26 {dimension_numbers = #tpu.dot_dimension_numbers<[1], [1], [0], [0], [0, 0, 1, 0], [], []>} : vector<16x8xbf16>, vector<16x8xbf16>, vector<16x16xf32> -> vector<16x16xf32>
    %cst_27 = arith.constant 0.353553385 : f32
    %68 = vector.broadcast %cst_27 : f32 to vector<16x16xf32>
    %69 = arith.mulf %67, %68 : vector<16x16xf32>
    %70 = arith.addf %69, %38 : vector<16x16xf32>
    %cst_28 = arith.constant dense<0xFF800000> : vector<16xf32>
    %71 = vector.multi_reduction <maximumf>, %70, %cst_28 [1] : vector<16x16xf32> to vector<16xf32>
    %72 = vector.shape_cast %71 : vector<16xf32> to vector<16x1xf32>
    %73 = vector.broadcast %72 : vector<16x1xf32> to vector<16x16xf32>
    %74 = arith.subf %70, %73 : vector<16x16xf32>
    %75 = math.exp %74 : vector<16x16xf32>
    %cst_29 = arith.constant dense<0.000000e+00> : vector<16xf32>
    %76 = vector.multi_reduction <add>, %75, %cst_29 [1] : vector<16x16xf32> to vector<16xf32>
    %77 = vector.shape_cast %76 : vector<16xf32> to vector<16x1xf32>
    %78 = tpu.reciprocal %77 {approx = true} : vector<16x1xf32> -> vector<16x1xf32>
    %79 = vector.broadcast %78 : vector<16x1xf32> to vector<16x16xf32>
    %80 = arith.mulf %75, %79 : vector<16x16xf32>
    %81 = arith.truncf %80 : vector<16x16xf32> to vector<16x16xbf16>
    %cst_30 = arith.constant dense<0.000000e+00> : vector<16x8xf32>
    %82 = tpu.matmul %81, %66, %cst_30 {dimension_numbers = #tpu.dot_dimension_numbers<[1], [0], [0], [1], [0, 0, 1, 1], [], []>} : vector<16x16xbf16>, vector<16x8xbf16>, vector<16x8xf32> -> vector<16x8xf32>
    %83 = vector.extract_strided_slice %37 {offsets = [0, 16], sizes = [16, 8], strides = [1, 1]} : vector<16x96xf32> to vector<16x8xf32>
    %84 = arith.truncf %83 : vector<16x8xf32> to vector<16x8xbf16>
    %85 = vector.extract_strided_slice %37 {offsets = [0, 48], sizes = [16, 8], strides = [1, 1]} : vector<16x96xf32> to vector<16x8xf32>
    %86 = arith.truncf %85 : vector<16x8xf32> to vector<16x8xbf16>
    %87 = vector.extract_strided_slice %37 {offsets = [0, 80], sizes = [16, 8], strides = [1, 1]} : vector<16x96xf32> to vector<16x8xf32>
    %88 = arith.truncf %87 : vector<16x8xf32> to vector<16x8xbf16>
    %cst_31 = arith.constant dense<0.000000e+00> : vector<16x16xf32>
    %89 = tpu.matmul %84, %86, %cst_31 {dimension_numbers = #tpu.dot_dimension_numbers<[1], [1], [0], [0], [0, 0, 1, 0], [], []>} : vector<16x8xbf16>, vector<16x8xbf16>, vector<16x16xf32> -> vector<16x16xf32>
    %cst_32 = arith.constant 0.353553385 : f32
    %90 = vector.broadcast %cst_32 : f32 to vector<16x16xf32>
    %91 = arith.mulf %89, %90 : vector<16x16xf32>
    %92 = arith.addf %91, %38 : vector<16x16xf32>
    %cst_33 = arith.constant dense<0xFF800000> : vector<16xf32>
    %93 = vector.multi_reduction <maximumf>, %92, %cst_33 [1] : vector<16x16xf32> to vector<16xf32>
    %94 = vector.shape_cast %93 : vector<16xf32> to vector<16x1xf32>
    %95 = vector.broadcast %94 : vector<16x1xf32> to vector<16x16xf32>
    %96 = arith.subf %92, %95 : vector<16x16xf32>
    %97 = math.exp %96 : vector<16x16xf32>
    %cst_34 = arith.constant dense<0.000000e+00> : vector<16xf32>
    %98 = vector.multi_reduction <add>, %97, %cst_34 [1] : vector<16x16xf32> to vector<16xf32>
    %99 = vector.shape_cast %98 : vector<16xf32> to vector<16x1xf32>
    %100 = tpu.reciprocal %99 {approx = true} : vector<16x1xf32> -> vector<16x1xf32>
    %101 = vector.broadcast %100 : vector<16x1xf32> to vector<16x16xf32>
    %102 = arith.mulf %97, %101 : vector<16x16xf32>
    %103 = arith.truncf %102 : vector<16x16xf32> to vector<16x16xbf16>
    %cst_35 = arith.constant dense<0.000000e+00> : vector<16x8xf32>
    %104 = tpu.matmul %103, %88, %cst_35 {dimension_numbers = #tpu.dot_dimension_numbers<[1], [0], [0], [1], [0, 0, 1, 1], [], []>} : vector<16x16xbf16>, vector<16x8xbf16>, vector<16x8xf32> -> vector<16x8xf32>
    %105 = vector.extract_strided_slice %37 {offsets = [0, 24], sizes = [16, 8], strides = [1, 1]} : vector<16x96xf32> to vector<16x8xf32>
    %106 = arith.truncf %105 : vector<16x8xf32> to vector<16x8xbf16>
    %107 = vector.extract_strided_slice %37 {offsets = [0, 56], sizes = [16, 8], strides = [1, 1]} : vector<16x96xf32> to vector<16x8xf32>
    %108 = arith.truncf %107 : vector<16x8xf32> to vector<16x8xbf16>
    %109 = vector.extract_strided_slice %37 {offsets = [0, 88], sizes = [16, 8], strides = [1, 1]} : vector<16x96xf32> to vector<16x8xf32>
    %110 = arith.truncf %109 : vector<16x8xf32> to vector<16x8xbf16>
    %cst_36 = arith.constant dense<0.000000e+00> : vector<16x16xf32>
    %111 = tpu.matmul %106, %108, %cst_36 {dimension_numbers = #tpu.dot_dimension_numbers<[1], [1], [0], [0], [0, 0, 1, 0], [], []>} : vector<16x8xbf16>, vector<16x8xbf16>, vector<16x16xf32> -> vector<16x16xf32>
    %cst_37 = arith.constant 0.353553385 : f32
    %112 = vector.broadcast %cst_37 : f32 to vector<16x16xf32>
    %113 = arith.mulf %111, %112 : vector<16x16xf32>
    %114 = arith.addf %113, %38 : vector<16x16xf32>
    %cst_38 = arith.constant dense<0xFF800000> : vector<16xf32>
    %115 = vector.multi_reduction <maximumf>, %114, %cst_38 [1] : vector<16x16xf32> to vector<16xf32>
    %116 = vector.shape_cast %115 : vector<16xf32> to vector<16x1xf32>
    %117 = vector.broadcast %116 : vector<16x1xf32> to vector<16x16xf32>
    %118 = arith.subf %114, %117 : vector<16x16xf32>
    %119 = math.exp %118 : vector<16x16xf32>
    %cst_39 = arith.constant dense<0.000000e+00> : vector<16xf32>
    %120 = vector.multi_reduction <add>, %119, %cst_39 [1] : vector<16x16xf32> to vector<16xf32>
    %121 = vector.shape_cast %120 : vector<16xf32> to vector<16x1xf32>
    %122 = tpu.reciprocal %121 {approx = true} : vector<16x1xf32> -> vector<16x1xf32>
    %123 = vector.broadcast %122 : vector<16x1xf32> to vector<16x16xf32>
    %124 = arith.mulf %119, %123 : vector<16x16xf32>
    %125 = arith.truncf %124 : vector<16x16xf32> to vector<16x16xbf16>
    %cst_40 = arith.constant dense<0.000000e+00> : vector<16x8xf32>
    %126 = tpu.matmul %125, %110, %cst_40 {dimension_numbers = #tpu.dot_dimension_numbers<[1], [0], [0], [1], [0, 0, 1, 1], [], []>} : vector<16x16xbf16>, vector<16x8xbf16>, vector<16x8xf32> -> vector<16x8xf32>
    %127 = tpu.concatenate %60, %82, %104, %126 in 1 : vector<16x8xf32>, vector<16x8xf32>, vector<16x8xf32>, vector<16x8xf32> -> vector<16x32xf32>
    %128 = arith.truncf %127 : vector<16x32xf32> to vector<16x32xbf16>
    %c0_41 = arith.constant 0 : index
    %c0_42 = arith.constant 0 : index
    %c0_43 = arith.constant 0 : index
    %129 = vector.load %arg7[%c0_41, %c0_42, %c0_43] : memref<1x32x32xbf16, #tpu.memory_space<vmem>>, vector<1x32x32xbf16>
    %130 = vector.shape_cast %129 : vector<1x32x32xbf16> to vector<32x32xbf16>
    %cst_44 = arith.constant dense<0.000000e+00> : vector<16x32xf32>
    %131 = tpu.matmul %128, %130, %cst_44 {dimension_numbers = #tpu.dot_dimension_numbers<[1], [0], [0], [1], [0, 0, 1, 1], [], []>} : vector<16x32xbf16>, vector<32x32xbf16>, vector<16x32xf32> -> vector<16x32xf32>
    %132 = arith.addf %3, %131 : vector<16x32xf32>
    %c0_45 = arith.constant 0 : index
    %c0_46 = arith.constant 0 : index
    %c0_47 = arith.constant 0 : index
    %133 = vector.load %arg8[%c0_45, %c0_46, %c0_47] : memref<1x1x32xf32, #tpu.memory_space<vmem>>, vector<1x1x32xf32>
    %134 = vector.shape_cast %133 : vector<1x1x32xf32> to vector<1x32xf32>
    %135 = vector.broadcast %134 : vector<1x32xf32> to vector<16x32xf32>
    %136 = arith.addf %132, %135 : vector<16x32xf32>
    %c0_48 = arith.constant 0 : index
    %c0_49 = arith.constant 0 : index
    %c0_50 = arith.constant 0 : index
    %137 = vector.load %arg9[%c0_48, %c0_49, %c0_50] : memref<1x1x32xf32, #tpu.memory_space<vmem>>, vector<1x1x32xf32>
    %138 = vector.shape_cast %137 : vector<1x1x32xf32> to vector<1x32xf32>
    %c0_51 = arith.constant 0 : index
    %c0_52 = arith.constant 0 : index
    %c0_53 = arith.constant 0 : index
    %139 = vector.load %arg10[%c0_51, %c0_52, %c0_53] : memref<1x1x32xf32, #tpu.memory_space<vmem>>, vector<1x1x32xf32>
    %140 = vector.shape_cast %139 : vector<1x1x32xf32> to vector<1x32xf32>
    %cst_54 = arith.constant dense<0.000000e+00> : vector<16xf32>
    %141 = vector.multi_reduction <add>, %136, %cst_54 [1] : vector<16x32xf32> to vector<16xf32>
    %142 = vector.shape_cast %141 : vector<16xf32> to vector<16x1xf32>
    %cst_55 = arith.constant 3.200000e+01 : f32
    %143 = vector.broadcast %cst_55 : f32 to vector<16x1xf32>
    %144 = arith.divf %142, %143 : vector<16x1xf32>
    %145 = vector.broadcast %144 : vector<16x1xf32> to vector<16x32xf32>
    %146 = arith.subf %136, %145 : vector<16x32xf32>
    %147 = arith.mulf %146, %146 : vector<16x32xf32>
    %cst_56 = arith.constant dense<0.000000e+00> : vector<16xf32>
    %148 = vector.multi_reduction <add>, %147, %cst_56 [1] : vector<16x32xf32> to vector<16xf32>
    %149 = vector.shape_cast %148 : vector<16xf32> to vector<16x1xf32>
    %cst_57 = arith.constant 3.200000e+01 : f32
    %150 = vector.broadcast %cst_57 : f32 to vector<16x1xf32>
    %151 = arith.divf %149, %150 : vector<16x1xf32>
    %152 = vector.broadcast %144 : vector<16x1xf32> to vector<16x32xf32>
    %153 = arith.subf %136, %152 : vector<16x32xf32>
    %cst_58 = arith.constant 9.99999974E-6 : f32
    %154 = vector.broadcast %cst_58 : f32 to vector<16x1xf32>
    %155 = arith.addf %151, %154 : vector<16x1xf32>
    %156 = math.rsqrt %155 : vector<16x1xf32>
    %157 = vector.broadcast %156 : vector<16x1xf32> to vector<16x32xf32>
    %158 = arith.mulf %153, %157 : vector<16x32xf32>
    %159 = vector.broadcast %138 : vector<1x32xf32> to vector<16x32xf32>
    %160 = arith.mulf %158, %159 : vector<16x32xf32>
    %161 = vector.broadcast %140 : vector<1x32xf32> to vector<16x32xf32>
    %162 = arith.addf %160, %161 : vector<16x32xf32>
    %163 = arith.truncf %162 : vector<16x32xf32> to vector<16x32xbf16>
    %c0_59 = arith.constant 0 : index
    %c0_60 = arith.constant 0 : index
    %c0_61 = arith.constant 0 : index
    %164 = vector.load %arg11[%c0_59, %c0_60, %c0_61] : memref<1x32x128xbf16, #tpu.memory_space<vmem>>, vector<1x32x128xbf16>
    %165 = vector.shape_cast %164 : vector<1x32x128xbf16> to vector<32x128xbf16>
    %cst_62 = arith.constant dense<0.000000e+00> : vector<16x128xf32>
    %166 = tpu.matmul %163, %165, %cst_62 {dimension_numbers = #tpu.dot_dimension_numbers<[1], [0], [0], [1], [0, 0, 1, 1], [], []>} : vector<16x32xbf16>, vector<32x128xbf16>, vector<16x128xf32> -> vector<16x128xf32>
    %c0_63 = arith.constant 0 : index
    %c0_64 = arith.constant 0 : index
    %c0_65 = arith.constant 0 : index
    %167 = vector.load %arg12[%c0_63, %c0_64, %c0_65] : memref<1x1x128xf32, #tpu.memory_space<vmem>>, vector<1x1x128xf32>
    %168 = vector.shape_cast %167 : vector<1x1x128xf32> to vector<1x128xf32>
    %169 = vector.broadcast %168 : vector<1x128xf32> to vector<16x128xf32>
    %170 = arith.addf %166, %169 : vector<16x128xf32>
    %cst_66 = arith.constant 5.000000e-01 : f32
    %171 = vector.broadcast %cst_66 : f32 to vector<16x128xf32>
    %172 = arith.mulf %171, %170 : vector<16x128xf32>
    %cst_67 = arith.constant 4.471500e-02 : f32
    %173 = vector.broadcast %cst_67 : f32 to vector<16x128xf32>
    %174 = arith.mulf %173, %170 : vector<16x128xf32>
    %175 = arith.mulf %174, %170 : vector<16x128xf32>
    %176 = arith.mulf %175, %170 : vector<16x128xf32>
    %177 = arith.addf %170, %176 : vector<16x128xf32>
    %cst_68 = arith.constant 0.797884583 : f32
    %178 = vector.broadcast %cst_68 : f32 to vector<16x128xf32>
    %179 = arith.mulf %178, %177 : vector<16x128xf32>
    %180 = math.tanh %179 : vector<16x128xf32>
    %cst_69 = arith.constant 1.000000e+00 : f32
    %181 = vector.broadcast %cst_69 : f32 to vector<16x128xf32>
    %182 = arith.addf %181, %180 : vector<16x128xf32>
    %183 = arith.mulf %172, %182 : vector<16x128xf32>
    %184 = arith.truncf %183 : vector<16x128xf32> to vector<16x128xbf16>
    %c0_70 = arith.constant 0 : index
    %c0_71 = arith.constant 0 : index
    %c0_72 = arith.constant 0 : index
    %185 = vector.load %arg13[%c0_70, %c0_71, %c0_72] : memref<1x128x32xbf16, #tpu.memory_space<vmem>>, vector<1x128x32xbf16>
    %186 = vector.shape_cast %185 : vector<1x128x32xbf16> to vector<128x32xbf16>
    %cst_73 = arith.constant dense<0.000000e+00> : vector<16x32xf32>
    %187 = tpu.matmul %184, %186, %cst_73 {dimension_numbers = #tpu.dot_dimension_numbers<[1], [0], [0], [1], [0, 0, 1, 1], [], []>} : vector<16x128xbf16>, vector<128x32xbf16>, vector<16x32xf32> -> vector<16x32xf32>
    %188 = arith.addf %136, %187 : vector<16x32xf32>
    %c0_74 = arith.constant 0 : index
    %c0_75 = arith.constant 0 : index
    %c0_76 = arith.constant 0 : index
    %189 = vector.load %arg14[%c0_74, %c0_75, %c0_76] : memref<1x1x32xf32, #tpu.memory_space<vmem>>, vector<1x1x32xf32>
    %190 = vector.shape_cast %189 : vector<1x1x32xf32> to vector<1x32xf32>
    %191 = vector.broadcast %190 : vector<1x32xf32> to vector<16x32xf32>
    %192 = arith.addf %188, %191 : vector<16x32xf32>
    %c0_77 = arith.constant 0 : index
    %c0_78 = arith.constant 0 : index
    %193 = vector.load %arg17[%c0_77, %c0_78] : memref<16x32xf32, #tpu.memory_space<vmem>>, vector<16x32xf32>
    tpu.vector_store %arg17[%c0_77, %c0_78], %192 {strides = array<i32>} : memref<16x32xf32, #tpu.memory_space<vmem>>, vector<16x32xf32>,
    %c1_i32 = arith.constant 1 : i32
    %194 = arith.cmpi eq, %arg0, %c1_i32 : i32
    %195 = arith.extui %194 : i1 to i32
    %c0_i32_79 = arith.constant 0 : i32
    %196 = arith.cmpi ne, %195, %c0_i32_79 : i32
    scf.if %196 {
      %c0_80 = arith.constant 0 : index
      %c0_81 = arith.constant 0 : index
      %197 = vector.load %arg15[%c0_80, %c0_81] : memref<1x32xf32, #tpu.memory_space<vmem>>, vector<1x32xf32>
      %c0_82 = arith.constant 0 : index
      %c0_83 = arith.constant 0 : index
      %198 = vector.load %arg16[%c0_82, %c0_83] : memref<1x32xf32, #tpu.memory_space<vmem>>, vector<1x32xf32>
      %cst_84 = arith.constant dense<0.000000e+00> : vector<16xf32>
      %199 = vector.multi_reduction <add>, %192, %cst_84 [1] : vector<16x32xf32> to vector<16xf32>
      %200 = vector.shape_cast %199 : vector<16xf32> to vector<16x1xf32>
      %cst_85 = arith.constant 3.200000e+01 : f32
      %201 = vector.broadcast %cst_85 : f32 to vector<16x1xf32>
      %202 = arith.divf %200, %201 : vector<16x1xf32>
      %203 = vector.broadcast %202 : vector<16x1xf32> to vector<16x32xf32>
      %204 = arith.subf %192, %203 : vector<16x32xf32>
      %205 = arith.mulf %204, %204 : vector<16x32xf32>
      %cst_86 = arith.constant dense<0.000000e+00> : vector<16xf32>
      %206 = vector.multi_reduction <add>, %205, %cst_86 [1] : vector<16x32xf32> to vector<16xf32>
      %207 = vector.shape_cast %206 : vector<16xf32> to vector<16x1xf32>
      %cst_87 = arith.constant 3.200000e+01 : f32
      %208 = vector.broadcast %cst_87 : f32 to vector<16x1xf32>
      %209 = arith.divf %207, %208 : vector<16x1xf32>
      %210 = vector.broadcast %202 : vector<16x1xf32> to vector<16x32xf32>
      %211 = arith.subf %192, %210 : vector<16x32xf32>
      %cst_88 = arith.constant 9.99999974E-6 : f32
      %212 = vector.broadcast %cst_88 : f32 to vector<16x1xf32>
      %213 = arith.addf %209, %212 : vector<16x1xf32>
      %214 = math.rsqrt %213 : vector<16x1xf32>
      %215 = vector.broadcast %214 : vector<16x1xf32> to vector<16x32xf32>
      %216 = arith.mulf %211, %215 : vector<16x32xf32>
      %217 = vector.broadcast %197 : vector<1x32xf32> to vector<16x32xf32>
      %218 = arith.mulf %216, %217 : vector<16x32xf32>
      %219 = vector.broadcast %198 : vector<1x32xf32> to vector<16x32xf32>
      %220 = arith.addf %218, %219 : vector<16x32xf32>
      %c0_89 = arith.constant 0 : index
      %c0_90 = arith.constant 0 : index
      %221 = vector.load %arg17[%c0_89, %c0_90] : memref<16x32xf32, #tpu.memory_space<vmem>>, vector<16x32xf32>
      tpu.vector_store %arg17[%c0_89, %c0_90], %220 {strides = array<i32>} : memref<16x32xf32, #tpu.memory_space<vmem>>, vector<16x32xf32>,
    } else {
    }
    return
  }
  func.func @transform_0(%arg0: i32) -> (i32, i32) {
    %c0_i32 = arith.constant 0 : i32
    %c0_i32_0 = arith.constant 0 : i32
    %c0_i32_1 = arith.constant 0 : i32
    return %c0_i32, %c0_i32_0 : i32, i32
  }
  func.func @transform_1(%arg0: i32) -> (i32, i32) {
    %c0_i32 = arith.constant 0 : i32
    %c0_i32_0 = arith.constant 0 : i32
    %c0_i32_1 = arith.constant 0 : i32
    return %c0_i32, %c0_i32_0 : i32, i32
  }
  func.func @transform_2(%arg0: i32) -> (i32, i32, i32) {
    %c0_i32 = arith.constant 0 : i32
    %c0_i32_0 = arith.constant 0 : i32
    %c0_i32_1 = arith.constant 0 : i32
    return %arg0, %c0_i32, %c0_i32_0 : i32, i32, i32
  }
  func.func @transform_3(%arg0: i32) -> (i32, i32, i32) {
    %c0_i32 = arith.constant 0 : i32
    %c0_i32_0 = arith.constant 0 : i32
    %c0_i32_1 = arith.constant 0 : i32
    return %arg0, %c0_i32, %c0_i32_0 : i32, i32, i32
  }
  func.func @transform_4(%arg0: i32) -> (i32, i32, i32) {
    %c0_i32 = arith.constant 0 : i32
    %c0_i32_0 = arith.constant 0 : i32
    %c0_i32_1 = arith.constant 0 : i32
    return %arg0, %c0_i32, %c0_i32_0 : i32, i32, i32
  }
  func.func @transform_5(%arg0: i32) -> (i32, i32, i32) {
    %c0_i32 = arith.constant 0 : i32
    %c0_i32_0 = arith.constant 0 : i32
    %c0_i32_1 = arith.constant 0 : i32
    return %arg0, %c0_i32, %c0_i32_0 : i32, i32, i32
  }
  func.func @transform_6(%arg0: i32) -> (i32, i32, i32) {
    %c0_i32 = arith.constant 0 : i32
    %c0_i32_0 = arith.constant 0 : i32
    %c0_i32_1 = arith.constant 0 : i32
    return %arg0, %c0_i32, %c0_i32_0 : i32, i32, i32
  }
  func.func @transform_7(%arg0: i32) -> (i32, i32, i32) {
    %c0_i32 = arith.constant 0 : i32
    %c0_i32_0 = arith.constant 0 : i32
    %c0_i32_1 = arith.constant 0 : i32
    return %arg0, %c0_i32, %c0_i32_0 : i32, i32, i32
  }
  func.func @transform_8(%arg0: i32) -> (i32, i32, i32) {
    %c0_i32 = arith.constant 0 : i32
    %c0_i32_0 = arith.constant 0 : i32
    %c0_i32_1 = arith.constant 0 : i32
    return %arg0, %c0_i32, %c0_i32_0 : i32, i32, i32
  }
  func.func @transform_9(%arg0: i32) -> (i32, i32, i32) {
    %c0_i32 = arith.constant 0 : i32
    %c0_i32_0 = arith.constant 0 : i32
    %c0_i32_1 = arith.constant 0 : i32
    return %arg0, %c0_i32, %c0_i32_0 : i32, i32, i32
  }
  func.func @transform_10(%arg0: i32) -> (i32, i32, i32) {
    %c0_i32 = arith.constant 0 : i32
    %c0_i32_0 = arith.constant 0 : i32
    %c0_i32_1 = arith.constant 0 : i32
    return %arg0, %c0_i32, %c0_i32_0 : i32, i32, i32
  }
  func.func @transform_11(%arg0: i32) -> (i32, i32, i32) {
    %c0_i32 = arith.constant 0 : i32
    %c0_i32_0 = arith.constant 0 : i32
    %c0_i32_1 = arith.constant 0 : i32
    return %arg0, %c0_i32, %c0_i32_0 : i32, i32, i32
  }
  func.func @transform_12(%arg0: i32) -> (i32, i32, i32) {
    %c0_i32 = arith.constant 0 : i32
    %c0_i32_0 = arith.constant 0 : i32
    %c0_i32_1 = arith.constant 0 : i32
    return %arg0, %c0_i32, %c0_i32_0 : i32, i32, i32
  }
  func.func @transform_13(%arg0: i32) -> (i32, i32, i32) {
    %c0_i32 = arith.constant 0 : i32
    %c0_i32_0 = arith.constant 0 : i32
    %c0_i32_1 = arith.constant 0 : i32
    return %arg0, %c0_i32, %c0_i32_0 : i32, i32, i32
  }
  func.func @transform_14(%arg0: i32) -> (i32, i32) {
    %c0_i32 = arith.constant 0 : i32
    %c0_i32_0 = arith.constant 0 : i32
    %c0_i32_1 = arith.constant 0 : i32
    return %c0_i32, %c0_i32_0 : i32, i32
  }
  func.func @transform_15(%arg0: i32) -> (i32, i32) {
    %c0_i32 = arith.constant 0 : i32
    %c0_i32_0 = arith.constant 0 : i32
    %c0_i32_1 = arith.constant 0 : i32
    return %c0_i32, %c0_i32_0 : i32, i32
  }
  func.func @transform_16(%arg0: i32) -> (i32, i32) {
    %c0_i32 = arith.constant 0 : i32
    %c0_i32_0 = arith.constant 0 : i32
    %c0_i32_1 = arith.constant 0 : i32
    return %c0_i32, %c0_i32_0 : i32, i32
  }
}

</mosaic_0001>

<llo_original>
// kernel: custom-call.12
$region0: #{custom-call.12}
  %s0 = inlined_call_operand.vmem [shape: f32[2,64], index: 0, kind: output, shape index: {}]

// kernel: pointcloud_encoder_forward.2
$region0: #{pointcloud_encoder_forward.2}
  #allocation0 [shape = 'u32[]', space=smem, size = 0x4, offset = 0x4, fixed_abs, tag = 'smem constant byte address 0x4 - core index']
  #allocation1 [shape = 'u32[144,128]{1,0:T(1,128)}', space=vmem, size = 0x12000, scoped, tag = 'internal scratch']
  %s0 = inlined_call_operand.vmem [shape: f32[2,128,6], index: 0, kind: input, shape index: {}]
  %s1 = inlined_call_operand.vmem [shape: f32[2,8,3], index: 1, kind: input, shape index: {}]
  %s2 = inlined_call_operand.vmem [shape: bf16[6,128], index: 2, kind: input, shape index: {}]
  %s3 = inlined_call_operand.vmem [shape: f32[1,128], index: 3, kind: input, shape index: {}]
  %s4 = inlined_call_operand.vmem [shape: f32[1,128], index: 4, kind: input, shape index: {}]
  %s5 = inlined_call_operand.vmem [shape: f32[1,128], index: 5, kind: input, shape index: {}]
  %s6 = inlined_call_operand.vmem [shape: bf16[128,256], index: 6, kind: input, shape index: {}]
  %s7 = inlined_call_operand.vmem [shape: f32[1,256], index: 7, kind: input, shape index: {}]
  %s8 = inlined_call_operand.vmem [shape: bf16[256,512], index: 8, kind: input, shape index: {}]
  %s9 = inlined_call_operand.vmem [shape: bf16[256,512], index: 9, kind: input, shape index: {}]
  %s10 = inlined_call_operand.vmem [shape: f32[1,512], index: 10, kind: input, shape index: {}]
  %s11 = inlined_call_operand.vmem [shape: f32[1,512], index: 11, kind: input, shape index: {}]
  %s12 = inlined_call_operand.vmem [shape: f32[1,512], index: 12, kind: input, shape index: {}]
  %s13 = inlined_call_operand.vmem [shape: bf16[512,32], index: 13, kind: input, shape index: {}]
  %s14 = inlined_call_operand.vmem [shape: f32[1,32], index: 14, kind: input, shape index: {}]
  %s15 = inlined_call_operand.vmem [shape: bf16[32,32], index: 15, kind: input, shape index: {}]
  %s16 = inlined_call_operand.vmem [shape: f32[1,32], index: 16, kind: input, shape index: {}]
  %s17 = inlined_call_operand.vmem [shape: bf16[3,128], index: 17, kind: input, shape index: {}]
  %s18 = inlined_call_operand.vmem [shape: f32[1,128], index: 18, kind: input, shape index: {}]
  %s19 = inlined_call_operand.vmem [shape: bf16[128,32], index: 19, kind: input, shape index: {}]
  %s20 = inlined_call_operand.vmem [shape: f32[1,32], index: 20, kind: input, shape index: {}]
  %s21 = inlined_call_operand.vmem [shape: f32[2,8,64], index: 21, kind: output, shape index: {}]
  %s22 = sld [smem:[#allocation0]]
  $region117: #{pointcloud_encoder_forward.2} parent=0
    _
  %s24 = ssub.s32 1, %s22
  %s25 = scalar_select 0, %s24, %s22
  loop: start=0, step=1, limit=4
  $region2: #{pointcloud_encoder_forward.2} parent=0 // loop_pre_header
    _
  $region3: #{pointcloud_encoder_forward.2} parent=0 // loop_header
    %s27 = sphi 0, %s31
    %p28 = scmp.ge.s32.totalorder %s27, 4
    %s37 = sphi 0, %s39
    %s40 = sphi 0, %s37
    %s41 = sphi 0, %s40
    %s57 = sphi 0, %s41
    %s63 = sphi 0, %s65
    %s66 = sphi 0, %s63
    %s67 = sphi 0, %s66
    %s83 = sphi 0, %s67
    %s87 = sphi 0, %s87
    %s89 = sphi 0, %s87
    %s90 = sphi 0, %s89
    %s104 = sphi 0, %s90
    %s108 = sphi 0, %s108
    %s110 = sphi 0, %s108
    %s111 = sphi 0, %s110
    %s125 = sphi 0, %s111
    %s129 = sphi 0, %s129
    %s131 = sphi 0, %s129
    %s132 = sphi 0, %s131
    %s146 = sphi 0, %s132
    %s150 = sphi 0, %s150
    %s152 = sphi 0, %s150
    %s153 = sphi 0, %s152
    %s167 = sphi 0, %s153
    %s171 = sphi 0, %s171
    %s173 = sphi 0, %s171
    %s174 = sphi 0, %s173
    %s188 = sphi 0, %s174
    %s192 = sphi 0, %s192
    %s194 = sphi 0, %s192
    %s195 = sphi 0, %s194
    %s209 = sphi 0, %s195
    %s213 = sphi 0, %s213
    %s215 = sphi 0, %s213
    %s216 = sphi 0, %s215
    %s230 = sphi 0, %s216
    %s234 = sphi 0, %s234
    %s236 = sphi 0, %s234
    %s237 = sphi 0, %s236
    %s251 = sphi 0, %s237
    %s255 = sphi 0, %s255
    %s257 = sphi 0, %s255
    %s258 = sphi 0, %s257
    %s272 = sphi 0, %s258
    %s276 = sphi 0, %s276
    %s278 = sphi 0, %s276
    %s279 = sphi 0, %s278
    %s293 = sphi 0, %s279
    %s297 = sphi 0, %s297
    %s299 = sphi 0, %s297
    %s300 = sphi 0, %s299
    %s314 = sphi 0, %s300
    %s318 = sphi 0, %s318
    %s320 = sphi 0, %s318
    %s321 = sphi 0, %s320
    %s335 = sphi 0, %s321
    %s339 = sphi 0, %s339
    %s341 = sphi 0, %s339
    %s342 = sphi 0, %s341
    %s356 = sphi 0, %s342
    %s360 = sphi 0, %s360
    %s362 = sphi 0, %s360
    %s363 = sphi 0, %s362
    %s377 = sphi 0, %s363
    %s381 = sphi 0, %s381
    %s383 = sphi 0, %s381
    %s384 = sphi 0, %s383
    %s398 = sphi 0, %s384
    %s402 = sphi 0, %s402
    %s404 = sphi 0, %s402
    %s405 = sphi 0, %s404
    %s419 = sphi 0, %s405
    %s423 = sphi 0, %s423
    %s425 = sphi 0, %s423
    %s426 = sphi 0, %s425
    %s440 = sphi 0, %s426
    %s444 = sphi 0, %s444
    %s446 = sphi 0, %s444
    %s447 = sphi 0, %s446
    %s461 = sphi 0, %s447
    %s465 = sphi 0, %s465
    %s467 = sphi 0, %s465
    %s468 = sphi 0, %s467
    %s482 = sphi 0, %s468
    %s488 = sphi 0, %s490
    %s491 = sphi 0, %s488
    %s492 = sphi 0, %s491
    %s508 = sphi 0, %s492
  $region4: #{pointcloud_encoder_forward.2} parent=0 // loop_header_branch
    %30 = sbr.rel (%p28) target = $region8
  $region5: #{pointcloud_encoder_forward.2} parent=0 // loop_body
    %s32 = ssub.s32 %s27, 1
    %s33 = ssub.s32 %s27, 2
    %s34 = sadd.s32 %s27, 1
    %s35 = ssub.s32 %s27, %s34
    %p36 = scmp.eq.s32.totalorder %s35, 0
    %s38 = sadd.s32 %s37, 1
    %s39 = scalar_select %p36, %s37, %s38
    %p42 = pneg %p36
    %p43 = scmp.eq.s32.totalorder %s27, 1
    %p44 = por %p42, %p43
    %p45 = scmp.ne.s32.totalorder %s37, %s40
    %p46 = scmp.eq.s32.totalorder %s27, 0
    %p47 = por %p45, %p46
    %p48 = scmp.ne.s32.totalorder %s37, %s40
    %p49 = scmp.eq.s32.totalorder %s32, 1
    %p50 = por %p48, %p49
    %p51 = scmp.ne.s32.totalorder %s40, %s41
    %p52 = scmp.eq.s32.totalorder %s32, 0
    %p53 = por %p51, %p52
    %p54 = scmp.ne.s32.totalorder %s40, %s41
    %p55 = scmp.eq.s32.totalorder %s33, 1
    %p56 = por %p54, %p55
    %p58 = scmp.ne.s32.totalorder %s41, %s57
    %p59 = scmp.eq.s32.totalorder %s33, 0
    %p60 = por %p58, %p59
    %s61 = ssub.s32 %s27, %s34
    %p62 = scmp.eq.s32.totalorder %s61, 0
    %s64 = sadd.s32 %s63, 1
    %s65 = scalar_select %p62, %s63, %s64
    %p68 = pneg %p62
    %p69 = scmp.eq.s32.totalorder %s27, 1
    %p70 = por %p68, %p69
    %p71 = scmp.ne.s32.totalorder %s63, %s66
    %p72 = scmp.eq.s32.totalorder %s27, 0
    %p73 = por %p71, %p72
    %p74 = scmp.ne.s32.totalorder %s63, %s66
    %p75 = scmp.eq.s32.totalorder %s32, 1
    %p76 = por %p74, %p75
    %p77 = scmp.ne.s32.totalorder %s66, %s67
    %p78 = scmp.eq.s32.totalorder %s32, 0
    %p79 = por %p77, %p78
    %p80 = scmp.ne.s32.totalorder %s66, %s67
    %p81 = scmp.eq.s32.totalorder %s33, 1
    %p82 = por %p80, %p81
    %p84 = scmp.ne.s32.totalorder %s67, %s83
    %p85 = scmp.eq.s32.totalorder %s33, 0
    %p86 = por %p84, %p85
    %s88 = sadd.s32 %s87, 1
    %p91 = scmp.eq.s32.totalorder %s27, 1
    %p92 = scmp.ne.s32.totalorder %s87, %s89
    %p93 = scmp.eq.s32.totalorder %s27, 0
    %p94 = por %p92, %p93
    %p95 = scmp.ne.s32.totalorder %s87, %s89
    %p96 = scmp.eq.s32.totalorder %s32, 1
    %p97 = por %p95, %p96
    %p98 = scmp.ne.s32.totalorder %s89, %s90
    %p99 = scmp.eq.s32.totalorder %s32, 0
    %p100 = por %p98, %p99
    %p101 = scmp.ne.s32.totalorder %s89, %s90
    %p102 = scmp.eq.s32.totalorder %s33, 1
    %p103 = por %p101, %p102
    %p105 = scmp.ne.s32.totalorder %s90, %s104
    %p106 = scmp.eq.s32.totalorder %s33, 0
    %p107 = por %p105, %p106
    %s109 = sadd.s32 %s108, 1
    %p112 = scmp.eq.s32.totalorder %s27, 1
    %p113 = scmp.ne.s32.totalorder %s108, %s110
    %p114 = scmp.eq.s32.totalorder %s27, 0
    %p115 = por %p113, %p114
    %p116 = scmp.ne.s32.totalorder %s108, %s110
    %p117 = scmp.eq.s32.totalorder %s32, 1
    %p118 = por %p116, %p117
    %p119 = scmp.ne.s32.totalorder %s110, %s111
    %p120 = scmp.eq.s32.totalorder %s32, 0
    %p121 = por %p119, %p120
    %p122 = scmp.ne.s32.totalorder %s110, %s111
    %p123 = scmp.eq.s32.totalorder %s33, 1
    %p124 = por %p122, %p123
    %p126 = scmp.ne.s32.totalorder %s111, %s125
    %p127 = scmp.eq.s32.totalorder %s33, 0
    %p128 = por %p126, %p127
    %s130 = sadd.s32 %s129, 1
    %p133 = scmp.eq.s32.totalorder %s27, 1
    %p134 = scmp.ne.s32.totalorder %s129, %s131
    %p135 = scmp.eq.s32.totalorder %s27, 0
    %p136 = por %p134, %p135
    %p137 = scmp.ne.s32.totalorder %s129, %s131
    %p138 = scmp.eq.s32.totalorder %s32, 1
    %p139 = por %p137, %p138
    %p140 = scmp.ne.s32.totalorder %s131, %s132
    %p141 = scmp.eq.s32.totalorder %s32, 0
    %p142 = por %p140, %p141
    %p143 = scmp.ne.s32.totalorder %s131, %s132
    %p144 = scmp.eq.s32.totalorder %s33, 1
    %p145 = por %p143, %p144
    %p147 = scmp.ne.s32.totalorder %s132, %s146
    %p148 = scmp.eq.s32.totalorder %s33, 0
    %p149 = por %p147, %p148
    %s151 = sadd.s32 %s150, 1
    %p154 = scmp.eq.s32.totalorder %s27, 1
    %p155 = scmp.ne.s32.totalorder %s150, %s152
    %p156 = scmp.eq.s32.totalorder %s27, 0
    %p157 = por %p155, %p156
    %p158 = scmp.ne.s32.totalorder %s150, %s152
    %p159 = scmp.eq.s32.totalorder %s32, 1
    %p160 = por %p158, %p159
    %p161 = scmp.ne.s32.totalorder %s152, %s153
    %p162 = scmp.eq.s32.totalorder %s32, 0
    %p163 = por %p161, %p162
    %p164 = scmp.ne.s32.totalorder %s152, %s153
    %p165 = scmp.eq.s32.totalorder %s33, 1
    %p166 = por %p164, %p165
    %p168 = scmp.ne.s32.totalorder %s153, %s167
    %p169 = scmp.eq.s32.totalorder %s33, 0
    %p170 = por %p168, %p169
    %s172 = sadd.s32 %s171, 1
    %p175 = scmp.eq.s32.totalorder %s27, 1
    %p176 = scmp.ne.s32.totalorder %s171, %s173
    %p177 = scmp.eq.s32.totalorder %s27, 0
    %p178 = por %p176, %p177
    %p179 = scmp.ne.s32.totalorder %s171, %s173
    %p180 = scmp.eq.s32.totalorder %s32, 1
    %p181 = por %p179, %p180
    %p182 = scmp.ne.s32.totalorder %s173, %s174
    %p183 = scmp.eq.s32.totalorder %s32, 0
    %p184 = por %p182, %p183
    %p185 = scmp.ne.s32.totalorder %s173, %s174
    %p186 = scmp.eq.s32.totalorder %s33, 1
    %p187 = por %p185, %p186
    %p189 = scmp.ne.s32.totalorder %s174, %s188
    %p190 = scmp.eq.s32.totalorder %s33, 0
    %p191 = por %p189, %p190
    %s193 = sadd.s32 %s192, 1
    %p196 = scmp.eq.s32.totalorder %s27, 1
    %p197 = scmp.ne.s32.totalorder %s192, %s194
    %p198 = scmp.eq.s32.totalorder %s27, 0
    %p199 = por %p197, %p198
    %p200 = scmp.ne.s32.totalorder %s192, %s194
    %p201 = scmp.eq.s32.totalorder %s32, 1
    %p202 = por %p200, %p201
    %p203 = scmp.ne.s32.totalorder %s194, %s195
    %p204 = scmp.eq.s32.totalorder %s32, 0
    %p205 = por %p203, %p204
    %p206 = scmp.ne.s32.totalorder %s194, %s195
    %p207 = scmp.eq.s32.totalorder %s33, 1
    %p208 = por %p206, %p207
    %p210 = scmp.ne.s32.totalorder %s195, %s209
    %p211 = scmp.eq.s32.totalorder %s33, 0
    %p212 = por %p210, %p211
    %s214 = sadd.s32 %s213, 1
    %p217 = scmp.eq.s32.totalorder %s27, 1
    %p218 = scmp.ne.s32.totalorder %s213, %s215
    %p219 = scmp.eq.s32.totalorder %s27, 0
    %p220 = por %p218, %p219
    %p221 = scmp.ne.s32.totalorder %s213, %s215
    %p222 = scmp.eq.s32.totalorder %s32, 1
    %p223 = por %p221, %p222
    %p224 = scmp.ne.s32.totalorder %s215, %s216
    %p225 = scmp.eq.s32.totalorder %s32, 0
    %p226 = por %p224, %p225
    %p227 = scmp.ne.s32.totalorder %s215, %s216
    %p228 = scmp.eq.s32.totalorder %s33, 1
    %p229 = por %p227, %p228
    %p231 = scmp.ne.s32.totalorder %s216, %s230
    %p232 = scmp.eq.s32.totalorder %s33, 0
    %p233 = por %p231, %p232
    %s235 = sadd.s32 %s234, 1
    %p238 = scmp.eq.s32.totalorder %s27, 1
    %p239 = scmp.ne.s32.totalorder %s234, %s236
    %p240 = scmp.eq.s32.totalorder %s27, 0
    %p241 = por %p239, %p240
    %p242 = scmp.ne.s32.totalorder %s234, %s236
    %p243 = scmp.eq.s32.totalorder %s32, 1
    %p244 = por %p242, %p243
    %p245 = scmp.ne.s32.totalorder %s236, %s237
    %p246 = scmp.eq.s32.totalorder %s32, 0
    %p247 = por %p245, %p246
    %p248 = scmp.ne.s32.totalorder %s236, %s237
    %p249 = scmp.eq.s32.totalorder %s33, 1
    %p250 = por %p248, %p249
    %p252 = scmp.ne.s32.totalorder %s237, %s251
    %p253 = scmp.eq.s32.totalorder %s33, 0
    %p254 = por %p252, %p253
    %s256 = sadd.s32 %s255, 1
    %p259 = scmp.eq.s32.totalorder %s27, 1
    %p260 = scmp.ne.s32.totalorder %s255, %s257
    %p261 = scmp.eq.s32.totalorder %s27, 0
    %p262 = por %p260, %p261
    %p263 = scmp.ne.s32.totalorder %s255, %s257
    %p264 = scmp.eq.s32.totalorder %s32, 1
    %p265 = por %p263, %p264
    %p266 = scmp.ne.s32.totalorder %s257, %s258
    %p267 = scmp.eq.s32.totalorder %s32, 0
    %p268 = por %p266, %p267
    %p269 = scmp.ne.s32.totalorder %s257, %s258
    %p270 = scmp.eq.s32.totalorder %s33, 1
    %p271 = por %p269, %p270
    %p273 = scmp.ne.s32.totalorder %s258, %s272
    %p274 = scmp.eq.s32.totalorder %s33, 0
    %p275 = por %p273, %p274
    %s277 = sadd.s32 %s276, 1
    %p280 = scmp.eq.s32.totalorder %s27, 1
    %p281 = scmp.ne.s32.totalorder %s276, %s278
    %p282 = scmp.eq.s32.totalorder %s27, 0
    %p283 = por %p281, %p282
    %p284 = scmp.ne.s32.totalorder %s276, %s278
    %p285 = scmp.eq.s32.totalorder %s32, 1
    %p286 = por %p284, %p285
    %p287 = scmp.ne.s32.totalorder %s278, %s279
    %p288 = scmp.eq.s32.totalorder %s32, 0
    %p289 = por %p287, %p288
    %p290 = scmp.ne.s32.totalorder %s278, %s279
    %p291 = scmp.eq.s32.totalorder %s33, 1
    %p292 = por %p290, %p291
    %p294 = scmp.ne.s32.totalorder %s279, %s293
    %p295 = scmp.eq.s32.totalorder %s33, 0
    %p296 = por %p294, %p295
    %s298 = sadd.s32 %s297, 1
    %p301 = scmp.eq.s32.totalorder %s27, 1
    %p302 = scmp.ne.s32.totalorder %s297, %s299
    %p303 = scmp.eq.s32.totalorder %s27, 0
    %p304 = por %p302, %p303
    %p305 = scmp.ne.s32.totalorder %s297, %s299
    %p306 = scmp.eq.s32.totalorder %s32, 1
    %p307 = por %p305, %p306
    %p308 = scmp.ne.s32.totalorder %s299, %s300
    %p309 = scmp.eq.s32.totalorder %s32, 0
    %p310 = por %p308, %p309
    %p311 = scmp.ne.s32.totalorder %s299, %s300
    %p312 = scmp.eq.s32.totalorder %s33, 1
    %p313 = por %p311, %p312
    %p315 = scmp.ne.s32.totalorder %s300, %s314
    %p316 = scmp.eq.s32.totalorder %s33, 0
    %p317 = por %p315, %p316
    %s319 = sadd.s32 %s318, 1
    %p322 = scmp.eq.s32.totalorder %s27, 1
    %p323 = scmp.ne.s32.totalorder %s318, %s320
    %p324 = scmp.eq.s32.totalorder %s27, 0
    %p325 = por %p323, %p324
    %p326 = scmp.ne.s32.totalorder %s318, %s320
    %p327 = scmp.eq.s32.totalorder %s32, 1
    %p328 = por %p326, %p327
    %p329 = scmp.ne.s32.totalorder %s320, %s321
    %p330 = scmp.eq.s32.totalorder %s32, 0
    %p331 = por %p329, %p330
    %p332 = scmp.ne.s32.totalorder %s320, %s321
    %p333 = scmp.eq.s32.totalorder %s33, 1
    %p334 = por %p332, %p333
    %p336 = scmp.ne.s32.totalorder %s321, %s335
    %p337 = scmp.eq.s32.totalorder %s33, 0
    %p338 = por %p336, %p337
    %s340 = sadd.s32 %s339, 1
    %p343 = scmp.eq.s32.totalorder %s27, 1
    %p344 = scmp.ne.s32.totalorder %s339, %s341
    %p345 = scmp.eq.s32.totalorder %s27, 0
    %p346 = por %p344, %p345
    %p347 = scmp.ne.s32.totalorder %s339, %s341
    %p348 = scmp.eq.s32.totalorder %s32, 1
    %p349 = por %p347, %p348
    %p350 = scmp.ne.s32.totalorder %s341, %s342
    %p351 = scmp.eq.s32.totalorder %s32, 0
    %p352 = por %p350, %p351
    %p353 = scmp.ne.s32.totalorder %s341, %s342
    %p354 = scmp.eq.s32.totalorder %s33, 1
    %p355 = por %p353, %p354
    %p357 = scmp.ne.s32.totalorder %s342, %s356
    %p358 = scmp.eq.s32.totalorder %s33, 0
    %p359 = por %p357, %p358
    %s361 = sadd.s32 %s360, 1
    %p364 = scmp.eq.s32.totalorder %s27, 1
    %p365 = scmp.ne.s32.totalorder %s360, %s362
    %p366 = scmp.eq.s32.totalorder %s27, 0
    %p367 = por %p365, %p366
    %p368 = scmp.ne.s32.totalorder %s360, %s362
    %p369 = scmp.eq.s32.totalorder %s32, 1
    %p370 = por %p368, %p369
    %p371 = scmp.ne.s32.totalorder %s362, %s363
    %p372 = scmp.eq.s32.totalorder %s32, 0
    %p373 = por %p371, %p372
    %p374 = scmp.ne.s32.totalorder %s362, %s363
    %p375 = scmp.eq.s32.totalorder %s33, 1
    %p376 = por %p374, %p375
    %p378 = scmp.ne.s32.totalorder %s363, %s377
    %p379 = scmp.eq.s32.totalorder %s33, 0
    %p380 = por %p378, %p379
    %s382 = sadd.s32 %s381, 1
    %p385 = scmp.eq.s32.totalorder %s27, 1
    %p386 = scmp.ne.s32.totalorder %s381, %s383
    %p387 = scmp.eq.s32.totalorder %s27, 0
    %p388 = por %p386, %p387
    %p389 = scmp.ne.s32.totalorder %s381, %s383
    %p390 = scmp.eq.s32.totalorder %s32, 1
    %p391 = por %p389, %p390
    %p392 = scmp.ne.s32.totalorder %s383, %s384
    %p393 = scmp.eq.s32.totalorder %s32, 0
    %p394 = por %p392, %p393
    %p395 = scmp.ne.s32.totalorder %s383, %s384
    %p396 = scmp.eq.s32.totalorder %s33, 1
    %p397 = por %p395, %p396
    %p399 = scmp.ne.s32.totalorder %s384, %s398
    %p400 = scmp.eq.s32.totalorder %s33, 0
    %p401 = por %p399, %p400
    %s403 = sadd.s32 %s402, 1
    %p406 = scmp.eq.s32.totalorder %s27, 1
    %p407 = scmp.ne.s32.totalorder %s402, %s404
    %p408 = scmp.eq.s32.totalorder %s27, 0
    %p409 = por %p407, %p408
    %p410 = scmp.ne.s32.totalorder %s402, %s404
    %p411 = scmp.eq.s32.totalorder %s32, 1
    %p412 = por %p410, %p411
    %p413 = scmp.ne.s32.totalorder %s404, %s405
    %p414 = scmp.eq.s32.totalorder %s32, 0
    %p415 = por %p413, %p414
    %p416 = scmp.ne.s32.totalorder %s404, %s405
    %p417 = scmp.eq.s32.totalorder %s33, 1
    %p418 = por %p416, %p417
    %p420 = scmp.ne.s32.totalorder %s405, %s419
    %p421 = scmp.eq.s32.totalorder %s33, 0
    %p422 = por %p420, %p421
    %s424 = sadd.s32 %s423, 1
    %p427 = scmp.eq.s32.totalorder %s27, 1
    %p428 = scmp.ne.s32.totalorder %s423, %s425
    %p429 = scmp.eq.s32.totalorder %s27, 0
    %p430 = por %p428, %p429
    %p431 = scmp.ne.s32.totalorder %s423, %s425
    %p432 = scmp.eq.s32.totalorder %s32, 1
    %p433 = por %p431, %p432
    %p434 = scmp.ne.s32.totalorder %s425, %s426
    %p435 = scmp.eq.s32.totalorder %s32, 0
    %p436 = por %p434, %p435
    %p437 = scmp.ne.s32.totalorder %s425, %s426
    %p438 = scmp.eq.s32.totalorder %s33, 1
    %p439 = por %p437, %p438
    %p441 = scmp.ne.s32.totalorder %s426, %s440
    %p442 = scmp.eq.s32.totalorder %s33, 0
    %p443 = por %p441, %p442
    %s445 = sadd.s32 %s444, 1
    %p448 = scmp.eq.s32.totalorder %s27, 1
    %p449 = scmp.ne.s32.totalorder %s444, %s446
    %p450 = scmp.eq.s32.totalorder %s27, 0
    %p451 = por %p449, %p450
    %p452 = scmp.ne.s32.totalorder %s444, %s446
    %p453 = scmp.eq.s32.totalorder %s32, 1
    %p454 = por %p452, %p453
    %p455 = scmp.ne.s32.totalorder %s446, %s447
    %p456 = scmp.eq.s32.totalorder %s32, 0
    %p457 = por %p455, %p456
    %p458 = scmp.ne.s32.totalorder %s446, %s447
    %p459 = scmp.eq.s32.totalorder %s33, 1
    %p460 = por %p458, %p459
    %p462 = scmp.ne.s32.totalorder %s447, %s461
    %p463 = scmp.eq.s32.totalorder %s33, 0
    %p464 = por %p462, %p463
    %s466 = sadd.s32 %s465, 1
    %p469 = scmp.eq.s32.totalorder %s27, 1
    %p470 = scmp.ne.s32.totalorder %s465, %s467
    %p471 = scmp.eq.s32.totalorder %s27, 0
    %p472 = por %p470, %p471
    %p473 = scmp.ne.s32.totalorder %s465, %s467
    %p474 = scmp.eq.s32.totalorder %s32, 1
    %p475 = por %p473, %p474
    %p476 = scmp.ne.s32.totalorder %s467, %s468
    %p477 = scmp.eq.s32.totalorder %s32, 0
    %p478 = por %p476, %p477
    %p479 = scmp.ne.s32.totalorder %s467, %s468
    %p480 = scmp.eq.s32.totalorder %s33, 1
    %p481 = por %p479, %p480
    %p483 = scmp.ne.s32.totalorder %s468, %s482
    %p484 = scmp.eq.s32.totalorder %s33, 0
    %p485 = por %p483, %p484
    %s486 = ssub.s32 %s27, %s34
    %p487 = scmp.eq.s32.totalorder %s486, 0
    %s489 = sadd.s32 %s488, 1
    %s490 = scalar_select %p487, %s488, %s489
    %p493 = pneg %p487
    %p494 = scmp.eq.s32.totalorder %s27, 1
    %p495 = por %p493, %p494
    %p496 = scmp.ne.s32.totalorder %s488, %s491
    %p497 = scmp.eq.s32.totalorder %s27, 0
    %p498 = por %p496, %p497
    %p499 = scmp.ne.s32.totalorder %s488, %s491
    %p500 = scmp.eq.s32.totalorder %s32, 1
    %p501 = por %p499, %p500
    %p502 = scmp.ne.s32.totalorder %s491, %s492
    %p503 = scmp.eq.s32.totalorder %s32, 0
    %p504 = por %p502, %p503
    %p505 = scmp.ne.s32.totalorder %s491, %s492
    %p506 = scmp.eq.s32.totalorder %s33, 1
    %p507 = por %p505, %p506
    %p509 = scmp.ne.s32.totalorder %s492, %s508
    %p510 = scmp.eq.s32.totalorder %s33, 0
    %p511 = por %p509, %p510
    %p512 = scmp.le.s32.totalorder 1, %s27
    %p513 = scmp.lt.s32.totalorder %s27, 3
    %p514 = pnand %p512, %p513
    %p515 = pneg %p514
    // Predicated region
    $region9: #{pointcloud_encoder_forward.2} parent=5 // pred_check
      _
    $region10: #{pointcloud_encoder_forward.2} parent=5 // pred_check_branch
      %517 = sbr.rel (%p514) target = $region12
    $region11: #{pointcloud_encoder_forward.2} parent=5 // pred_region
      %s518 = ssub.s32 %s27, 1
      // Predicated region
      $region13: #{pointcloud_encoder_forward.2} parent=11 // pred_check
        %p519 = pneg %p100
      $region14: #{pointcloud_encoder_forward.2} parent=11 // pred_check_branch
        %521 = sbr.rel (%p519) target = $region16
      $region15: #{pointcloud_encoder_forward.2} parent=11 // pred_region
        _
      $region16: #{pointcloud_encoder_forward.2} parent=11 // pred_fallthru
        _
      // Predicated region
      $region17: #{pointcloud_encoder_forward.2} parent=11 // pred_check
        %p522 = pneg %p121
      $region18: #{pointcloud_encoder_forward.2} parent=11 // pred_check_branch
        %524 = sbr.rel (%p522) target = $region20
      $region19: #{pointcloud_encoder_forward.2} parent=11 // pred_region
        _
      $region20: #{pointcloud_encoder_forward.2} parent=11 // pred_fallthru
        _
      // Predicated region
      $region21: #{pointcloud_encoder_forward.2} parent=11 // pred_check
        %p525 = pneg %p142
      $region22: #{pointcloud_encoder_forward.2} parent=11 // pred_check_branch
        %527 = sbr.rel (%p525) target = $region24
      $region23: #{pointcloud_encoder_forward.2} parent=11 // pred_region
        _
      $region24: #{pointcloud_encoder_forward.2} parent=11 // pred_fallthru
        _
      // Predicated region
      $region25: #{pointcloud_encoder_forward.2} parent=11 // pred_check
        %p528 = pneg %p163
      $region26: #{pointcloud_encoder_forward.2} parent=11 // pred_check_branch
        %530 = sbr.rel (%p528) target = $region28
      $region27: #{pointcloud_encoder_forward.2} parent=11 // pred_region
        _
      $region28: #{pointcloud_encoder_forward.2} parent=11 // pred_fallthru
        _
      // Predicated region
      $region29: #{pointcloud_encoder_forward.2} parent=11 // pred_check
        %p531 = pneg %p184
      $region30: #{pointcloud_encoder_forward.2} parent=11 // pred_check_branch
        %533 = sbr.rel (%p531) target = $region32
      $region31: #{pointcloud_encoder_forward.2} parent=11 // pred_region
        _
      $region32: #{pointcloud_encoder_forward.2} parent=11 // pred_fallthru
        _
      // Predicated region
      $region33: #{pointcloud_encoder_forward.2} parent=11 // pred_check
        %p534 = pneg %p205
      $region34: #{pointcloud_encoder_forward.2} parent=11 // pred_check_branch
        %536 = sbr.rel (%p534) target = $region36
      $region35: #{pointcloud_encoder_forward.2} parent=11 // pred_region
        _
      $region36: #{pointcloud_encoder_forward.2} parent=11 // pred_fallthru
        _
      // Predicated region
      $region37: #{pointcloud_encoder_forward.2} parent=11 // pred_check
        %p537 = pneg %p226
      $region38: #{pointcloud_encoder_forward.2} parent=11 // pred_check_branch
        %539 = sbr.rel (%p537) target = $region40
      $region39: #{pointcloud_encoder_forward.2} parent=11 // pred_region
        _
      $region40: #{pointcloud_encoder_forward.2} parent=11 // pred_fallthru
        _
      // Predicated region
      $region41: #{pointcloud_encoder_forward.2} parent=11 // pred_check
        %p540 = pneg %p247
      $region42: #{pointcloud_encoder_forward.2} parent=11 // pred_check_branch
        %542 = sbr.rel (%p540) target = $region44
      $region43: #{pointcloud_encoder_forward.2} parent=11 // pred_region
        _
      $region44: #{pointcloud_encoder_forward.2} parent=11 // pred_fallthru
        _
      // Predicated region
      $region45: #{pointcloud_encoder_forward.2} parent=11 // pred_check
        %p543 = pneg %p268
      $region46: #{pointcloud_encoder_forward.2} parent=11 // pred_check_branch
        %545 = sbr.rel (%p543) target = $region48
      $region47: #{pointcloud_encoder_forward.2} parent=11 // pred_region
        _
      $region48: #{pointcloud_encoder_forward.2} parent=11 // pred_fallthru
        _
      // Predicated region
      $region49: #{pointcloud_encoder_forward.2} parent=11 // pred_check
        %p546 = pneg %p289
      $region50: #{pointcloud_encoder_forward.2} parent=11 // pred_check_branch
        %548 = sbr.rel (%p546) target = $region52
      $region51: #{pointcloud_encoder_forward.2} parent=11 // pred_region
        _
      $region52: #{pointcloud_encoder_forward.2} parent=11 // pred_fallthru
        _
      // Predicated region
      $region53: #{pointcloud_encoder_forward.2} parent=11 // pred_check
        %p549 = pneg %p310
      $region54: #{pointcloud_encoder_forward.2} parent=11 // pred_check_branch
        %551 = sbr.rel (%p549) target = $region56
      $region55: #{pointcloud_encoder_forward.2} parent=11 // pred_region
        _
      $region56: #{pointcloud_encoder_forward.2} parent=11 // pred_fallthru
        _
      // Predicated region
      $region57: #{pointcloud_encoder_forward.2} parent=11 // pred_check
        %p552 = pneg %p331
      $region58: #{pointcloud_encoder_forward.2} parent=11 // pred_check_branch
        %554 = sbr.rel (%p552) target = $region60
      $region59: #{pointcloud_encoder_forward.2} parent=11 // pred_region
        _
      $region60: #{pointcloud_encoder_forward.2} parent=11 // pred_fallthru
        _
      // Predicated region
      $region61: #{pointcloud_encoder_forward.2} parent=11 // pred_check
        %p555 = pneg %p352
      $region62: #{pointcloud_encoder_forward.2} parent=11 // pred_check_branch
        %557 = sbr.rel (%p555) target = $region64
      $region63: #{pointcloud_encoder_forward.2} parent=11 // pred_region
        _
      $region64: #{pointcloud_encoder_forward.2} parent=11 // pred_fallthru
        _
      // Predicated region
      $region65: #{pointcloud_encoder_forward.2} parent=11 // pred_check
        %p558 = pneg %p373
      $region66: #{pointcloud_encoder_forward.2} parent=11 // pred_check_branch
        %560 = sbr.rel (%p558) target = $region68
      $region67: #{pointcloud_encoder_forward.2} parent=11 // pred_region
        _
      $region68: #{pointcloud_encoder_forward.2} parent=11 // pred_fallthru
        _
      // Predicated region
      $region69: #{pointcloud_encoder_forward.2} parent=11 // pred_check
        %p561 = pneg %p394
      $region70: #{pointcloud_encoder_forward.2} parent=11 // pred_check_branch
        %563 = sbr.rel (%p561) target = $region72
      $region71: #{pointcloud_encoder_forward.2} parent=11 // pred_region
        _
      $region72: #{pointcloud_encoder_forward.2} parent=11 // pred_fallthru
        _
      // Predicated region
      $region73: #{pointcloud_encoder_forward.2} parent=11 // pred_check
        %p564 = pneg %p415
      $region74: #{pointcloud_encoder_forward.2} parent=11 // pred_check_branch
        %566 = sbr.rel (%p564) target = $region76
      $region75: #{pointcloud_encoder_forward.2} parent=11 // pred_region
        _
      $region76: #{pointcloud_encoder_forward.2} parent=11 // pred_fallthru
        _
      // Predicated region
      $region77: #{pointcloud_encoder_forward.2} parent=11 // pred_check
        %p567 = pneg %p436
      $region78: #{pointcloud_encoder_forward.2} parent=11 // pred_check_branch
        %569 = sbr.rel (%p567) target = $region80
      $region79: #{pointcloud_encoder_forward.2} parent=11 // pred_region
        _
      $region80: #{pointcloud_encoder_forward.2} parent=11 // pred_fallthru
        _
      // Predicated region
      $region81: #{pointcloud_encoder_forward.2} parent=11 // pred_check
        %p570 = pneg %p457
      $region82: #{pointcloud_encoder_forward.2} parent=11 // pred_check_branch
        %572 = sbr.rel (%p570) target = $region84
      $region83: #{pointcloud_encoder_forward.2} parent=11 // pred_region
        _
      $region84: #{pointcloud_encoder_forward.2} parent=11 // pred_fallthru
        _
      // Predicated region
      $region85: #{pointcloud_encoder_forward.2} parent=11 // pred_check
        %p573 = pneg %p478
      $region86: #{pointcloud_encoder_forward.2} parent=11 // pred_check_branch
        %575 = sbr.rel (%p573) target = $region88
      $region87: #{pointcloud_encoder_forward.2} parent=11 // pred_region
        _
      $region88: #{pointcloud_encoder_forward.2} parent=11 // pred_fallthru
        _
    $region12: #{pointcloud_encoder_forward.2} parent=5 // pred_fallthru
      _
    %p576 = scmp.lt.s32.totalorder %s27, 2
    // Predicated region
    $region89: #{pointcloud_encoder_forward.2} parent=5 // pred_check
      %p577 = pneg %p576
    $region90: #{pointcloud_encoder_forward.2} parent=5 // pred_check_branch
      %579 = sbr.rel (%p577) target = $region92
    $region91: #{pointcloud_encoder_forward.2} parent=5 // pred_region
      // Predicated region
      $region93: #{pointcloud_encoder_forward.2} parent=91 // pred_check
        %p580 = pneg %p47
      $region94: #{pointcloud_encoder_forward.2} parent=91 // pred_check_branch
        %582 = sbr.rel (%p580) target = $region96
      $region95: #{pointcloud_encoder_forward.2} parent=91 // pred_region
        %p583 = scmp.lt.s32.totalorder %s27, 1
        %s584 = scalar_select %p583, %s27, 1
        %s585 = smul.addr %s584, 16
        %s586 = smul.addr %s585, 8
        %s587 = scalar_lea.vmem %s0, %s586
      $region96: #{pointcloud_encoder_forward.2} parent=91 // pred_fallthru
        _
      // Predicated region
      $region97: #{pointcloud_encoder_forward.2} parent=91 // pred_check
        %p588 = pneg %p73
      $region98: #{pointcloud_encoder_forward.2} parent=91 // pred_check_branch
        %590 = sbr.rel (%p588) target = $region100
      $region99: #{pointcloud_encoder_forward.2} parent=91 // pred_region
        %p591 = scmp.lt.s32.totalorder %s27, 1
        %s592 = scalar_select %p591, %s27, 1
        %s593 = smul.addr %s592, 8
        %s594 = scalar_lea.vmem %s1, %s593
      $region100: #{pointcloud_encoder_forward.2} parent=91 // pred_fallthru
        _
    $region92: #{pointcloud_encoder_forward.2} parent=5 // pred_fallthru
      _
    %p595 = scmp.le.s32.totalorder 1, %s27
    %p596 = scmp.lt.s32.totalorder %s27, 3
    %p597 = pnand %p595, %p596
    %p598 = pneg %p597
    // Predicated region
    $region101: #{pointcloud_encoder_forward.2} parent=5 // pred_check
      _
    $region102: #{pointcloud_encoder_forward.2} parent=5 // pred_check_branch
      %600 = sbr.rel (%p597) target = $region104
    $region103: #{pointcloud_encoder_forward.2} parent=5 // pred_region
      %s601 = ssub.s32 %s27, 1
      %p602 = scmp.lt.s32.totalorder %s32, 1
      %s603 = scalar_select %p602, %s32, 1
      %s604 = smul.addr %s603, 16
      %s605 = smul.addr %s604, 8
      %s606 = scalar_lea.vmem %s0, %s605
      %p607 = pneg %p53
      %p608 = pneg %p50
      %p609 = scmp.lt.s32.totalorder %s32, 1
      %s610 = scalar_select %p609, %s32, 1
      %s611 = smul.addr %s610, 8
      %s612 = scalar_lea.vmem %s1, %s611
      %p613 = pneg %p79
      %p614 = pneg %p76
      %p615 = pneg %p100
      %p616 = pneg %p97
      %p617 = pneg %p121
      %p618 = pneg %p118
      %p619 = pneg %p142
      %p620 = pneg %p139
      %p621 = pneg %p163
      %p622 = pneg %p160
      %p623 = pneg %p184
      %p624 = pneg %p181
      %p625 = pneg %p205
      %p626 = pneg %p202
      %p627 = pneg %p226
      %p628 = pneg %p223
      %p629 = pneg %p247
      %p630 = pneg %p244
      %p631 = pneg %p268
      %p632 = pneg %p265
      %p633 = pneg %p289
      %p634 = pneg %p286
      %p635 = pneg %p310
      %p636 = pneg %p307
      %p637 = pneg %p331
      %p638 = pneg %p328
      %p639 = pneg %p352
      %p640 = pneg %p349
      %p641 = pneg %p373
      %p642 = pneg %p370
      %p643 = pneg %p394
      %p644 = pneg %p391
      %p645 = pneg %p415
      %p646 = pneg %p412
      %p647 = pneg %p436
      %p648 = pneg %p433
      %p649 = pneg %p457
      %p650 = pneg %p454
      %p651 = pneg %p478
      %p652 = pneg %p475
      %p653 = pneg %p504
      %p654 = pneg %p501
      %p655 = scmp.lt.s32.totalorder %s32, 1
      %s656 = scalar_select %p655, %s32, 1
      %s657 = smul.addr %s656, 8
      %s658 = scalar_lea.vmem %s21, %s657
      %p659 = scmp.lt.s32.totalorder %s32, 1
      %s660 = scalar_select %p659, %s32, 1
      %s661 = smul.addr %s660, 16
      %s662 = smul.addr %s661, 8
      %s663 = scalar_lea.vmem %s0, %s662
      %p664 = scmp.lt.s32.totalorder %s32, 1
      %s665 = scalar_select %p664, %s32, 1
      %s666 = smul.addr %s665, 8
      %s667 = scalar_lea.vmem %s1, %s666
      %p668 = scmp.lt.s32.totalorder %s32, 1
      %s669 = scalar_select %p668, %s32, 1
      %s670 = smul.addr %s669, 8
      %s671 = scalar_lea.vmem %s21, %s670
      %v673 = vld [vmem:[%s663] sm:$0xff]
      %v674 = vld [vmem:[%s663 + $0x8] sm:$0xff]
      %v675 = vld [vmem:[%s663 + $0x10] sm:$0xff]
      %v676 = vld [vmem:[%s663 + $0x18] sm:$0xff]
      %v677 = vld [vmem:[%s663 + $0x20] sm:$0xff]
      %v678 = vld [vmem:[%s663 + $0x28] sm:$0xff]
      %v679 = vld [vmem:[%s663 + $0x30] sm:$0xff]
      %v680 = vld [vmem:[%s663 + $0x38] sm:$0xff]
      %v681 = vld [vmem:[%s663 + $0x40] sm:$0xff]
      %v682 = vld [vmem:[%s663 + $0x48] sm:$0xff]
      %v683 = vld [vmem:[%s663 + $0x50] sm:$0xff]
      %v684 = vld [vmem:[%s663 + $0x58] sm:$0xff]
      %v685 = vld [vmem:[%s663 + $0x60] sm:$0xff]
      %v686 = vld [vmem:[%s663 + $0x68] sm:$0xff]
      %v687 = vld [vmem:[%s663 + $0x70] sm:$0xff]
      %v688 = vld [vmem:[%s663 + $0x78] sm:$0xff]
      %v689 = vpack.c.bf16 %v674, %v673
      %v690 = vpack.c.bf16 %v676, %v675
      %v691 = vpack.c.bf16 %v678, %v677
      %v692 = vpack.c.bf16 %v680, %v679
      %v693 = vpack.c.bf16 %v682, %v681
      %v694 = vpack.c.bf16 %v684, %v683
      %v695 = vpack.c.bf16 %v686, %v685
      %v696 = vpack.c.bf16 %v688, %v687
      %v697 = vld [vmem:[%s2] sm:$0x7]
      %v698 = vld [vmem:[%s3] sm:$0x1]
      %v700 = vlaneseq
      %v701 = vshrl.u32 %v700, 7
      %v702 = vsub.s32 0, %v701
      %v703 = vrot.slane %v698, %v702
      %vm705 = vcmask 48128
      %v707 = vsel %vm705, %v689, 0
      %v710 = vsel %vm705, %v690, 0
      %v713 = vsel %vm705, %v691, 0
      %v716 = vsel %vm705, %v692, 0
      %v719 = vsel %vm705, %v693, 0
      %v722 = vsel %vm705, %v694, 0
      %v725 = vsel %vm705, %v695, 0
      %v728 = vsel %vm705, %v696, 0
      %vm730 = vcmask 1042432
      %v732 = vsel %vm730, %v697, 0
      %734 = vmatprep.subr.bf16.mxu0 0
      %735 = vmatpush1.bf16.msra.mxu0 0
      %736 = vmatprep.subr.bf16.mxu0 0
      %737 = vmatpush1.bf16.msra.mxu0 0
      %738 = vmatprep.subr.bf16.mxu0 0
      %739 = vmatpush1.bf16.msra.mxu0 0
      %740 = vmatprep.subr.bf16.mxu0 0
      %741 = vmatpush1.bf16.msra.mxu0 0
      %742 = vmatprep.subr.bf16.mxu0 0
      %743 = vmatpush1.bf16.msra.mxu0 0
      %744 = vmatprep.subr.bf16.mxu0 0
      %745 = vmatpush1.bf16.msra.mxu0 0
      %746 = vmatprep.subr.bf16.mxu0 0
      %747 = vmatpush1.bf16.msra.mxu0 0
      %748 = vmatprep.subr.bf16.mxu0 0
      %749 = vmatpush1.bf16.msra.mxu0 %v732
      %750 = vmatprep.subr.bf16.mxu0 0
      %751 = vmatpush2.bf16.msra.mxu0 0
      %752 = vmatprep.subr.bf16.mxu0 0
      %753 = vmatpush2.bf16.msra.mxu0 0
      %754 = vmatprep.subr.bf16.mxu0 0
      %755 = vmatpush2.bf16.msra.mxu0 0
      %756 = vmatprep.subr.bf16.mxu0 0
      %757 = vmatpush2.bf16.msra.mxu0 0
      %758 = vmatprep.subr.bf16.mxu0 0
      %759 = vmatpush2.bf16.msra.mxu0 0
      %760 = vmatprep.subr.bf16.mxu0 0
      %761 = vmatpush2.bf16.msra.mxu0 0
      %762 = vmatprep.subr.bf16.mxu0 0
      %763 = vmatpush2.bf16.msra.mxu0 0
      %764 = vmatprep.subr.bf16.mxu0 0
      %765 = vmatpush2.bf16.msra.mxu0 0
      %766 = vmatprep.mubr.bf16.mxu0 0
      %767 = vmatmul.mubr.bf16.gmra.mxu0 %v707
      %v768 = vpop.f32.mrf.mxu0
      %v769 = vadd.f32 %v703, %v768
      %v770 = vpop.f32.mrf.mxu0
      %v771 = vpop.f32.mrf.mxu0
      %v772 = vadd.f32 %v703, %v771
      %v773 = vpop.f32.mrf.mxu0
      %774 = vmatprep.mubr.bf16.mxu0 0
      %775 = vmatmul.mubr.bf16.gmra.mxu0 %v710
      %v776 = vpop.f32.mrf.mxu0
      %v777 = vadd.f32 %v703, %v776
      %v778 = vpop.f32.mrf.mxu0
      %v779 = vpop.f32.mrf.mxu0
      %v780 = vadd.f32 %v703, %v779
      %v781 = vpop.f32.mrf.mxu0
      %782 = vmatprep.mubr.bf16.mxu0 0
      %783 = vmatmul.mubr.bf16.gmra.mxu0 %v713
      %v784 = vpop.f32.mrf.mxu0
      %v785 = vadd.f32 %v703, %v784
      %v786 = vpop.f32.mrf.mxu0
      %v787 = vpop.f32.mrf.mxu0
      %v788 = vadd.f32 %v703, %v787
      %v789 = vpop.f32.mrf.mxu0
      %790 = vmatprep.mubr.bf16.mxu0 0
      %791 = vmatmul.mubr.bf16.gmra.mxu0 %v716
      %v792 = vpop.f32.mrf.mxu0
      %v793 = vadd.f32 %v703, %v792
      %v794 = vpop.f32.mrf.mxu0
      %v795 = vpop.f32.mrf.mxu0
      %v796 = vadd.f32 %v703, %v795
      %v797 = vpop.f32.mrf.mxu0
      %798 = vmatprep.mubr.bf16.mxu0 0
      %799 = vmatmul.mubr.bf16.gmra.mxu0 %v719
      %v800 = vpop.f32.mrf.mxu0
      %v801 = vadd.f32 %v703, %v800
      %v802 = vpop.f32.mrf.mxu0
      %v803 = vpop.f32.mrf.mxu0
      %v804 = vadd.f32 %v703, %v803
      %v805 = vpop.f32.mrf.mxu0
      %806 = vmatprep.mubr.bf16.mxu0 0
      %807 = vmatmul.mubr.bf16.gmra.mxu0 %v722
      %v808 = vpop.f32.mrf.mxu0
      %v809 = vadd.f32 %v703, %v808
      %v810 = vpop.f32.mrf.mxu0
      %v811 = vpop.f32.mrf.mxu0
      %v812 = vadd.f32 %v703, %v811
      %v813 = vpop.f32.mrf.mxu0
      %814 = vmatprep.mubr.bf16.mxu0 0
      %815 = vmatmul.mubr.bf16.gmra.mxu0 %v725
      %v816 = vpop.f32.mrf.mxu0
      %v817 = vadd.f32 %v703, %v816
      %v818 = vpop.f32.mrf.mxu0
      %v819 = vpop.f32.mrf.mxu0
      %v820 = vadd.f32 %v703, %v819
      %v821 = vpop.f32.mrf.mxu0
      %822 = vmatprep.mubr.bf16.mxu0 0
      %823 = vmatmul.mubr.bf16.gmra.mxu0 %v728
      %v824 = vpop.f32.mrf.mxu0
      %v825 = vadd.f32 %v703, %v824
      %v826 = vpop.f32.mrf.mxu0
      %v827 = vpop.f32.mrf.mxu0
      %v828 = vadd.f32 %v703, %v827
      %v829 = vpop.f32.mrf.mxu0
      %830 = vdwg.mxu0
      %v831 = vld [vmem:[%s4] sm:$0x1]
      %v833 = vlaneseq
      %v834 = vshrl.u32 %v833, 7
      %v835 = vsub.s32 0, %v834
      %v836 = vrot.slane %v831, %v835
      %v838 = vmul.f32 %v769, %v836
      %v839 = vmul.f32 %v772, %v836
      %v840 = vmul.f32 %v777, %v836
      %v841 = vmul.f32 %v780, %v836
      %v842 = vmul.f32 %v785, %v836
      %v843 = vmul.f32 %v788, %v836
      %v844 = vmul.f32 %v793, %v836
      %v845 = vmul.f32 %v796, %v836
      %v846 = vmul.f32 %v801, %v836
      %v847 = vmul.f32 %v804, %v836
      %v848 = vmul.f32 %v809, %v836
      %v849 = vmul.f32 %v812, %v836
      %v850 = vmul.f32 %v817, %v836
      %v851 = vmul.f32 %v820, %v836
      %v852 = vmul.f32 %v825, %v836
      %v853 = vmul.f32 %v828, %v836
      %v854 = vld [vmem:[%s5] sm:$0x1]
      %v856 = vlaneseq
      %v857 = vshrl.u32 %v856, 7
      %v858 = vsub.s32 0, %v857
      %v859 = vrot.slane %v854, %v858
      %v861 = vadd.f32 %v838, %v859
      %v862 = vadd.f32 %v839, %v859
      %v863 = vadd.f32 %v840, %v859
      %v864 = vadd.f32 %v841, %v859
      %v865 = vadd.f32 %v842, %v859
      %v866 = vadd.f32 %v843, %v859
      %v867 = vadd.f32 %v844, %v859
      %v868 = vadd.f32 %v845, %v859
      %v869 = vadd.f32 %v846, %v859
      %v870 = vadd.f32 %v847, %v859
      %v871 = vadd.f32 %v848, %v859
      %v872 = vadd.f32 %v849, %v859
      %v873 = vadd.f32 %v850, %v859
      %v874 = vadd.f32 %v851, %v859
      %v875 = vadd.f32 %v852, %v859
      %v876 = vadd.f32 %v853, %v859
      %v877 = vmax.f32 %v861, 0.0
      %v878 = vmax.f32 %v862, 0.0
      %v879 = vmax.f32 %v863, 0.0
      %v880 = vmax.f32 %v864, 0.0
      %v881 = vmax.f32 %v865, 0.0
      %v882 = vmax.f32 %v866, 0.0
      %v883 = vmax.f32 %v867, 0.0
      %v884 = vmax.f32 %v868, 0.0
      %v885 = vmax.f32 %v869, 0.0
      %v886 = vmax.f32 %v870, 0.0
      %v887 = vmax.f32 %v871, 0.0
      %v888 = vmax.f32 %v872, 0.0
      %v889 = vmax.f32 %v873, 0.0
      %v890 = vmax.f32 %v874, 0.0
      %v891 = vmax.f32 %v875, 0.0
      %v892 = vmax.f32 %v876, 0.0
      %v893 = vpack.c.bf16 %v878, %v877
      %v894 = vpack.c.bf16 %v880, %v879
      %v895 = vpack.c.bf16 %v882, %v881
      %v896 = vpack.c.bf16 %v884, %v883
      %v897 = vpack.c.bf16 %v886, %v885
      %v898 = vpack.c.bf16 %v888, %v887
      %v899 = vpack.c.bf16 %v890, %v889
      %v900 = vpack.c.bf16 %v892, %v891
      %v901 = vld [vmem:[%s6] sm:$0xff]
      %v902 = vld [vmem:[%s6 + $0x8] sm:$0xff]
      %v903 = vld [vmem:[%s6 + $0x10] sm:$0xff]
      %v904 = vld [vmem:[%s6 + $0x18] sm:$0xff]
      %v905 = vld [vmem:[%s6 + $0x20] sm:$0xff]
      %v906 = vld [vmem:[%s6 + $0x28] sm:$0xff]
      %v907 = vld [vmem:[%s6 + $0x30] sm:$0xff]
      %v908 = vld [vmem:[%s6 + $0x38] sm:$0xff]
      %v909 = vld [vmem:[%s6 + $0x40] sm:$0xff]
      %v910 = vld [vmem:[%s6 + $0x48] sm:$0xff]
      %v911 = vld [vmem:[%s6 + $0x50] sm:$0xff]
      %v912 = vld [vmem:[%s6 + $0x58] sm:$0xff]
      %v913 = vld [vmem:[%s6 + $0x60] sm:$0xff]
      %v914 = vld [vmem:[%s6 + $0x68] sm:$0xff]
      %v915 = vld [vmem:[%s6 + $0x70] sm:$0xff]
      %v916 = vld [vmem:[%s6 + $0x78] sm:$0xff]
      %v917 = vld [vmem:[%s7] sm:$0x3]
      %v919 = vlaneseq
      %v920 = vshrl.u32 %v919, 7
      %v921 = vsub.s32 0, %v920
      %v922 = vrot.slane %v917, %v921
      %v923 = vlaneseq
      %v924 = vshrl.u32 %v923, 7
      %v925 = vsub.s32 1, %v924
      %v926 = vrot.slane %v917, %v925
      %v945 = vunpack.c.l.b16 %v901
      %v946 = vunpack.c.h.b16 %v901
      %v947 = vunpack.c.l.b16 %v902
      %v948 = vunpack.c.h.b16 %v902
      %v949 = vunpack.c.l.b16 %v903
      %v950 = vunpack.c.h.b16 %v903
      %v951 = vunpack.c.l.b16 %v904
      %v952 = vunpack.c.h.b16 %v904
      %v953 = vunpack.c.l.b16 %v905
      %v954 = vunpack.c.h.b16 %v905
      %v955 = vunpack.c.l.b16 %v906
      %v956 = vunpack.c.h.b16 %v906
      %v957 = vunpack.c.l.b16 %v907
      %v958 = vunpack.c.h.b16 %v907
      %v959 = vunpack.c.l.b16 %v908
      %v960 = vunpack.c.h.b16 %v908
      %v961 = vunpack.c.l.b16 %v909
      %v962 = vunpack.c.h.b16 %v909
      %v963 = vunpack.c.l.b16 %v910
      %v964 = vunpack.c.h.b16 %v910
      %v965 = vunpack.c.l.b16 %v911
      %v966 = vunpack.c.h.b16 %v911
      %v967 = vunpack.c.l.b16 %v912
      %v968 = vunpack.c.h.b16 %v912
      %v969 = vunpack.c.l.b16 %v913
      %v970 = vunpack.c.h.b16 %v913
      %v971 = vunpack.c.l.b16 %v914
      %v972 = vunpack.c.h.b16 %v914
      %v973 = vunpack.c.l.b16 %v915
      %v974 = vunpack.c.h.b16 %v915
      %v975 = vunpack.c.l.b16 %v916
      %v976 = vunpack.c.h.b16 %v916
      %v977 = vpack.c.b16 %v947, %v945
      %v978 = vpack.c.b16 %v948, %v946
      %v979 = vpack.c.b16 %v951, %v949
      %v980 = vpack.c.b16 %v952, %v950
      %v981 = vpack.c.b16 %v955, %v953
      %v982 = vpack.c.b16 %v956, %v954
      %v983 = vpack.c.b16 %v959, %v957
      %v984 = vpack.c.b16 %v960, %v958
      %v985 = vpack.c.b16 %v963, %v961
      %v986 = vpack.c.b16 %v964, %v962
      %v987 = vpack.c.b16 %v967, %v965
      %v988 = vpack.c.b16 %v968, %v966
      %v989 = vpack.c.b16 %v971, %v969
      %v990 = vpack.c.b16 %v972, %v970
      %v991 = vpack.c.b16 %v975, %v973
      %v992 = vpack.c.b16 %v976, %v974
      %1009 = vmatprep.subr.bf16.mxu0 %v992
      %1010 = vmatpush1.bf16.msra.mxu0 %v991
      %1011 = vmatprep.subr.bf16.mxu0 %v990
      %1012 = vmatpush1.bf16.msra.mxu0 %v989
      %1013 = vmatprep.subr.bf16.mxu0 %v988
      %1014 = vmatpush1.bf16.msra.mxu0 %v987
      %1015 = vmatprep.subr.bf16.mxu0 %v986
      %1016 = vmatpush1.bf16.msra.mxu0 %v985
      %1017 = vmatprep.subr.bf16.mxu0 %v984
      %1018 = vmatpush1.bf16.msra.mxu0 %v983
      %1019 = vmatprep.subr.bf16.mxu0 %v982
      %1020 = vmatpush1.bf16.msra.mxu0 %v981
      %1021 = vmatprep.subr.bf16.mxu0 %v980
      %1022 = vmatpush1.bf16.msra.mxu0 %v979
      %1023 = vmatprep.subr.bf16.mxu0 %v978
      %1024 = vmatpush1.bf16.msra.mxu0 %v977
      %1025 = vmatprep.subr.bf16.mxu0 0
      %1026 = vmatpush2.bf16.msra.mxu0 0
      %1027 = vmatprep.subr.bf16.mxu0 0
      %1028 = vmatpush2.bf16.msra.mxu0 0
      %1029 = vmatprep.subr.bf16.mxu0 0
      %1030 = vmatpush2.bf16.msra.mxu0 0
      %1031 = vmatprep.subr.bf16.mxu0 0
      %1032 = vmatpush2.bf16.msra.mxu0 0
      %1033 = vmatprep.subr.bf16.mxu0 0
      %1034 = vmatpush2.bf16.msra.mxu0 0
      %1035 = vmatprep.subr.bf16.mxu0 0
      %1036 = vmatpush2.bf16.msra.mxu0 0
      %1037 = vmatprep.subr.bf16.mxu0 0
      %1038 = vmatpush2.bf16.msra.mxu0 0
      %1039 = vmatprep.subr.bf16.mxu0 0
      %1040 = vmatpush2.bf16.msra.mxu0 0
      %1041 = vmatprep.mubr.bf16.mxu0 0
      %1042 = vmatmul.mubr.bf16.gmra.mxu0 %v893
      %v1043 = vpop.f32.mrf.mxu0
      %v1044 = vadd.f32 %v922, %v1043
      %v1045 = vpop.f32.mrf.mxu0
      %v1046 = vadd.f32 %v926, %v1045
      %v1047 = vpop.f32.mrf.mxu0
      %v1048 = vadd.f32 %v922, %v1047
      %v1049 = vpop.f32.mrf.mxu0
      %v1050 = vadd.f32 %v926, %v1049
      %1051 = vmatprep.mubr.bf16.mxu0 0
      %1052 = vmatmul.mubr.bf16.gmra.mxu0 %v894
      %v1053 = vpop.f32.mrf.mxu0
      %v1054 = vadd.f32 %v922, %v1053
      %v1055 = vpop.f32.mrf.mxu0
      %v1056 = vadd.f32 %v926, %v1055
      %v1057 = vpop.f32.mrf.mxu0
      %v1058 = vadd.f32 %v922, %v1057
      %v1059 = vpop.f32.mrf.mxu0
      %v1060 = vadd.f32 %v926, %v1059
      %1061 = vmatprep.mubr.bf16.mxu0 0
      %1062 = vmatmul.mubr.bf16.gmra.mxu0 %v895
      %v1063 = vpop.f32.mrf.mxu0
      %v1064 = vadd.f32 %v922, %v1063
      %v1065 = vpop.f32.mrf.mxu0
      %v1066 = vadd.f32 %v926, %v1065
      %v1067 = vpop.f32.mrf.mxu0
      %v1068 = vadd.f32 %v922, %v1067
      %v1069 = vpop.f32.mrf.mxu0
      %v1070 = vadd.f32 %v926, %v1069
      %1071 = vmatprep.mubr.bf16.mxu0 0
      %1072 = vmatmul.mubr.bf16.gmra.mxu0 %v896
      %v1073 = vpop.f32.mrf.mxu0
      %v1074 = vadd.f32 %v922, %v1073
      %v1075 = vpop.f32.mrf.mxu0
      %v1076 = vadd.f32 %v926, %v1075
      %v1077 = vpop.f32.mrf.mxu0
      %v1078 = vadd.f32 %v922, %v1077
      %v1079 = vpop.f32.mrf.mxu0
      %v1080 = vadd.f32 %v926, %v1079
      %1081 = vmatprep.mubr.bf16.mxu0 0
      %1082 = vmatmul.mubr.bf16.gmra.mxu0 %v897
      %v1083 = vpop.f32.mrf.mxu0
      %v1084 = vadd.f32 %v922, %v1083
      %v1085 = vpop.f32.mrf.mxu0
      %v1086 = vadd.f32 %v926, %v1085
      %v1087 = vpop.f32.mrf.mxu0
      %v1088 = vadd.f32 %v922, %v1087
      %v1089 = vpop.f32.mrf.mxu0
      %v1090 = vadd.f32 %v926, %v1089
      %1091 = vmatprep.mubr.bf16.mxu0 0
      %1092 = vmatmul.mubr.bf16.gmra.mxu0 %v898
      %v1093 = vpop.f32.mrf.mxu0
      %v1094 = vadd.f32 %v922, %v1093
      %v1095 = vpop.f32.mrf.mxu0
      %v1096 = vadd.f32 %v926, %v1095
      %v1097 = vpop.f32.mrf.mxu0
      %v1098 = vadd.f32 %v922, %v1097
      %v1099 = vpop.f32.mrf.mxu0
      %v1100 = vadd.f32 %v926, %v1099
      %1101 = vmatprep.mubr.bf16.mxu0 0
      %1102 = vmatmul.mubr.bf16.gmra.mxu0 %v899
      %v1103 = vpop.f32.mrf.mxu0
      %v1104 = vadd.f32 %v922, %v1103
      %v1105 = vpop.f32.mrf.mxu0
      %v1106 = vadd.f32 %v926, %v1105
      %v1107 = vpop.f32.mrf.mxu0
      %v1108 = vadd.f32 %v922, %v1107
      %v1109 = vpop.f32.mrf.mxu0
      %v1110 = vadd.f32 %v926, %v1109
      %1111 = vmatprep.mubr.bf16.mxu0 0
      %1112 = vmatmul.mubr.bf16.gmra.mxu0 %v900
      %v1113 = vpop.f32.mrf.mxu0
      %v1114 = vadd.f32 %v922, %v1113
      %v1115 = vpop.f32.mrf.mxu0
      %v1116 = vadd.f32 %v926, %v1115
      %v1117 = vpop.f32.mrf.mxu0
      %v1118 = vadd.f32 %v922, %v1117
      %v1119 = vpop.f32.mrf.mxu0
      %v1120 = vadd.f32 %v926, %v1119
      %1121 = vdwg.mxu0
      %v1122 = vmax.f32 %v1044, %v1048
      %v1123 = vrot.slane %v1122, 4
      %v1124 = vmax.f32 %v1122, %v1123
      %v1125 = vrot.slane %v1124, 2
      %v1126 = vmax.f32 %v1124, %v1125
      %v1127 = vrot.slane %v1126, 1
      %v1128 = vmax.f32 %v1126, %v1127
      %v1129 = vmax.f32 %v1046, %v1050
      %v1130 = vrot.slane %v1129, 4
      %v1131 = vmax.f32 %v1129, %v1130
      %v1132 = vrot.slane %v1131, 2
      %v1133 = vmax.f32 %v1131, %v1132
      %v1134 = vrot.slane %v1133, 1
      %v1135 = vmax.f32 %v1133, %v1134
      %v1136 = vmax.f32 %v1054, %v1058
      %v1137 = vrot.slane %v1136, 4
      %v1138 = vmax.f32 %v1136, %v1137
      %v1139 = vrot.slane %v1138, 2
      %v1140 = vmax.f32 %v1138, %v1139
      %v1141 = vrot.slane %v1140, 1
      %v1142 = vmax.f32 %v1140, %v1141
      %v1143 = vmax.f32 %v1056, %v1060
      %v1144 = vrot.slane %v1143, 4
      %v1145 = vmax.f32 %v1143, %v1144
      %v1146 = vrot.slane %v1145, 2
      %v1147 = vmax.f32 %v1145, %v1146
      %v1148 = vrot.slane %v1147, 1
      %v1149 = vmax.f32 %v1147, %v1148
      %v1150 = vmax.f32 %v1064, %v1068
      %v1151 = vrot.slane %v1150, 4
      %v1152 = vmax.f32 %v1150, %v1151
      %v1153 = vrot.slane %v1152, 2
      %v1154 = vmax.f32 %v1152, %v1153
      %v1155 = vrot.slane %v1154, 1
      %v1156 = vmax.f32 %v1154, %v1155
      %v1157 = vmax.f32 %v1066, %v1070
      %v1158 = vrot.slane %v1157, 4
      %v1159 = vmax.f32 %v1157, %v1158
      %v1160 = vrot.slane %v1159, 2
      %v1161 = vmax.f32 %v1159, %v1160
      %v1162 = vrot.slane %v1161, 1
      %v1163 = vmax.f32 %v1161, %v1162
      %v1164 = vmax.f32 %v1074, %v1078
      %v1165 = vrot.slane %v1164, 4
      %v1166 = vmax.f32 %v1164, %v1165
      %v1167 = vrot.slane %v1166, 2
      %v1168 = vmax.f32 %v1166, %v1167
      %v1169 = vrot.slane %v1168, 1
      %v1170 = vmax.f32 %v1168, %v1169
      %v1171 = vmax.f32 %v1076, %v1080
      %v1172 = vrot.slane %v1171, 4
      %v1173 = vmax.f32 %v1171, %v1172
      %v1174 = vrot.slane %v1173, 2
      %v1175 = vmax.f32 %v1173, %v1174
      %v1176 = vrot.slane %v1175, 1
      %v1177 = vmax.f32 %v1175, %v1176
      %v1178 = vmax.f32 %v1084, %v1088
      %v1179 = vrot.slane %v1178, 4
      %v1180 = vmax.f32 %v1178, %v1179
      %v1181 = vrot.slane %v1180, 2
      %v1182 = vmax.f32 %v1180, %v1181
      %v1183 = vrot.slane %v1182, 1
      %v1184 = vmax.f32 %v1182, %v1183
      %v1185 = vmax.f32 %v1086, %v1090
      %v1186 = vrot.slane %v1185, 4
      %v1187 = vmax.f32 %v1185, %v1186
      %v1188 = vrot.slane %v1187, 2
      %v1189 = vmax.f32 %v1187, %v1188
      %v1190 = vrot.slane %v1189, 1
      %v1191 = vmax.f32 %v1189, %v1190
      %v1192 = vmax.f32 %v1094, %v1098
      %v1193 = vrot.slane %v1192, 4
      %v1194 = vmax.f32 %v1192, %v1193
      %v1195 = vrot.slane %v1194, 2
      %v1196 = vmax.f32 %v1194, %v1195
      %v1197 = vrot.slane %v1196, 1
      %v1198 = vmax.f32 %v1196, %v1197
      %v1199 = vmax.f32 %v1096, %v1100
      %v1200 = vrot.slane %v1199, 4
      %v1201 = vmax.f32 %v1199, %v1200
      %v1202 = vrot.slane %v1201, 2
      %v1203 = vmax.f32 %v1201, %v1202
      %v1204 = vrot.slane %v1203, 1
      %v1205 = vmax.f32 %v1203, %v1204
      %v1206 = vmax.f32 %v1104, %v1108
      %v1207 = vrot.slane %v1206, 4
      %v1208 = vmax.f32 %v1206, %v1207
      %v1209 = vrot.slane %v1208, 2
      %v1210 = vmax.f32 %v1208, %v1209
      %v1211 = vrot.slane %v1210, 1
      %v1212 = vmax.f32 %v1210, %v1211
      %v1213 = vmax.f32 %v1106, %v1110
      %v1214 = vrot.slane %v1213, 4
      %v1215 = vmax.f32 %v1213, %v1214
      %v1216 = vrot.slane %v1215, 2
      %v1217 = vmax.f32 %v1215, %v1216
      %v1218 = vrot.slane %v1217, 1
      %v1219 = vmax.f32 %v1217, %v1218
      %v1220 = vmax.f32 %v1114, %v1118
      %v1221 = vrot.slane %v1220, 4
      %v1222 = vmax.f32 %v1220, %v1221
      %v1223 = vrot.slane %v1222, 2
      %v1224 = vmax.f32 %v1222, %v1223
      %v1225 = vrot.slane %v1224, 1
      %v1226 = vmax.f32 %v1224, %v1225
      %v1227 = vmax.f32 %v1116, %v1120
      %v1228 = vrot.slane %v1227, 4
      %v1229 = vmax.f32 %v1227, %v1228
      %v1230 = vrot.slane %v1229, 2
      %v1231 = vmax.f32 %v1229, %v1230
      %v1232 = vrot.slane %v1231, 1
      %v1233 = vmax.f32 %v1231, %v1232
      %v1234 = vpack.c.bf16 %v1128, %v1128
      %v1235 = vpack.c.bf16 %v1135, %v1135
      %v1236 = vpack.c.bf16 %v1142, %v1142
      %v1237 = vpack.c.bf16 %v1149, %v1149
      %v1238 = vpack.c.bf16 %v1156, %v1156
      %v1239 = vpack.c.bf16 %v1163, %v1163
      %v1240 = vpack.c.bf16 %v1170, %v1170
      %v1241 = vpack.c.bf16 %v1177, %v1177
      %v1242 = vpack.c.bf16 %v1184, %v1184
      %v1243 = vpack.c.bf16 %v1191, %v1191
      %v1244 = vpack.c.bf16 %v1198, %v1198
      %v1245 = vpack.c.bf16 %v1205, %v1205
      %v1246 = vpack.c.bf16 %v1212, %v1212
      %v1247 = vpack.c.bf16 %v1219, %v1219
      %v1248 = vpack.c.bf16 %v1226, %v1226
      %v1249 = vpack.c.bf16 %v1233, %v1233
      %v1250 = vld [vmem:[%s8] sm:$0xff]
      %v1251 = vld [vmem:[%s8 + $0x8] sm:$0xff]
      %v1252 = vld [vmem:[%s8 + $0x10] sm:$0xff]
      %v1253 = vld [vmem:[%s8 + $0x18] sm:$0xff]
      %v1254 = vld [vmem:[%s8 + $0x20] sm:$0xff]
      %v1255 = vld [vmem:[%s8 + $0x28] sm:$0xff]
      %v1256 = vld [vmem:[%s8 + $0x30] sm:$0xff]
      %v1257 = vld [vmem:[%s8 + $0x38] sm:$0xff]
      %v1258 = vld [vmem:[%s8 + $0x40] sm:$0xff]
      %v1259 = vld [vmem:[%s8 + $0x48] sm:$0xff]
      %v1260 = vld [vmem:[%s8 + $0x50] sm:$0xff]
      %v1261 = vld [vmem:[%s8 + $0x58] sm:$0xff]
      %v1262 = vld [vmem:[%s8 + $0x60] sm:$0xff]
      %v1263 = vld [vmem:[%s8 + $0x68] sm:$0xff]
      %v1264 = vld [vmem:[%s8 + $0x70] sm:$0xff]
      %v1265 = vld [vmem:[%s8 + $0x78] sm:$0xff]
      %v1266 = vld [vmem:[%s8 + $0x80] sm:$0xff]
      %v1267 = vld [vmem:[%s8 + $0x88] sm:$0xff]
      %v1268 = vld [vmem:[%s8 + $0x90] sm:$0xff]
      %v1269 = vld [vmem:[%s8 + $0x98] sm:$0xff]
      %v1270 = vld [vmem:[%s8 + $0xa0] sm:$0xff]
      %v1271 = vld [vmem:[%s8 + $0xa8] sm:$0xff]
      %v1272 = vld [vmem:[%s8 + $0xb0] sm:$0xff]
      %v1273 = vld [vmem:[%s8 + $0xb8] sm:$0xff]
      %v1274 = vld [vmem:[%s8 + $0xc0] sm:$0xff]
      %v1275 = vld [vmem:[%s8 + $0xc8] sm:$0xff]
      %v1276 = vld [vmem:[%s8 + $0xd0] sm:$0xff]
      %v1277 = vld [vmem:[%s8 + $0xd8] sm:$0xff]
      %v1278 = vld [vmem:[%s8 + $0xe0] sm:$0xff]
      %v1279 = vld [vmem:[%s8 + $0xe8] sm:$0xff]
      %v1280 = vld [vmem:[%s8 + $0xf0] sm:$0xff]
      %v1281 = vld [vmem:[%s8 + $0xf8] sm:$0xff]
      %v1282 = vld [vmem:[%s8 + $0x100] sm:$0xff]
      %v1283 = vld [vmem:[%s8 + $0x108] sm:$0xff]
      %v1284 = vld [vmem:[%s8 + $0x110] sm:$0xff]
      %v1285 = vld [vmem:[%s8 + $0x118] sm:$0xff]
      %v1286 = vld [vmem:[%s8 + $0x120] sm:$0xff]
      %v1287 = vld [vmem:[%s8 + $0x128] sm:$0xff]
      %v1288 = vld [vmem:[%s8 + $0x130] sm:$0xff]
      %v1289 = vld [vmem:[%s8 + $0x138] sm:$0xff]
      %v1290 = vld [vmem:[%s8 + $0x140] sm:$0xff]
      %v1291 = vld [vmem:[%s8 + $0x148] sm:$0xff]
      %v1292 = vld [vmem:[%s8 + $0x150] sm:$0xff]
      %v1293 = vld [vmem:[%s8 + $0x158] sm:$0xff]
      %v1294 = vld [vmem:[%s8 + $0x160] sm:$0xff]
      %v1295 = vld [vmem:[%s8 + $0x168] sm:$0xff]
      %v1296 = vld [vmem:[%s8 + $0x170] sm:$0xff]
      %v1297 = vld [vmem:[%s8 + $0x178] sm:$0xff]
      %v1298 = vld [vmem:[%s8 + $0x180] sm:$0xff]
      %v1299 = vld [vmem:[%s8 + $0x188] sm:$0xff]
      %v1300 = vld [vmem:[%s8 + $0x190] sm:$0xff]
      %v1301 = vld [vmem:[%s8 + $0x198] sm:$0xff]
      %v1302 = vld [vmem:[%s8 + $0x1a0] sm:$0xff]
      %v1303 = vld [vmem:[%s8 + $0x1a8] sm:$0xff]
      %v1304 = vld [vmem:[%s8 + $0x1b0] sm:$0xff]
      %v1305 = vld [vmem:[%s8 + $0x1b8] sm:$0xff]
      %v1306 = vld [vmem:[%s8 + $0x1c0] sm:$0xff]
      %v1307 = vld [vmem:[%s8 + $0x1c8] sm:$0xff]
      %v1308 = vld [vmem:[%s8 + $0x1d0] sm:$0xff]
      %v1309 = vld [vmem:[%s8 + $0x1d8] sm:$0xff]
      %v1310 = vld [vmem:[%s8 + $0x1e0] sm:$0xff]
      %v1311 = vld [vmem:[%s8 + $0x1e8] sm:$0xff]
      %v1312 = vld [vmem:[%s8 + $0x1f0] sm:$0xff]
      %v1313 = vld [vmem:[%s8 + $0x1f8] sm:$0xff]
      %v1330 = vunpack.c.l.b16 %v1234
      %v1331 = vunpack.c.l.b16 %v1235
      %v1332 = vunpack.c.l.b16 %v1236
      %v1333 = vunpack.c.l.b16 %v1237
      %v1334 = vunpack.c.l.b16 %v1238
      %v1335 = vunpack.c.l.b16 %v1239
      %v1336 = vunpack.c.l.b16 %v1240
      %v1337 = vunpack.c.l.b16 %v1241
      %v1338 = vunpack.c.l.b16 %v1242
      %v1339 = vunpack.c.l.b16 %v1243
      %v1340 = vunpack.c.l.b16 %v1244
      %v1341 = vunpack.c.l.b16 %v1245
      %v1342 = vunpack.c.l.b16 %v1246
      %v1343 = vunpack.c.l.b16 %v1247
      %v1344 = vunpack.c.l.b16 %v1248
      %v1345 = vunpack.c.l.b16 %v1249
      %vm1346 = vcmask 1041409
      %v1347 = vsel %vm1346, %v1332, %v1330
      %vm1348 = vcmask 1042434
      %v1349 = vsel %vm1348, %v1334, %v1347
      %vm1350 = vcmask 1043459
      %v1351 = vsel %vm1350, %v1336, %v1349
      %vm1352 = vcmask 1044484
      %v1353 = vsel %vm1352, %v1338, %v1351
      %vm1354 = vcmask 1045509
      %v1355 = vsel %vm1354, %v1340, %v1353
      %vm1356 = vcmask 1046534
      %v1357 = vsel %vm1356, %v1342, %v1355
      %vm1358 = vcmask 1047559
      %v1359 = vsel %vm1358, %v1344, %v1357
      %v1360 = vsel %vm1346, %v1333, %v1331
      %v1361 = vsel %vm1348, %v1335, %v1360
      %v1362 = vsel %vm1350, %v1337, %v1361
      %v1363 = vsel %vm1352, %v1339, %v1362
      %v1364 = vsel %vm1354, %v1341, %v1363
      %v1365 = vsel %vm1356, %v1343, %v1364
      %v1366 = vsel %vm1358, %v1345, %v1365
      %v1367 = vpack.c.b16 %v1359, %v1359
      %v1368 = vpack.c.b16 %v1366, %v1366
      %v1435 = vunpack.c.l.b16 %v1250
      %v1436 = vunpack.c.h.b16 %v1250
      %v1437 = vunpack.c.l.b16 %v1251
      %v1438 = vunpack.c.h.b16 %v1251
      %v1439 = vunpack.c.l.b16 %v1252
      %v1440 = vunpack.c.h.b16 %v1252
      %v1441 = vunpack.c.l.b16 %v1253
      %v1442 = vunpack.c.h.b16 %v1253
      %v1443 = vunpack.c.l.b16 %v1254
      %v1444 = vunpack.c.h.b16 %v1254
      %v1445 = vunpack.c.l.b16 %v1255
      %v1446 = vunpack.c.h.b16 %v1255
      %v1447 = vunpack.c.l.b16 %v1256
      %v1448 = vunpack.c.h.b16 %v1256
      %v1449 = vunpack.c.l.b16 %v1257
      %v1450 = vunpack.c.h.b16 %v1257
      %v1451 = vunpack.c.l.b16 %v1258
      %v1452 = vunpack.c.h.b16 %v1258
      %v1453 = vunpack.c.l.b16 %v1259
      %v1454 = vunpack.c.h.b16 %v1259
      %v1455 = vunpack.c.l.b16 %v1260
      %v1456 = vunpack.c.h.b16 %v1260
      %v1457 = vunpack.c.l.b16 %v1261
      %v1458 = vunpack.c.h.b16 %v1261
      %v1459 = vunpack.c.l.b16 %v1262
      %v1460 = vunpack.c.h.b16 %v1262
      %v1461 = vunpack.c.l.b16 %v1263
      %v1462 = vunpack.c.h.b16 %v1263
      %v1463 = vunpack.c.l.b16 %v1264
      %v1464 = vunpack.c.h.b16 %v1264
      %v1465 = vunpack.c.l.b16 %v1265
      %v1466 = vunpack.c.h.b16 %v1265
      %v1467 = vunpack.c.l.b16 %v1266
      %v1468 = vunpack.c.h.b16 %v1266
      %v1469 = vunpack.c.l.b16 %v1267
      %v1470 = vunpack.c.h.b16 %v1267
      %v1471 = vunpack.c.l.b16 %v1268
      %v1472 = vunpack.c.h.b16 %v1268
      %v1473 = vunpack.c.l.b16 %v1269
      %v1474 = vunpack.c.h.b16 %v1269
      %v1475 = vunpack.c.l.b16 %v1270
      %v1476 = vunpack.c.h.b16 %v1270
      %v1477 = vunpack.c.l.b16 %v1271
      %v1478 = vunpack.c.h.b16 %v1271
      %v1479 = vunpack.c.l.b16 %v1272
      %v1480 = vunpack.c.h.b16 %v1272
      %v1481 = vunpack.c.l.b16 %v1273
      %v1482 = vunpack.c.h.b16 %v1273
      %v1483 = vunpack.c.l.b16 %v1274
      %v1484 = vunpack.c.h.b16 %v1274
      %v1485 = vunpack.c.l.b16 %v1275
      %v1486 = vunpack.c.h.b16 %v1275
      %v1487 = vunpack.c.l.b16 %v1276
      %v1488 = vunpack.c.h.b16 %v1276
      %v1489 = vunpack.c.l.b16 %v1277
      %v1490 = vunpack.c.h.b16 %v1277
      %v1491 = vunpack.c.l.b16 %v1278
      %v1492 = vunpack.c.h.b16 %v1278
      %v1493 = vunpack.c.l.b16 %v1279
      %v1494 = vunpack.c.h.b16 %v1279
      %v1495 = vunpack.c.l.b16 %v1280
      %v1496 = vunpack.c.h.b16 %v1280
      %v1497 = vunpack.c.l.b16 %v1281
      %v1498 = vunpack.c.h.b16 %v1281
      %v1499 = vunpack.c.l.b16 %v1282
      %v1500 = vunpack.c.h.b16 %v1282
      %v1501 = vunpack.c.l.b16 %v1283
      %v1502 = vunpack.c.h.b16 %v1283
      %v1503 = vunpack.c.l.b16 %v1284
      %v1504 = vunpack.c.h.b16 %v1284
      %v1505 = vunpack.c.l.b16 %v1285
      %v1506 = vunpack.c.h.b16 %v1285
      %v1507 = vunpack.c.l.b16 %v1286
      %v1508 = vunpack.c.h.b16 %v1286
      %v1509 = vunpack.c.l.b16 %v1287
      %v1510 = vunpack.c.h.b16 %v1287
      %v1511 = vunpack.c.l.b16 %v1288
      %v1512 = vunpack.c.h.b16 %v1288
      %v1513 = vunpack.c.l.b16 %v1289
      %v1514 = vunpack.c.h.b16 %v1289
      %v1515 = vunpack.c.l.b16 %v1290
      %v1516 = vunpack.c.h.b16 %v1290
      %v1517 = vunpack.c.l.b16 %v1291
      %v1518 = vunpack.c.h.b16 %v1291
      %v1519 = vunpack.c.l.b16 %v1292
      %v1520 = vunpack.c.h.b16 %v1292
      %v1521 = vunpack.c.l.b16 %v1293
      %v1522 = vunpack.c.h.b16 %v1293
      %v1523 = vunpack.c.l.b16 %v1294
      %v1524 = vunpack.c.h.b16 %v1294
      %v1525 = vunpack.c.l.b16 %v1295
      %v1526 = vunpack.c.h.b16 %v1295
      %v1527 = vunpack.c.l.b16 %v1296
      %v1528 = vunpack.c.h.b16 %v1296
      %v1529 = vunpack.c.l.b16 %v1297
      %v1530 = vunpack.c.h.b16 %v1297
      %v1531 = vunpack.c.l.b16 %v1298
      %v1532 = vunpack.c.h.b16 %v1298
      %v1533 = vunpack.c.l.b16 %v1299
      %v1534 = vunpack.c.h.b16 %v1299
      %v1535 = vunpack.c.l.b16 %v1300
      %v1536 = vunpack.c.h.b16 %v1300
      %v1537 = vunpack.c.l.b16 %v1301
      %v1538 = vunpack.c.h.b16 %v1301
      %v1539 = vunpack.c.l.b16 %v1302
      %v1540 = vunpack.c.h.b16 %v1302
      %v1541 = vunpack.c.l.b16 %v1303
      %v1542 = vunpack.c.h.b16 %v1303
      %v1543 = vunpack.c.l.b16 %v1304
      %v1544 = vunpack.c.h.b16 %v1304
      %v1545 = vunpack.c.l.b16 %v1305
      %v1546 = vunpack.c.h.b16 %v1305
      %v1547 = vunpack.c.l.b16 %v1306
      %v1548 = vunpack.c.h.b16 %v1306
      %v1549 = vunpack.c.l.b16 %v1307
      %v1550 = vunpack.c.h.b16 %v1307
      %v1551 = vunpack.c.l.b16 %v1308
      %v1552 = vunpack.c.h.b16 %v1308
      %v1553 = vunpack.c.l.b16 %v1309
      %v1554 = vunpack.c.h.b16 %v1309
      %v1555 = vunpack.c.l.b16 %v1310
      %v1556 = vunpack.c.h.b16 %v1310
      %v1557 = vunpack.c.l.b16 %v1311
      %v1558 = vunpack.c.h.b16 %v1311
      %v1559 = vunpack.c.l.b16 %v1312
      %v1560 = vunpack.c.h.b16 %v1312
      %v1561 = vunpack.c.l.b16 %v1313
      %v1562 = vunpack.c.h.b16 %v1313
      %v1563 = vpack.c.b16 %v1439, %v1435
      %v1564 = vpack.c.b16 %v1440, %v1436
      %v1565 = vpack.c.b16 %v1441, %v1437
      %v1566 = vpack.c.b16 %v1442, %v1438
      %v1567 = vpack.c.b16 %v1447, %v1443
      %v1568 = vpack.c.b16 %v1448, %v1444
      %v1569 = vpack.c.b16 %v1449, %v1445
      %v1570 = vpack.c.b16 %v1450, %v1446
      %v1571 = vpack.c.b16 %v1455, %v1451
      %v1572 = vpack.c.b16 %v1456, %v1452
      %v1573 = vpack.c.b16 %v1457, %v1453
      %v1574 = vpack.c.b16 %v1458, %v1454
      %v1575 = vpack.c.b16 %v1463, %v1459
      %v1576 = vpack.c.b16 %v1464, %v1460
      %v1577 = vpack.c.b16 %v1465, %v1461
      %v1578 = vpack.c.b16 %v1466, %v1462
      %v1579 = vpack.c.b16 %v1471, %v1467
      %v1580 = vpack.c.b16 %v1472, %v1468
      %v1581 = vpack.c.b16 %v1473, %v1469
      %v1582 = vpack.c.b16 %v1474, %v1470
      %v1583 = vpack.c.b16 %v1479, %v1475
      %v1584 = vpack.c.b16 %v1480, %v1476
      %v1585 = vpack.c.b16 %v1481, %v1477
      %v1586 = vpack.c.b16 %v1482, %v1478
      %v1587 = vpack.c.b16 %v1487, %v1483
      %v1588 = vpack.c.b16 %v1488, %v1484
      %v1589 = vpack.c.b16 %v1489, %v1485
      %v1590 = vpack.c.b16 %v1490, %v1486
      %v1591 = vpack.c.b16 %v1495, %v1491
      %v1592 = vpack.c.b16 %v1496, %v1492
      %v1593 = vpack.c.b16 %v1497, %v1493
      %v1594 = vpack.c.b16 %v1498, %v1494
      %v1595 = vpack.c.b16 %v1503, %v1499
      %v1596 = vpack.c.b16 %v1504, %v1500
      %v1597 = vpack.c.b16 %v1505, %v1501
      %v1598 = vpack.c.b16 %v1506, %v1502
      %v1599 = vpack.c.b16 %v1511, %v1507
      %v1600 = vpack.c.b16 %v1512, %v1508
      %v1601 = vpack.c.b16 %v1513, %v1509
      %v1602 = vpack.c.b16 %v1514, %v1510
      %v1603 = vpack.c.b16 %v1519, %v1515
      %v1604 = vpack.c.b16 %v1520, %v1516
      %v1605 = vpack.c.b16 %v1521, %v1517
      %v1606 = vpack.c.b16 %v1522, %v1518
      %v1607 = vpack.c.b16 %v1527, %v1523
      %v1608 = vpack.c.b16 %v1528, %v1524
      %v1609 = vpack.c.b16 %v1529, %v1525
      %v1610 = vpack.c.b16 %v1530, %v1526
      %v1611 = vpack.c.b16 %v1535, %v1531
      %v1612 = vpack.c.b16 %v1536, %v1532
      %v1613 = vpack.c.b16 %v1537, %v1533
      %v1614 = vpack.c.b16 %v1538, %v1534
      %v1615 = vpack.c.b16 %v1543, %v1539
      %v1616 = vpack.c.b16 %v1544, %v1540
      %v1617 = vpack.c.b16 %v1545, %v1541
      %v1618 = vpack.c.b16 %v1546, %v1542
      %v1619 = vpack.c.b16 %v1551, %v1547
      %v1620 = vpack.c.b16 %v1552, %v1548
      %v1621 = vpack.c.b16 %v1553, %v1549
      %v1622 = vpack.c.b16 %v1554, %v1550
      %v1623 = vpack.c.b16 %v1559, %v1555
      %v1624 = vpack.c.b16 %v1560, %v1556
      %v1625 = vpack.c.b16 %v1561, %v1557
      %v1626 = vpack.c.b16 %v1562, %v1558
      %1691 = vmatprep.subr.bf16.mxu0 %v1592
      %1692 = vmatpush1.bf16.msra.mxu0 %v1591
      %1693 = vmatprep.subr.bf16.mxu0 %v1588
      %1694 = vmatpush1.bf16.msra.mxu0 %v1587
      %1695 = vmatprep.subr.bf16.mxu0 %v1584
      %1696 = vmatpush1.bf16.msra.mxu0 %v1583
      %1697 = vmatprep.subr.bf16.mxu0 %v1580
      %1698 = vmatpush1.bf16.msra.mxu0 %v1579
      %1699 = vmatprep.subr.bf16.mxu0 %v1576
      %1700 = vmatpush1.bf16.msra.mxu0 %v1575
      %1701 = vmatprep.subr.bf16.mxu0 %v1572
      %1702 = vmatpush1.bf16.msra.mxu0 %v1571
      %1703 = vmatprep.subr.bf16.mxu0 %v1568
      %1704 = vmatpush1.bf16.msra.mxu0 %v1567
      %1705 = vmatprep.subr.bf16.mxu0 %v1564
      %1706 = vmatpush1.bf16.msra.mxu0 %v1563
      %1707 = vmatprep.subr.bf16.mxu0 %v1624
      %1708 = vmatpush2.bf16.msra.mxu0 %v1623
      %1709 = vmatprep.subr.bf16.mxu0 %v1620
      %1710 = vmatpush2.bf16.msra.mxu0 %v1619
      %1711 = vmatprep.subr.bf16.mxu0 %v1616
      %1712 = vmatpush2.bf16.msra.mxu0 %v1615
      %1713 = vmatprep.subr.bf16.mxu0 %v1612
      %1714 = vmatpush2.bf16.msra.mxu0 %v1611
      %1715 = vmatprep.subr.bf16.mxu0 %v1608
      %1716 = vmatpush2.bf16.msra.mxu0 %v1607
      %1717 = vmatprep.subr.bf16.mxu0 %v1604
      %1718 = vmatpush2.bf16.msra.mxu0 %v1603
      %1719 = vmatprep.subr.bf16.mxu0 %v1600
      %1720 = vmatpush2.bf16.msra.mxu0 %v1599
      %1721 = vmatprep.subr.bf16.mxu0 %v1596
      %1722 = vmatpush2.bf16.msra.mxu0 %v1595
      %1723 = vmatprep.mubr.bf16.mxu0 %v1368
      %1724 = vmatmul.mubr.bf16.gmra.mxu0 %v1367
      %v1725 = vpop.f32.mrf.mxu0
      %v1726 = vadd.f32 0.0, %v1725
      %v1727 = vpop.f32.mrf.mxu0
      %v1728 = vadd.f32 0.0, %v1727
      %v1729 = vpop.f32.mrf.mxu0
      %v1730 = vpop.f32.mrf.mxu0
      %1731 = vdwg.mxu0
      %1732 = vmatprep.subr.bf16.mxu0 %v1594
      %1733 = vmatpush1.bf16.msra.mxu0 %v1593
      %1734 = vmatprep.subr.bf16.mxu0 %v1590
      %1735 = vmatpush1.bf16.msra.mxu0 %v1589
      %1736 = vmatprep.subr.bf16.mxu0 %v1586
      %1737 = vmatpush1.bf16.msra.mxu0 %v1585
      %1738 = vmatprep.subr.bf16.mxu0 %v1582
      %1739 = vmatpush1.bf16.msra.mxu0 %v1581
      %1740 = vmatprep.subr.bf16.mxu0 %v1578
      %1741 = vmatpush1.bf16.msra.mxu0 %v1577
      %1742 = vmatprep.subr.bf16.mxu0 %v1574
      %1743 = vmatpush1.bf16.msra.mxu0 %v1573
      %1744 = vmatprep.subr.bf16.mxu0 %v1570
      %1745 = vmatpush1.bf16.msra.mxu0 %v1569
      %1746 = vmatprep.subr.bf16.mxu0 %v1566
      %1747 = vmatpush1.bf16.msra.mxu0 %v1565
      %1748 = vmatprep.subr.bf16.mxu0 %v1626
      %1749 = vmatpush2.bf16.msra.mxu0 %v1625
      %1750 = vmatprep.subr.bf16.mxu0 %v1622
      %1751 = vmatpush2.bf16.msra.mxu0 %v1621
      %1752 = vmatprep.subr.bf16.mxu0 %v1618
      %1753 = vmatpush2.bf16.msra.mxu0 %v1617
      %1754 = vmatprep.subr.bf16.mxu0 %v1614
      %1755 = vmatpush2.bf16.msra.mxu0 %v1613
      %1756 = vmatprep.subr.bf16.mxu0 %v1610
      %1757 = vmatpush2.bf16.msra.mxu0 %v1609
      %1758 = vmatprep.subr.bf16.mxu0 %v1606
      %1759 = vmatpush2.bf16.msra.mxu0 %v1605
      %1760 = vmatprep.subr.bf16.mxu0 %v1602
      %1761 = vmatpush2.bf16.msra.mxu0 %v1601
      %1762 = vmatprep.subr.bf16.mxu0 %v1598
      %1763 = vmatpush2.bf16.msra.mxu0 %v1597
      %1764 = vmatprep.mubr.bf16.mxu0 %v1368
      %1765 = vmatmul.mubr.bf16.gmra.mxu0 %v1367
      %v1766 = vpop.f32.mrf.mxu0
      %v1767 = vadd.f32 0.0, %v1766
      %v1768 = vpop.f32.mrf.mxu0
      %v1769 = vadd.f32 0.0, %v1768
      %v1770 = vpop.f32.mrf.mxu0
      %v1771 = vpop.f32.mrf.mxu0
      %1772 = vdwg.mxu0
      %v1773 = vpack.c.bf16 %v1048, %v1044
      %v1774 = vpack.c.bf16 %v1050, %v1046
      %v1775 = vpack.c.bf16 %v1058, %v1054
      %v1776 = vpack.c.bf16 %v1060, %v1056
      %v1777 = vpack.c.bf16 %v1068, %v1064
      %v1778 = vpack.c.bf16 %v1070, %v1066
      %v1779 = vpack.c.bf16 %v1078, %v1074
      %v1780 = vpack.c.bf16 %v1080, %v1076
      %v1781 = vpack.c.bf16 %v1088, %v1084
      %v1782 = vpack.c.bf16 %v1090, %v1086
      %v1783 = vpack.c.bf16 %v1098, %v1094
      %v1784 = vpack.c.bf16 %v1100, %v1096
      %v1785 = vpack.c.bf16 %v1108, %v1104
      %v1786 = vpack.c.bf16 %v1110, %v1106
      %v1787 = vpack.c.bf16 %v1118, %v1114
      %v1788 = vpack.c.bf16 %v1120, %v1116
      %v1789 = vld [vmem:[%s9] sm:$0xff]
      %v1790 = vld [vmem:[%s9 + $0x8] sm:$0xff]
      %v1791 = vld [vmem:[%s9 + $0x10] sm:$0xff]
      %v1792 = vld [vmem:[%s9 + $0x18] sm:$0xff]
      %v1793 = vld [vmem:[%s9 + $0x20] sm:$0xff]
      %v1794 = vld [vmem:[%s9 + $0x28] sm:$0xff]
      %v1795 = vld [vmem:[%s9 + $0x30] sm:$0xff]
      %v1796 = vld [vmem:[%s9 + $0x38] sm:$0xff]
      %v1797 = vld [vmem:[%s9 + $0x40] sm:$0xff]
      %v1798 = vld [vmem:[%s9 + $0x48] sm:$0xff]
      %v1799 = vld [vmem:[%s9 + $0x50] sm:$0xff]
      %v1800 = vld [vmem:[%s9 + $0x58] sm:$0xff]
      %v1801 = vld [vmem:[%s9 + $0x60] sm:$0xff]
      %v1802 = vld [vmem:[%s9 + $0x68] sm:$0xff]
      %v1803 = vld [vmem:[%s9 + $0x70] sm:$0xff]
      %v1804 = vld [vmem:[%s9 + $0x78] sm:$0xff]
      %v1805 = vld [vmem:[%s9 + $0x80] sm:$0xff]
      %v1806 = vld [vmem:[%s9 + $0x88] sm:$0xff]
      %v1807 = vld [vmem:[%s9 + $0x90] sm:$0xff]
      %v1808 = vld [vmem:[%s9 + $0x98] sm:$0xff]
      %v1809 = vld [vmem:[%s9 + $0xa0] sm:$0xff]
      %v1810 = vld [vmem:[%s9 + $0xa8] sm:$0xff]
      %v1811 = vld [vmem:[%s9 + $0xb0] sm:$0xff]
      %v1812 = vld [vmem:[%s9 + $0xb8] sm:$0xff]
      %v1813 = vld [vmem:[%s9 + $0xc0] sm:$0xff]
      %v1814 = vld [vmem:[%s9 + $0xc8] sm:$0xff]
      %v1815 = vld [vmem:[%s9 + $0xd0] sm:$0xff]
      %v1816 = vld [vmem:[%s9 + $0xd8] sm:$0xff]
      %v1817 = vld [vmem:[%s9 + $0xe0] sm:$0xff]
      %v1818 = vld [vmem:[%s9 + $0xe8] sm:$0xff]
      %v1819 = vld [vmem:[%s9 + $0xf0] sm:$0xff]
      %v1820 = vld [vmem:[%s9 + $0xf8] sm:$0xff]
      %v1821 = vld [vmem:[%s9 + $0x100] sm:$0xff]
      %v1822 = vld [vmem:[%s9 + $0x108] sm:$0xff]
      %v1823 = vld [vmem:[%s9 + $0x110] sm:$0xff]
      %v1824 = vld [vmem:[%s9 + $0x118] sm:$0xff]
      %v1825 = vld [vmem:[%s9 + $0x120] sm:$0xff]
      %v1826 = vld [vmem:[%s9 + $0x128] sm:$0xff]
      %v1827 = vld [vmem:[%s9 + $0x130] sm:$0xff]
      %v1828 = vld [vmem:[%s9 + $0x138] sm:$0xff]
      %v1829 = vld [vmem:[%s9 + $0x140] sm:$0xff]
      %v1830 = vld [vmem:[%s9 + $0x148] sm:$0xff]
      %v1831 = vld [vmem:[%s9 + $0x150] sm:$0xff]
      %v1832 = vld [vmem:[%s9 + $0x158] sm:$0xff]
      %v1833 = vld [vmem:[%s9 + $0x160] sm:$0xff]
      %v1834 = vld [vmem:[%s9 + $0x168] sm:$0xff]
      %v1835 = vld [vmem:[%s9 + $0x170] sm:$0xff]
      %v1836 = vld [vmem:[%s9 + $0x178] sm:$0xff]
      %v1837 = vld [vmem:[%s9 + $0x180] sm:$0xff]
      %v1838 = vld [vmem:[%s9 + $0x188] sm:$0xff]
      %v1839 = vld [vmem:[%s9 + $0x190] sm:$0xff]
      %v1840 = vld [vmem:[%s9 + $0x198] sm:$0xff]
      %v1841 = vld [vmem:[%s9 + $0x1a0] sm:$0xff]
      %v1842 = vld [vmem:[%s9 + $0x1a8] sm:$0xff]
      %v1843 = vld [vmem:[%s9 + $0x1b0] sm:$0xff]
      %v1844 = vld [vmem:[%s9 + $0x1b8] sm:$0xff]
      %v1845 = vld [vmem:[%s9 + $0x1c0] sm:$0xff]
      %v1846 = vld [vmem:[%s9 + $0x1c8] sm:$0xff]
      %v1847 = vld [vmem:[%s9 + $0x1d0] sm:$0xff]
      %v1848 = vld [vmem:[%s9 + $0x1d8] sm:$0xff]
      %v1849 = vld [vmem:[%s9 + $0x1e0] sm:$0xff]
      %v1850 = vld [vmem:[%s9 + $0x1e8] sm:$0xff]
      %v1851 = vld [vmem:[%s9 + $0x1f0] sm:$0xff]
      %v1852 = vld [vmem:[%s9 + $0x1f8] sm:$0xff]
      %v1917 = vunpack.c.l.b16 %v1789
      %v1918 = vunpack.c.h.b16 %v1789
      %v1919 = vunpack.c.l.b16 %v1790
      %v1920 = vunpack.c.h.b16 %v1790
      %v1921 = vunpack.c.l.b16 %v1791
      %v1922 = vunpack.c.h.b16 %v1791
      %v1923 = vunpack.c.l.b16 %v1792
      %v1924 = vunpack.c.h.b16 %v1792
      %v1925 = vunpack.c.l.b16 %v1793
      %v1926 = vunpack.c.h.b16 %v1793
      %v1927 = vunpack.c.l.b16 %v1794
      %v1928 = vunpack.c.h.b16 %v1794
      %v1929 = vunpack.c.l.b16 %v1795
      %v1930 = vunpack.c.h.b16 %v1795
      %v1931 = vunpack.c.l.b16 %v1796
      %v1932 = vunpack.c.h.b16 %v1796
      %v1933 = vunpack.c.l.b16 %v1797
      %v1934 = vunpack.c.h.b16 %v1797
      %v1935 = vunpack.c.l.b16 %v1798
      %v1936 = vunpack.c.h.b16 %v1798
      %v1937 = vunpack.c.l.b16 %v1799
      %v1938 = vunpack.c.h.b16 %v1799
      %v1939 = vunpack.c.l.b16 %v1800
      %v1940 = vunpack.c.h.b16 %v1800
      %v1941 = vunpack.c.l.b16 %v1801
      %v1942 = vunpack.c.h.b16 %v1801
      %v1943 = vunpack.c.l.b16 %v1802
      %v1944 = vunpack.c.h.b16 %v1802
      %v1945 = vunpack.c.l.b16 %v1803
      %v1946 = vunpack.c.h.b16 %v1803
      %v1947 = vunpack.c.l.b16 %v1804
      %v1948 = vunpack.c.h.b16 %v1804
      %v1949 = vunpack.c.l.b16 %v1805
      %v1950 = vunpack.c.h.b16 %v1805
      %v1951 = vunpack.c.l.b16 %v1806
      %v1952 = vunpack.c.h.b16 %v1806
      %v1953 = vunpack.c.l.b16 %v1807
      %v1954 = vunpack.c.h.b16 %v1807
      %v1955 = vunpack.c.l.b16 %v1808
      %v1956 = vunpack.c.h.b16 %v1808
      %v1957 = vunpack.c.l.b16 %v1809
      %v1958 = vunpack.c.h.b16 %v1809
      %v1959 = vunpack.c.l.b16 %v1810
      %v1960 = vunpack.c.h.b16 %v1810
      %v1961 = vunpack.c.l.b16 %v1811
      %v1962 = vunpack.c.h.b16 %v1811
      %v1963 = vunpack.c.l.b16 %v1812
      %v1964 = vunpack.c.h.b16 %v1812
      %v1965 = vunpack.c.l.b16 %v1813
      %v1966 = vunpack.c.h.b16 %v1813
      %v1967 = vunpack.c.l.b16 %v1814
      %v1968 = vunpack.c.h.b16 %v1814
      %v1969 = vunpack.c.l.b16 %v1815
      %v1970 = vunpack.c.h.b16 %v1815
      %v1971 = vunpack.c.l.b16 %v1816
      %v1972 = vunpack.c.h.b16 %v1816
      %v1973 = vunpack.c.l.b16 %v1817
      %v1974 = vunpack.c.h.b16 %v1817
      %v1975 = vunpack.c.l.b16 %v1818
      %v1976 = vunpack.c.h.b16 %v1818
      %v1977 = vunpack.c.l.b16 %v1819
      %v1978 = vunpack.c.h.b16 %v1819
      %v1979 = vunpack.c.l.b16 %v1820
      %v1980 = vunpack.c.h.b16 %v1820
      %v1981 = vunpack.c.l.b16 %v1821
      %v1982 = vunpack.c.h.b16 %v1821
      %v1983 = vunpack.c.l.b16 %v1822
      %v1984 = vunpack.c.h.b16 %v1822
      %v1985 = vunpack.c.l.b16 %v1823
      %v1986 = vunpack.c.h.b16 %v1823
      %v1987 = vunpack.c.l.b16 %v1824
      %v1988 = vunpack.c.h.b16 %v1824
      %v1989 = vunpack.c.l.b16 %v1825
      %v1990 = vunpack.c.h.b16 %v1825
      %v1991 = vunpack.c.l.b16 %v1826
      %v1992 = vunpack.c.h.b16 %v1826
      %v1993 = vunpack.c.l.b16 %v1827
      %v1994 = vunpack.c.h.b16 %v1827
      %v1995 = vunpack.c.l.b16 %v1828
      %v1996 = vunpack.c.h.b16 %v1828
      %v1997 = vunpack.c.l.b16 %v1829
      %v1998 = vunpack.c.h.b16 %v1829
      %v1999 = vunpack.c.l.b16 %v1830
      %v2000 = vunpack.c.h.b16 %v1830
      %v2001 = vunpack.c.l.b16 %v1831
      %v2002 = vunpack.c.h.b16 %v1831
      %v2003 = vunpack.c.l.b16 %v1832
      %v2004 = vunpack.c.h.b16 %v1832
      %v2005 = vunpack.c.l.b16 %v1833
      %v2006 = vunpack.c.h.b16 %v1833
      %v2007 = vunpack.c.l.b16 %v1834
      %v2008 = vunpack.c.h.b16 %v1834
      %v2009 = vunpack.c.l.b16 %v1835
      %v2010 = vunpack.c.h.b16 %v1835
      %v2011 = vunpack.c.l.b16 %v1836
      %v2012 = vunpack.c.h.b16 %v1836
      %v2013 = vunpack.c.l.b16 %v1837
      %v2014 = vunpack.c.h.b16 %v1837
      %v2015 = vunpack.c.l.b16 %v1838
      %v2016 = vunpack.c.h.b16 %v1838
      %v2017 = vunpack.c.l.b16 %v1839
      %v2018 = vunpack.c.h.b16 %v1839
      %v2019 = vunpack.c.l.b16 %v1840
      %v2020 = vunpack.c.h.b16 %v1840
      %v2021 = vunpack.c.l.b16 %v1841
      %v2022 = vunpack.c.h.b16 %v1841
      %v2023 = vunpack.c.l.b16 %v1842
      %v2024 = vunpack.c.h.b16 %v1842
      %v2025 = vunpack.c.l.b16 %v1843
      %v2026 = vunpack.c.h.b16 %v1843
      %v2027 = vunpack.c.l.b16 %v1844
      %v2028 = vunpack.c.h.b16 %v1844
      %v2029 = vunpack.c.l.b16 %v1845
      %v2030 = vunpack.c.h.b16 %v1845
      %v2031 = vunpack.c.l.b16 %v1846
      %v2032 = vunpack.c.h.b16 %v1846
      %v2033 = vunpack.c.l.b16 %v1847
      %v2034 = vunpack.c.h.b16 %v1847
      %v2035 = vunpack.c.l.b16 %v1848
      %v2036 = vunpack.c.h.b16 %v1848
      %v2037 = vunpack.c.l.b16 %v1849
      %v2038 = vunpack.c.h.b16 %v1849
      %v2039 = vunpack.c.l.b16 %v1850
      %v2040 = vunpack.c.h.b16 %v1850
      %v2041 = vunpack.c.l.b16 %v1851
      %v2042 = vunpack.c.h.b16 %v1851
      %v2043 = vunpack.c.l.b16 %v1852
      %v2044 = vunpack.c.h.b16 %v1852
      %v2045 = vpack.c.b16 %v1921, %v1917
      %v2046 = vpack.c.b16 %v1922, %v1918
      %v2047 = vpack.c.b16 %v1923, %v1919
      %v2048 = vpack.c.b16 %v1924, %v1920
      %v2049 = vpack.c.b16 %v1929, %v1925
      %v2050 = vpack.c.b16 %v1930, %v1926
      %v2051 = vpack.c.b16 %v1931, %v1927
      %v2052 = vpack.c.b16 %v1932, %v1928
      %v2053 = vpack.c.b16 %v1937, %v1933
      %v2054 = vpack.c.b16 %v1938, %v1934
      %v2055 = vpack.c.b16 %v1939, %v1935
      %v2056 = vpack.c.b16 %v1940, %v1936
      %v2057 = vpack.c.b16 %v1945, %v1941
      %v2058 = vpack.c.b16 %v1946, %v1942
      %v2059 = vpack.c.b16 %v1947, %v1943
      %v2060 = vpack.c.b16 %v1948, %v1944
      %v2061 = vpack.c.b16 %v1953, %v1949
      %v2062 = vpack.c.b16 %v1954, %v1950
      %v2063 = vpack.c.b16 %v1955, %v1951
      %v2064 = vpack.c.b16 %v1956, %v1952
      %v2065 = vpack.c.b16 %v1961, %v1957
      %v2066 = vpack.c.b16 %v1962, %v1958
      %v2067 = vpack.c.b16 %v1963, %v1959
      %v2068 = vpack.c.b16 %v1964, %v1960
      %v2069 = vpack.c.b16 %v1969, %v1965
      %v2070 = vpack.c.b16 %v1970, %v1966
      %v2071 = vpack.c.b16 %v1971, %v1967
      %v2072 = vpack.c.b16 %v1972, %v1968
      %v2073 = vpack.c.b16 %v1977, %v1973
      %v2074 = vpack.c.b16 %v1978, %v1974
      %v2075 = vpack.c.b16 %v1979, %v1975
      %v2076 = vpack.c.b16 %v1980, %v1976
      %v2077 = vpack.c.b16 %v1985, %v1981
      %v2078 = vpack.c.b16 %v1986, %v1982
      %v2079 = vpack.c.b16 %v1987, %v1983
      %v2080 = vpack.c.b16 %v1988, %v1984
      %v2081 = vpack.c.b16 %v1993, %v1989
      %v2082 = vpack.c.b16 %v1994, %v1990
      %v2083 = vpack.c.b16 %v1995, %v1991
      %v2084 = vpack.c.b16 %v1996, %v1992
      %v2085 = vpack.c.b16 %v2001, %v1997
      %v2086 = vpack.c.b16 %v2002, %v1998
      %v2087 = vpack.c.b16 %v2003, %v1999
      %v2088 = vpack.c.b16 %v2004, %v2000
      %v2089 = vpack.c.b16 %v2009, %v2005
      %v2090 = vpack.c.b16 %v2010, %v2006
      %v2091 = vpack.c.b16 %v2011, %v2007
      %v2092 = vpack.c.b16 %v2012, %v2008
      %v2093 = vpack.c.b16 %v2017, %v2013
      %v2094 = vpack.c.b16 %v2018, %v2014
      %v2095 = vpack.c.b16 %v2019, %v2015
      %v2096 = vpack.c.b16 %v2020, %v2016
      %v2097 = vpack.c.b16 %v2025, %v2021
      %v2098 = vpack.c.b16 %v2026, %v2022
      %v2099 = vpack.c.b16 %v2027, %v2023
      %v2100 = vpack.c.b16 %v2028, %v2024
      %v2101 = vpack.c.b16 %v2033, %v2029
      %v2102 = vpack.c.b16 %v2034, %v2030
      %v2103 = vpack.c.b16 %v2035, %v2031
      %v2104 = vpack.c.b16 %v2036, %v2032
      %v2105 = vpack.c.b16 %v2041, %v2037
      %v2106 = vpack.c.b16 %v2042, %v2038
      %v2107 = vpack.c.b16 %v2043, %v2039
      %v2108 = vpack.c.b16 %v2044, %v2040
      %2173 = vmatprep.subr.bf16.mxu0 %v2074
      %2174 = vmatpush1.bf16.msra.mxu0 %v2073
      %2175 = vmatprep.subr.bf16.mxu0 %v2070
      %2176 = vmatpush1.bf16.msra.mxu0 %v2069
      %2177 = vmatprep.subr.bf16.mxu0 %v2066
      %2178 = vmatpush1.bf16.msra.mxu0 %v2065
      %2179 = vmatprep.subr.bf16.mxu0 %v2062
      %2180 = vmatpush1.bf16.msra.mxu0 %v2061
      %2181 = vmatprep.subr.bf16.mxu0 %v2058
      %2182 = vmatpush1.bf16.msra.mxu0 %v2057
      %2183 = vmatprep.subr.bf16.mxu0 %v2054
      %2184 = vmatpush1.bf16.msra.mxu0 %v2053
      %2185 = vmatprep.subr.bf16.mxu0 %v2050
      %2186 = vmatpush1.bf16.msra.mxu0 %v2049
      %2187 = vmatprep.subr.bf16.mxu0 %v2046
      %2188 = vmatpush1.bf16.msra.mxu0 %v2045
      %2189 = vmatprep.subr.bf16.mxu0 %v2106
      %2190 = vmatpush2.bf16.msra.mxu0 %v2105
      %2191 = vmatprep.subr.bf16.mxu0 %v2102
      %2192 = vmatpush2.bf16.msra.mxu0 %v2101
      %2193 = vmatprep.subr.bf16.mxu0 %v2098
      %2194 = vmatpush2.bf16.msra.mxu0 %v2097
      %2195 = vmatprep.subr.bf16.mxu0 %v2094
      %2196 = vmatpush2.bf16.msra.mxu0 %v2093
      %2197 = vmatprep.subr.bf16.mxu0 %v2090
      %2198 = vmatpush2.bf16.msra.mxu0 %v2089
      %2199 = vmatprep.subr.bf16.mxu0 %v2086
      %2200 = vmatpush2.bf16.msra.mxu0 %v2085
      %2201 = vmatprep.subr.bf16.mxu0 %v2082
      %2202 = vmatpush2.bf16.msra.mxu0 %v2081
      %2203 = vmatprep.subr.bf16.mxu0 %v2078
      %2204 = vmatpush2.bf16.msra.mxu0 %v2077
      %2205 = vmatprep.mubr.bf16.mxu0 %v1774
      %2206 = vmatmul.mubr.bf16.gmra.mxu0 %v1773
      %v2207 = vpop.f32.mrf.mxu0
      %v2208 = vadd.f32 0.0, %v2207
      %v2209 = vpop.f32.mrf.mxu0
      %v2210 = vadd.f32 0.0, %v2209
      %v2211 = vpop.f32.mrf.mxu0
      %v2212 = vadd.f32 0.0, %v2211
      %v2213 = vpop.f32.mrf.mxu0
      %v2214 = vadd.f32 0.0, %v2213
      %2215 = vmatprep.mubr.bf16.mxu0 %v1776
      %2216 = vmatmul.mubr.bf16.gmra.mxu0 %v1775
      %v2217 = vpop.f32.mrf.mxu0
      %v2218 = vadd.f32 0.0, %v2217
      %v2219 = vpop.f32.mrf.mxu0
      %v2220 = vadd.f32 0.0, %v2219
      %v2221 = vpop.f32.mrf.mxu0
      %v2222 = vadd.f32 0.0, %v2221
      %v2223 = vpop.f32.mrf.mxu0
      %v2224 = vadd.f32 0.0, %v2223
      %2225 = vmatprep.mubr.bf16.mxu0 %v1778
      %2226 = vmatmul.mubr.bf16.gmra.mxu0 %v1777
      %v2227 = vpop.f32.mrf.mxu0
      %v2228 = vadd.f32 0.0, %v2227
      %v2229 = vpop.f32.mrf.mxu0
      %v2230 = vadd.f32 0.0, %v2229
      %v2231 = vpop.f32.mrf.mxu0
      %v2232 = vadd.f32 0.0, %v2231
      %v2233 = vpop.f32.mrf.mxu0
      %v2234 = vadd.f32 0.0, %v2233
      %2235 = vmatprep.mubr.bf16.mxu0 %v1780
      %2236 = vmatmul.mubr.bf16.gmra.mxu0 %v1779
      %v2237 = vpop.f32.mrf.mxu0
      %v2238 = vadd.f32 0.0, %v2237
      %v2239 = vpop.f32.mrf.mxu0
      %v2240 = vadd.f32 0.0, %v2239
      %v2241 = vpop.f32.mrf.mxu0
      %v2242 = vadd.f32 0.0, %v2241
      %v2243 = vpop.f32.mrf.mxu0
      %v2244 = vadd.f32 0.0, %v2243
      %2245 = vmatprep.mubr.bf16.mxu0 %v1782
      %2246 = vmatmul.mubr.bf16.gmra.mxu0 %v1781
      %v2247 = vpop.f32.mrf.mxu0
      %v2248 = vadd.f32 0.0, %v2247
      %v2249 = vpop.f32.mrf.mxu0
      %v2250 = vadd.f32 0.0, %v2249
      %v2251 = vpop.f32.mrf.mxu0
      %v2252 = vadd.f32 0.0, %v2251
      %v2253 = vpop.f32.mrf.mxu0
      %v2254 = vadd.f32 0.0, %v2253
      %2255 = vmatprep.mubr.bf16.mxu0 %v1784
      %2256 = vmatmul.mubr.bf16.gmra.mxu0 %v1783
      %v2257 = vpop.f32.mrf.mxu0
      %v2258 = vadd.f32 0.0, %v2257
      %v2259 = vpop.f32.mrf.mxu0
      %v2260 = vadd.f32 0.0, %v2259
      %v2261 = vpop.f32.mrf.mxu0
      %v2262 = vadd.f32 0.0, %v2261
      %v2263 = vpop.f32.mrf.mxu0
      %v2264 = vadd.f32 0.0, %v2263
      %2265 = vmatprep.mubr.bf16.mxu0 %v1786
      %2266 = vmatmul.mubr.bf16.gmra.mxu0 %v1785
      %v2267 = vpop.f32.mrf.mxu0
      %v2268 = vadd.f32 0.0, %v2267
      %v2269 = vpop.f32.mrf.mxu0
      %v2270 = vadd.f32 0.0, %v2269
      %v2271 = vpop.f32.mrf.mxu0
      %v2272 = vadd.f32 0.0, %v2271
      %v2273 = vpop.f32.mrf.mxu0
      %v2274 = vadd.f32 0.0, %v2273
      %2275 = vmatprep.mubr.bf16.mxu0 %v1788
      %2276 = vmatmul.mubr.bf16.gmra.mxu0 %v1787
      %v2277 = vpop.f32.mrf.mxu0
      %v2278 = vadd.f32 0.0, %v2277
      %v2279 = vpop.f32.mrf.mxu0
      %v2280 = vadd.f32 0.0, %v2279
      %v2281 = vpop.f32.mrf.mxu0
      %v2282 = vadd.f32 0.0, %v2281
      %v2283 = vpop.f32.mrf.mxu0
      %v2284 = vadd.f32 0.0, %v2283
      %2285 = vdwg.mxu0
      %2286 = vmatprep.subr.bf16.mxu0 %v2076
      %2287 = vmatpush1.bf16.msra.mxu0 %v2075
      %2288 = vmatprep.subr.bf16.mxu0 %v2072
      %2289 = vmatpush1.bf16.msra.mxu0 %v2071
      %2290 = vmatprep.subr.bf16.mxu0 %v2068
      %2291 = vmatpush1.bf16.msra.mxu0 %v2067
      %2292 = vmatprep.subr.bf16.mxu0 %v2064
      %2293 = vmatpush1.bf16.msra.mxu0 %v2063
      %2294 = vmatprep.subr.bf16.mxu0 %v2060
      %2295 = vmatpush1.bf16.msra.mxu0 %v2059
      %2296 = vmatprep.subr.bf16.mxu0 %v2056
      %2297 = vmatpush1.bf16.msra.mxu0 %v2055
      %2298 = vmatprep.subr.bf16.mxu0 %v2052
      %2299 = vmatpush1.bf16.msra.mxu0 %v2051
      %2300 = vmatprep.subr.bf16.mxu0 %v2048
      %2301 = vmatpush1.bf16.msra.mxu0 %v2047
      %2302 = vmatprep.subr.bf16.mxu0 %v2108
      %2303 = vmatpush2.bf16.msra.mxu0 %v2107
      %2304 = vmatprep.subr.bf16.mxu0 %v2104
      %2305 = vmatpush2.bf16.msra.mxu0 %v2103
      %2306 = vmatprep.subr.bf16.mxu0 %v2100
      %2307 = vmatpush2.bf16.msra.mxu0 %v2099
      %2308 = vmatprep.subr.bf16.mxu0 %v2096
      %2309 = vmatpush2.bf16.msra.mxu0 %v2095
      %2310 = vmatprep.subr.bf16.mxu0 %v2092
      %2311 = vmatpush2.bf16.msra.mxu0 %v2091
      %2312 = vmatprep.subr.bf16.mxu0 %v2088
      %2313 = vmatpush2.bf16.msra.mxu0 %v2087
      %2314 = vmatprep.subr.bf16.mxu0 %v2084
      %2315 = vmatpush2.bf16.msra.mxu0 %v2083
      %2316 = vmatprep.subr.bf16.mxu0 %v2080
      %2317 = vmatpush2.bf16.msra.mxu0 %v2079
      %2318 = vmatprep.mubr.bf16.mxu0 %v1774
      %2319 = vmatmul.mubr.bf16.gmra.mxu0 %v1773
      %v2320 = vpop.f32.mrf.mxu0
      %v2321 = vadd.f32 0.0, %v2320
      %v2322 = vpop.f32.mrf.mxu0
      %v2323 = vadd.f32 0.0, %v2322
      %v2324 = vpop.f32.mrf.mxu0
      %v2325 = vadd.f32 0.0, %v2324
      %v2326 = vpop.f32.mrf.mxu0
      %v2327 = vadd.f32 0.0, %v2326
      %2328 = vmatprep.mubr.bf16.mxu0 %v1776
      %2329 = vmatmul.mubr.bf16.gmra.mxu0 %v1775
      %v2330 = vpop.f32.mrf.mxu0
      %v2331 = vadd.f32 0.0, %v2330
      %v2332 = vpop.f32.mrf.mxu0
      %v2333 = vadd.f32 0.0, %v2332
      %v2334 = vpop.f32.mrf.mxu0
      %v2335 = vadd.f32 0.0, %v2334
      %v2336 = vpop.f32.mrf.mxu0
      %v2337 = vadd.f32 0.0, %v2336
      %2338 = vmatprep.mubr.bf16.mxu0 %v1778
      %2339 = vmatmul.mubr.bf16.gmra.mxu0 %v1777
      %v2340 = vpop.f32.mrf.mxu0
      %v2341 = vadd.f32 0.0, %v2340
      %v2342 = vpop.f32.mrf.mxu0
      %v2343 = vadd.f32 0.0, %v2342
      %v2344 = vpop.f32.mrf.mxu0
      %v2345 = vadd.f32 0.0, %v2344
      %v2346 = vpop.f32.mrf.mxu0
      %v2347 = vadd.f32 0.0, %v2346
      %2348 = vmatprep.mubr.bf16.mxu0 %v1780
      %2349 = vmatmul.mubr.bf16.gmra.mxu0 %v1779
      %v2350 = vpop.f32.mrf.mxu0
      %v2351 = vadd.f32 0.0, %v2350
      %v2352 = vpop.f32.mrf.mxu0
      %v2353 = vadd.f32 0.0, %v2352
      %v2354 = vpop.f32.mrf.mxu0
      %v2355 = vadd.f32 0.0, %v2354
      %v2356 = vpop.f32.mrf.mxu0
      %v2357 = vadd.f32 0.0, %v2356
      %2358 = vmatprep.mubr.bf16.mxu0 %v1782
      %2359 = vmatmul.mubr.bf16.gmra.mxu0 %v1781
      %v2360 = vpop.f32.mrf.mxu0
      %v2361 = vadd.f32 0.0, %v2360
      %v2362 = vpop.f32.mrf.mxu0
      %v2363 = vadd.f32 0.0, %v2362
      %v2364 = vpop.f32.mrf.mxu0
      %v2365 = vadd.f32 0.0, %v2364
      %v2366 = vpop.f32.mrf.mxu0
      %v2367 = vadd.f32 0.0, %v2366
      %2368 = vmatprep.mubr.bf16.mxu0 %v1784
      %2369 = vmatmul.mubr.bf16.gmra.mxu0 %v1783
      %v2370 = vpop.f32.mrf.mxu0
      %v2371 = vadd.f32 0.0, %v2370
      %v2372 = vpop.f32.mrf.mxu0
      %v2373 = vadd.f32 0.0, %v2372
      %v2374 = vpop.f32.mrf.mxu0
      %v2375 = vadd.f32 0.0, %v2374
      %v2376 = vpop.f32.mrf.mxu0
      %v2377 = vadd.f32 0.0, %v2376
      %2378 = vmatprep.mubr.bf16.mxu0 %v1786
      %2379 = vmatmul.mubr.bf16.gmra.mxu0 %v1785
      %v2380 = vpop.f32.mrf.mxu0
      %v2381 = vadd.f32 0.0, %v2380
      %v2382 = vpop.f32.mrf.mxu0
      %v2383 = vadd.f32 0.0, %v2382
      %v2384 = vpop.f32.mrf.mxu0
      %v2385 = vadd.f32 0.0, %v2384
      %v2386 = vpop.f32.mrf.mxu0
      %v2387 = vadd.f32 0.0, %v2386
      %2388 = vmatprep.mubr.bf16.mxu0 %v1788
      %2389 = vmatmul.mubr.bf16.gmra.mxu0 %v1787
      %v2390 = vpop.f32.mrf.mxu0
      %v2391 = vadd.f32 0.0, %v2390
      %v2392 = vpop.f32.mrf.mxu0
      %v2393 = vadd.f32 0.0, %v2392
      %v2394 = vpop.f32.mrf.mxu0
      %v2395 = vadd.f32 0.0, %v2394
      %v2396 = vpop.f32.mrf.mxu0
      %v2397 = vadd.f32 0.0, %v2396
      %2398 = vdwg.mxu0
      %v2403 = vcombine.low %v1726, %v1728
      %v2404 = vcombine.high %v1726, %v1728
      %v2405 = vcombine.low %v1767, %v1769
      %v2406 = vcombine.high %v1767, %v1769
      %v2408 = vunpack.c.l.s4 1966171168
      %v2409 = vunpack.c.0.s8 %v2408
      %v2410 = vlaneseq
      %v2411 = vshrl.u32 %v2410, 7
      %v2412 = vsub.s32 %v2409, %v2411
      %v2413 = vrot.slane %v2403, %v2412
      %v2415 = vunpack.c.l.s4 1966171168
      %v2416 = vunpack.c.0.s8 %v2415
      %v2417 = vlaneseq
      %v2418 = vshrl.u32 %v2417, 7
      %v2419 = vsub.s32 %v2416, %v2418
      %v2420 = vrot.slane %v2404, %v2419
      %v2422 = vunpack.c.l.s4 1966171168
      %v2423 = vunpack.c.0.s8 %v2422
      %v2424 = vlaneseq
      %v2425 = vshrl.u32 %v2424, 7
      %v2426 = vsub.s32 %v2423, %v2425
      %v2427 = vrot.slane %v2405, %v2426
      %v2429 = vunpack.c.l.s4 1966171168
      %v2430 = vunpack.c.0.s8 %v2429
      %v2431 = vlaneseq
      %v2432 = vshrl.u32 %v2431, 7
      %v2433 = vsub.s32 %v2430, %v2432
      %v2434 = vrot.slane %v2406, %v2433
      %v2435 = vcombine.low %v2413, %v2427
      %v2436 = vcombine.high %v2413, %v2427
      %v2437 = vcombine.low %v2420, %v2434
      %v2438 = vcombine.high %v2420, %v2434
      %v2440 = vunpack.c.l.s4 1966171168
      %v2441 = vunpack.c.0.s8 %v2440
      %v2442 = vlaneseq
      %v2443 = vshrl.u32 %v2442, 7
      %v2444 = vsub.s32 %v2441, %v2443
      %v2445 = vrot.slane %v2435, %v2444
      %v2447 = vunpack.c.l.s4 1966171168
      %v2448 = vunpack.c.0.s8 %v2447
      %v2449 = vlaneseq
      %v2450 = vshrl.u32 %v2449, 7
      %v2451 = vsub.s32 %v2448, %v2450
      %v2452 = vrot.slane %v2437, %v2451
      %v2454 = vunpack.c.l.s4 1966171168
      %v2455 = vunpack.c.0.s8 %v2454
      %v2456 = vlaneseq
      %v2457 = vshrl.u32 %v2456, 7
      %v2458 = vsub.s32 %v2455, %v2457
      %v2459 = vrot.slane %v2436, %v2458
      %v2461 = vunpack.c.l.s4 1966171168
      %v2462 = vunpack.c.0.s8 %v2461
      %v2463 = vlaneseq
      %v2464 = vshrl.u32 %v2463, 7
      %v2465 = vsub.s32 %v2462, %v2464
      %v2466 = vrot.slane %v2438, %v2465
      %v2467 = vcombine.high %v2445, %v2445
      %v2468 = vcombine.high %v2452, %v2452
      %v2469 = vcombine.high %v2459, %v2459
      %v2470 = vcombine.high %v2466, %v2466
      %v2471 = vlaneseq
      %v2472 = vshrl.u32 %v2471, 7
      %v2473 = vsub.s32 0, %v2472
      %v2474 = vrot.slane %v2445, %v2473
      %v2475 = vlaneseq
      %v2476 = vshrl.u32 %v2475, 7
      %v2477 = vsub.s32 1, %v2476
      %v2478 = vrot.slane %v2445, %v2477
      %v2479 = vlaneseq
      %v2480 = vshrl.u32 %v2479, 7
      %v2481 = vsub.s32 2, %v2480
      %v2482 = vrot.slane %v2445, %v2481
      %v2483 = vlaneseq
      %v2484 = vshrl.u32 %v2483, 7
      %v2485 = vsub.s32 3, %v2484
      %v2486 = vrot.slane %v2445, %v2485
      %v2487 = vlaneseq
      %v2488 = vshrl.u32 %v2487, 7
      %v2489 = vsub.s32 0, %v2488
      %v2490 = vrot.slane %v2459, %v2489
      %v2491 = vlaneseq
      %v2492 = vshrl.u32 %v2491, 7
      %v2493 = vsub.s32 1, %v2492
      %v2494 = vrot.slane %v2459, %v2493
      %v2495 = vlaneseq
      %v2496 = vshrl.u32 %v2495, 7
      %v2497 = vsub.s32 2, %v2496
      %v2498 = vrot.slane %v2459, %v2497
      %v2499 = vlaneseq
      %v2500 = vshrl.u32 %v2499, 7
      %v2501 = vsub.s32 3, %v2500
      %v2502 = vrot.slane %v2459, %v2501
      %v2503 = vlaneseq
      %v2504 = vshrl.u32 %v2503, 7
      %v2505 = vsub.s32 0, %v2504
      %v2506 = vrot.slane %v2467, %v2505
      %v2507 = vlaneseq
      %v2508 = vshrl.u32 %v2507, 7
      %v2509 = vsub.s32 1, %v2508
      %v2510 = vrot.slane %v2467, %v2509
      %v2511 = vlaneseq
      %v2512 = vshrl.u32 %v2511, 7
      %v2513 = vsub.s32 2, %v2512
      %v2514 = vrot.slane %v2467, %v2513
      %v2515 = vlaneseq
      %v2516 = vshrl.u32 %v2515, 7
      %v2517 = vsub.s32 3, %v2516
      %v2518 = vrot.slane %v2467, %v2517
      %v2519 = vlaneseq
      %v2520 = vshrl.u32 %v2519, 7
      %v2521 = vsub.s32 0, %v2520
      %v2522 = vrot.slane %v2469, %v2521
      %v2523 = vlaneseq
      %v2524 = vshrl.u32 %v2523, 7
      %v2525 = vsub.s32 1, %v2524
      %v2526 = vrot.slane %v2469, %v2525
      %v2527 = vlaneseq
      %v2528 = vshrl.u32 %v2527, 7
      %v2529 = vsub.s32 2, %v2528
      %v2530 = vrot.slane %v2469, %v2529
      %v2531 = vlaneseq
      %v2532 = vshrl.u32 %v2531, 7
      %v2533 = vsub.s32 3, %v2532
      %v2534 = vrot.slane %v2469, %v2533
      %v2535 = vlaneseq
      %v2536 = vshrl.u32 %v2535, 7
      %v2537 = vsub.s32 0, %v2536
      %v2538 = vrot.slane %v2452, %v2537
      %v2539 = vlaneseq
      %v2540 = vshrl.u32 %v2539, 7
      %v2541 = vsub.s32 1, %v2540
      %v2542 = vrot.slane %v2452, %v2541
      %v2543 = vlaneseq
      %v2544 = vshrl.u32 %v2543, 7
      %v2545 = vsub.s32 2, %v2544
      %v2546 = vrot.slane %v2452, %v2545
      %v2547 = vlaneseq
      %v2548 = vshrl.u32 %v2547, 7
      %v2549 = vsub.s32 3, %v2548
      %v2550 = vrot.slane %v2452, %v2549
      %v2551 = vlaneseq
      %v2552 = vshrl.u32 %v2551, 7
      %v2553 = vsub.s32 0, %v2552
      %v2554 = vrot.slane %v2466, %v2553
      %v2555 = vlaneseq
      %v2556 = vshrl.u32 %v2555, 7
      %v2557 = vsub.s32 1, %v2556
      %v2558 = vrot.slane %v2466, %v2557
      %v2559 = vlaneseq
      %v2560 = vshrl.u32 %v2559, 7
      %v2561 = vsub.s32 2, %v2560
      %v2562 = vrot.slane %v2466, %v2561
      %v2563 = vlaneseq
      %v2564 = vshrl.u32 %v2563, 7
      %v2565 = vsub.s32 3, %v2564
      %v2566 = vrot.slane %v2466, %v2565
      %v2567 = vlaneseq
      %v2568 = vshrl.u32 %v2567, 7
      %v2569 = vsub.s32 0, %v2568
      %v2570 = vrot.slane %v2468, %v2569
      %v2571 = vlaneseq
      %v2572 = vshrl.u32 %v2571, 7
      %v2573 = vsub.s32 1, %v2572
      %v2574 = vrot.slane %v2468, %v2573
      %v2575 = vlaneseq
      %v2576 = vshrl.u32 %v2575, 7
      %v2577 = vsub.s32 2, %v2576
      %v2578 = vrot.slane %v2468, %v2577
      %v2579 = vlaneseq
      %v2580 = vshrl.u32 %v2579, 7
      %v2581 = vsub.s32 3, %v2580
      %v2582 = vrot.slane %v2468, %v2581
      %v2583 = vlaneseq
      %v2584 = vshrl.u32 %v2583, 7
      %v2585 = vsub.s32 0, %v2584
      %v2586 = vrot.slane %v2470, %v2585
      %v2587 = vlaneseq
      %v2588 = vshrl.u32 %v2587, 7
      %v2589 = vsub.s32 1, %v2588
      %v2590 = vrot.slane %v2470, %v2589
      %v2591 = vlaneseq
      %v2592 = vshrl.u32 %v2591, 7
      %v2593 = vsub.s32 2, %v2592
      %v2594 = vrot.slane %v2470, %v2593
      %v2595 = vlaneseq
      %v2596 = vshrl.u32 %v2595, 7
      %v2597 = vsub.s32 3, %v2596
      %v2598 = vrot.slane %v2470, %v2597
      %v2631 = vadd.f32 %v2208, %v2474
      %v2632 = vadd.f32 %v2210, %v2478
      %v2633 = vadd.f32 %v2321, %v2482
      %v2634 = vadd.f32 %v2323, %v2486
      %v2635 = vadd.f32 %v2212, %v2474
      %v2636 = vadd.f32 %v2214, %v2478
      %v2637 = vadd.f32 %v2325, %v2482
      %v2638 = vadd.f32 %v2327, %v2486
      %v2639 = vadd.f32 %v2218, %v2490
      %v2640 = vadd.f32 %v2220, %v2494
      %v2641 = vadd.f32 %v2331, %v2498
      %v2642 = vadd.f32 %v2333, %v2502
      %v2643 = vadd.f32 %v2222, %v2490
      %v2644 = vadd.f32 %v2224, %v2494
      %v2645 = vadd.f32 %v2335, %v2498
      %v2646 = vadd.f32 %v2337, %v2502
      %v2647 = vadd.f32 %v2228, %v2506
      %v2648 = vadd.f32 %v2230, %v2510
      %v2649 = vadd.f32 %v2341, %v2514
      %v2650 = vadd.f32 %v2343, %v2518
      %v2651 = vadd.f32 %v2232, %v2506
      %v2652 = vadd.f32 %v2234, %v2510
      %v2653 = vadd.f32 %v2345, %v2514
      %v2654 = vadd.f32 %v2347, %v2518
      %v2655 = vadd.f32 %v2238, %v2522
      %v2656 = vadd.f32 %v2240, %v2526
      %v2657 = vadd.f32 %v2351, %v2530
      %v2658 = vadd.f32 %v2353, %v2534
      %v2659 = vadd.f32 %v2242, %v2522
      %v2660 = vadd.f32 %v2244, %v2526
      %v2661 = vadd.f32 %v2355, %v2530
      %v2662 = vadd.f32 %v2357, %v2534
      %v2663 = vadd.f32 %v2248, %v2538
      %v2664 = vadd.f32 %v2250, %v2542
      %v2665 = vadd.f32 %v2361, %v2546
      %v2666 = vadd.f32 %v2363, %v2550
      %v2667 = vadd.f32 %v2252, %v2538
      %v2668 = vadd.f32 %v2254, %v2542
      %v2669 = vadd.f32 %v2365, %v2546
      %v2670 = vadd.f32 %v2367, %v2550
      %v2671 = vadd.f32 %v2258, %v2554
      %v2672 = vadd.f32 %v2260, %v2558
      %v2673 = vadd.f32 %v2371, %v2562
      %v2674 = vadd.f32 %v2373, %v2566
      %v2675 = vadd.f32 %v2262, %v2554
      %v2676 = vadd.f32 %v2264, %v2558
      %v2677 = vadd.f32 %v2375, %v2562
      %v2678 = vadd.f32 %v2377, %v2566
      %v2679 = vadd.f32 %v2268, %v2570
      %v2680 = vadd.f32 %v2270, %v2574
      %v2681 = vadd.f32 %v2381, %v2578
      %v2682 = vadd.f32 %v2383, %v2582
      %v2683 = vadd.f32 %v2272, %v2570
      %v2684 = vadd.f32 %v2274, %v2574
      %v2685 = vadd.f32 %v2385, %v2578
      %v2686 = vadd.f32 %v2387, %v2582
      %v2687 = vadd.f32 %v2278, %v2586
      %v2688 = vadd.f32 %v2280, %v2590
      %v2689 = vadd.f32 %v2391, %v2594
      %v2690 = vadd.f32 %v2393, %v2598
      %v2691 = vadd.f32 %v2282, %v2586
      %v2692 = vadd.f32 %v2284, %v2590
      %v2693 = vadd.f32 %v2395, %v2594
      %v2694 = vadd.f32 %v2397, %v2598
      %v2695 = vld [vmem:[%s10] sm:$0xf]
      %v2697 = vlaneseq
      %v2698 = vshrl.u32 %v2697, 7
      %v2699 = vsub.s32 0, %v2698
      %v2700 = vrot.slane %v2695, %v2699
      %v2701 = vlaneseq
      %v2702 = vshrl.u32 %v2701, 7
      %v2703 = vsub.s32 1, %v2702
      %v2704 = vrot.slane %v2695, %v2703
      %v2705 = vlaneseq
      %v2706 = vshrl.u32 %v2705, 7
      %v2707 = vsub.s32 2, %v2706
      %v2708 = vrot.slane %v2695, %v2707
      %v2709 = vlaneseq
      %v2710 = vshrl.u32 %v2709, 7
      %v2711 = vsub.s32 3, %v2710
      %v2712 = vrot.slane %v2695, %v2711
      %v2717 = vadd.f32 %v2631, %v2700
      %v2718 = vadd.f32 %v2632, %v2704
      %v2719 = vadd.f32 %v2633, %v2708
      %v2720 = vadd.f32 %v2634, %v2712
      %v2721 = vadd.f32 %v2635, %v2700
      %v2722 = vadd.f32 %v2636, %v2704
      %v2723 = vadd.f32 %v2637, %v2708
      %v2724 = vadd.f32 %v2638, %v2712
      %v2725 = vadd.f32 %v2639, %v2700
      %v2726 = vadd.f32 %v2640, %v2704
      %v2727 = vadd.f32 %v2641, %v2708
      %v2728 = vadd.f32 %v2642, %v2712
      %v2729 = vadd.f32 %v2643, %v2700
      %v2730 = vadd.f32 %v2644, %v2704
      %v2731 = vadd.f32 %v2645, %v2708
      %v2732 = vadd.f32 %v2646, %v2712
      %v2733 = vadd.f32 %v2647, %v2700
      %v2734 = vadd.f32 %v2648, %v2704
      %v2735 = vadd.f32 %v2649, %v2708
      %v2736 = vadd.f32 %v2650, %v2712
      %v2737 = vadd.f32 %v2651, %v2700
      %v2738 = vadd.f32 %v2652, %v2704
      %v2739 = vadd.f32 %v2653, %v2708
      %v2740 = vadd.f32 %v2654, %v2712
      %v2741 = vadd.f32 %v2655, %v2700
      %v2742 = vadd.f32 %v2656, %v2704
      %v2743 = vadd.f32 %v2657, %v2708
      %v2744 = vadd.f32 %v2658, %v2712
      %v2745 = vadd.f32 %v2659, %v2700
      %v2746 = vadd.f32 %v2660, %v2704
      %v2747 = vadd.f32 %v2661, %v2708
      %v2748 = vadd.f32 %v2662, %v2712
      %v2749 = vadd.f32 %v2663, %v2700
      %v2750 = vadd.f32 %v2664, %v2704
      %v2751 = vadd.f32 %v2665, %v2708
      %v2752 = vadd.f32 %v2666, %v2712
      %v2753 = vadd.f32 %v2667, %v2700
      %v2754 = vadd.f32 %v2668, %v2704
      %v2755 = vadd.f32 %v2669, %v2708
      %v2756 = vadd.f32 %v2670, %v2712
      %v2757 = vadd.f32 %v2671, %v2700
      %v2758 = vadd.f32 %v2672, %v2704
      %v2759 = vadd.f32 %v2673, %v2708
      %v2760 = vadd.f32 %v2674, %v2712
      %v2761 = vadd.f32 %v2675, %v2700
      %v2762 = vadd.f32 %v2676, %v2704
      %v2763 = vadd.f32 %v2677, %v2708
      %v2764 = vadd.f32 %v2678, %v2712
      %v2765 = vadd.f32 %v2679, %v2700
      %v2766 = vadd.f32 %v2680, %v2704
      %v2767 = vadd.f32 %v2681, %v2708
      %v2768 = vadd.f32 %v2682, %v2712
      %v2769 = vadd.f32 %v2683, %v2700
      %v2770 = vadd.f32 %v2684, %v2704
      %v2771 = vadd.f32 %v2685, %v2708
      %v2772 = vadd.f32 %v2686, %v2712
      %v2773 = vadd.f32 %v2687, %v2700
      %v2774 = vadd.f32 %v2688, %v2704
      %v2775 = vadd.f32 %v2689, %v2708
      %v2776 = vadd.f32 %v2690, %v2712
      %v2777 = vadd.f32 %v2691, %v2700
      %v2778 = vadd.f32 %v2692, %v2704
      %v2779 = vadd.f32 %v2693, %v2708
      %v2780 = vadd.f32 %v2694, %v2712
      %v2781 = vld [vmem:[%s11] sm:$0xf]
      %v2783 = vlaneseq
      %v2784 = vshrl.u32 %v2783, 7
      %v2785 = vsub.s32 0, %v2784
      %v2786 = vrot.slane %v2781, %v2785
      %v2787 = vlaneseq
      %v2788 = vshrl.u32 %v2787, 7
      %v2789 = vsub.s32 1, %v2788
      %v2790 = vrot.slane %v2781, %v2789
      %v2791 = vlaneseq
      %v2792 = vshrl.u32 %v2791, 7
      %v2793 = vsub.s32 2, %v2792
      %v2794 = vrot.slane %v2781, %v2793
      %v2795 = vlaneseq
      %v2796 = vshrl.u32 %v2795, 7
      %v2797 = vsub.s32 3, %v2796
      %v2798 = vrot.slane %v2781, %v2797
      %v2803 = vmul.f32 %v2717, %v2786
      %v2804 = vmul.f32 %v2718, %v2790
      %v2805 = vmul.f32 %v2719, %v2794
      %v2806 = vmul.f32 %v2720, %v2798
      %v2807 = vmul.f32 %v2721, %v2786
      %v2808 = vmul.f32 %v2722, %v2790
      %v2809 = vmul.f32 %v2723, %v2794
      %v2810 = vmul.f32 %v2724, %v2798
      %v2811 = vmul.f32 %v2725, %v2786
      %v2812 = vmul.f32 %v2726, %v2790
      %v2813 = vmul.f32 %v2727, %v2794
      %v2814 = vmul.f32 %v2728, %v2798
      %v2815 = vmul.f32 %v2729, %v2786
      %v2816 = vmul.f32 %v2730, %v2790
      %v2817 = vmul.f32 %v2731, %v2794
      %v2818 = vmul.f32 %v2732, %v2798
      %v2819 = vmul.f32 %v2733, %v2786
      %v2820 = vmul.f32 %v2734, %v2790
      %v2821 = vmul.f32 %v2735, %v2794
      %v2822 = vmul.f32 %v2736, %v2798
      %v2823 = vmul.f32 %v2737, %v2786
      %v2824 = vmul.f32 %v2738, %v2790
      %v2825 = vmul.f32 %v2739, %v2794
      %v2826 = vmul.f32 %v2740, %v2798
      %v2827 = vmul.f32 %v2741, %v2786
      %v2828 = vmul.f32 %v2742, %v2790
      %v2829 = vmul.f32 %v2743, %v2794
      %v2830 = vmul.f32 %v2744, %v2798
      %v2831 = vmul.f32 %v2745, %v2786
      %v2832 = vmul.f32 %v2746, %v2790
      %v2833 = vmul.f32 %v2747, %v2794
      %v2834 = vmul.f32 %v2748, %v2798
      %v2835 = vmul.f32 %v2749, %v2786
      %v2836 = vmul.f32 %v2750, %v2790
      %v2837 = vmul.f32 %v2751, %v2794
      %v2838 = vmul.f32 %v2752, %v2798
      %v2839 = vmul.f32 %v2753, %v2786
      %v2840 = vmul.f32 %v2754, %v2790
      %v2841 = vmul.f32 %v2755, %v2794
      %v2842 = vmul.f32 %v2756, %v2798
      %v2843 = vmul.f32 %v2757, %v2786
      %v2844 = vmul.f32 %v2758, %v2790
      %v2845 = vmul.f32 %v2759, %v2794
      %v2846 = vmul.f32 %v2760, %v2798
      %v2847 = vmul.f32 %v2761, %v2786
      %v2848 = vmul.f32 %v2762, %v2790
      %v2849 = vmul.f32 %v2763, %v2794
      %v2850 = vmul.f32 %v2764, %v2798
      %v2851 = vmul.f32 %v2765, %v2786
      %v2852 = vmul.f32 %v2766, %v2790
      %v2853 = vmul.f32 %v2767, %v2794
      %v2854 = vmul.f32 %v2768, %v2798
      %v2855 = vmul.f32 %v2769, %v2786
      %v2856 = vmul.f32 %v2770, %v2790
      %v2857 = vmul.f32 %v2771, %v2794
      %v2858 = vmul.f32 %v2772, %v2798
      %v2859 = vmul.f32 %v2773, %v2786
      %v2860 = vmul.f32 %v2774, %v2790
      %v2861 = vmul.f32 %v2775, %v2794
      %v2862 = vmul.f32 %v2776, %v2798
      %v2863 = vmul.f32 %v2777, %v2786
      %v2864 = vmul.f32 %v2778, %v2790
      %v2865 = vmul.f32 %v2779, %v2794
      %v2866 = vmul.f32 %v2780, %v2798
      %v2867 = vld [vmem:[%s12] sm:$0xf]
      %v2869 = vlaneseq
      %v2870 = vshrl.u32 %v2869, 7
      %v2871 = vsub.s32 0, %v2870
      %v2872 = vrot.slane %v2867, %v2871
      %v2873 = vlaneseq
      %v2874 = vshrl.u32 %v2873, 7
      %v2875 = vsub.s32 1, %v2874
      %v2876 = vrot.slane %v2867, %v2875
      %v2877 = vlaneseq
      %v2878 = vshrl.u32 %v2877, 7
      %v2879 = vsub.s32 2, %v2878
      %v2880 = vrot.slane %v2867, %v2879
      %v2881 = vlaneseq
      %v2882 = vshrl.u32 %v2881, 7
      %v2883 = vsub.s32 3, %v2882
      %v2884 = vrot.slane %v2867, %v2883
      %v2889 = vadd.f32 %v2803, %v2872
      %v2890 = vadd.f32 %v2804, %v2876
      %v2891 = vadd.f32 %v2805, %v2880
      %v2892 = vadd.f32 %v2806, %v2884
      %v2893 = vadd.f32 %v2807, %v2872
      %v2894 = vadd.f32 %v2808, %v2876
      %v2895 = vadd.f32 %v2809, %v2880
      %v2896 = vadd.f32 %v2810, %v2884
      %v2897 = vadd.f32 %v2811, %v2872
      %v2898 = vadd.f32 %v2812, %v2876
      %v2899 = vadd.f32 %v2813, %v2880
      %v2900 = vadd.f32 %v2814, %v2884
      %v2901 = vadd.f32 %v2815, %v2872
      %v2902 = vadd.f32 %v2816, %v2876
      %v2903 = vadd.f32 %v2817, %v2880
      %v2904 = vadd.f32 %v2818, %v2884
      %v2905 = vadd.f32 %v2819, %v2872
      %v2906 = vadd.f32 %v2820, %v2876
      %v2907 = vadd.f32 %v2821, %v2880
      %v2908 = vadd.f32 %v2822, %v2884
      %v2909 = vadd.f32 %v2823, %v2872
      %v2910 = vadd.f32 %v2824, %v2876
      %v2911 = vadd.f32 %v2825, %v2880
      %v2912 = vadd.f32 %v2826, %v2884
      %v2913 = vadd.f32 %v2827, %v2872
      %v2914 = vadd.f32 %v2828, %v2876
      %v2915 = vadd.f32 %v2829, %v2880
      %v2916 = vadd.f32 %v2830, %v2884
      %v2917 = vadd.f32 %v2831, %v2872
      %v2918 = vadd.f32 %v2832, %v2876
      %v2919 = vadd.f32 %v2833, %v2880
      %v2920 = vadd.f32 %v2834, %v2884
      %v2921 = vadd.f32 %v2835, %v2872
      %v2922 = vadd.f32 %v2836, %v2876
      %v2923 = vadd.f32 %v2837, %v2880
      %v2924 = vadd.f32 %v2838, %v2884
      %v2925 = vadd.f32 %v2839, %v2872
      %v2926 = vadd.f32 %v2840, %v2876
      %v2927 = vadd.f32 %v2841, %v2880
      %v2928 = vadd.f32 %v2842, %v2884
      %v2929 = vadd.f32 %v2843, %v2872
      %v2930 = vadd.f32 %v2844, %v2876
      %v2931 = vadd.f32 %v2845, %v2880
      %v2932 = vadd.f32 %v2846, %v2884
      %v2933 = vadd.f32 %v2847, %v2872
      %v2934 = vadd.f32 %v2848, %v2876
      %v2935 = vadd.f32 %v2849, %v2880
      %v2936 = vadd.f32 %v2850, %v2884
      %v2937 = vadd.f32 %v2851, %v2872
      %v2938 = vadd.f32 %v2852, %v2876
      %v2939 = vadd.f32 %v2853, %v2880
      %v2940 = vadd.f32 %v2854, %v2884
      %v2941 = vadd.f32 %v2855, %v2872
      %v2942 = vadd.f32 %v2856, %v2876
      %v2943 = vadd.f32 %v2857, %v2880
      %v2944 = vadd.f32 %v2858, %v2884
      %v2945 = vadd.f32 %v2859, %v2872
      %v2946 = vadd.f32 %v2860, %v2876
      %v2947 = vadd.f32 %v2861, %v2880
      %v2948 = vadd.f32 %v2862, %v2884
      %v2949 = vadd.f32 %v2863, %v2872
      %v2950 = vadd.f32 %v2864, %v2876
      %v2951 = vadd.f32 %v2865, %v2880
      %v2952 = vadd.f32 %v2866, %v2884
      %v2953 = vmax.f32 %v2889, 0.0
      %v2954 = vmax.f32 %v2890, 0.0
      %v2955 = vmax.f32 %v2891, 0.0
      %v2956 = vmax.f32 %v2892, 0.0
      %v2957 = vmax.f32 %v2893, 0.0
      %v2958 = vmax.f32 %v2894, 0.0
      %v2959 = vmax.f32 %v2895, 0.0
      %v2960 = vmax.f32 %v2896, 0.0
      %v2961 = vmax.f32 %v2897, 0.0
      %v2962 = vmax.f32 %v2898, 0.0
      %v2963 = vmax.f32 %v2899, 0.0
      %v2964 = vmax.f32 %v2900, 0.0
      %v2965 = vmax.f32 %v2901, 0.0
      %v2966 = vmax.f32 %v2902, 0.0
      %v2967 = vmax.f32 %v2903, 0.0
      %v2968 = vmax.f32 %v2904, 0.0
      %v2969 = vmax.f32 %v2905, 0.0
      %v2970 = vmax.f32 %v2906, 0.0
      %v2971 = vmax.f32 %v2907, 0.0
      %v2972 = vmax.f32 %v2908, 0.0
      %v2973 = vmax.f32 %v2909, 0.0
      %v2974 = vmax.f32 %v2910, 0.0
      %v2975 = vmax.f32 %v2911, 0.0
      %v2976 = vmax.f32 %v2912, 0.0
      %v2977 = vmax.f32 %v2913, 0.0
      %v2978 = vmax.f32 %v2914, 0.0
      %v2979 = vmax.f32 %v2915, 0.0
      %v2980 = vmax.f32 %v2916, 0.0
      %v2981 = vmax.f32 %v2917, 0.0
      %v2982 = vmax.f32 %v2918, 0.0
      %v2983 = vmax.f32 %v2919, 0.0
      %v2984 = vmax.f32 %v2920, 0.0
      %v2985 = vmax.f32 %v2921, 0.0
      %v2986 = vmax.f32 %v2922, 0.0
      %v2987 = vmax.f32 %v2923, 0.0
      %v2988 = vmax.f32 %v2924, 0.0
      %v2989 = vmax.f32 %v2925, 0.0
      %v2990 = vmax.f32 %v2926, 0.0
      %v2991 = vmax.f32 %v2927, 0.0
      %v2992 = vmax.f32 %v2928, 0.0
      %v2993 = vmax.f32 %v2929, 0.0
      %v2994 = vmax.f32 %v2930, 0.0
      %v2995 = vmax.f32 %v2931, 0.0
      %v2996 = vmax.f32 %v2932, 0.0
      %v2997 = vmax.f32 %v2933, 0.0
      %v2998 = vmax.f32 %v2934, 0.0
      %v2999 = vmax.f32 %v2935, 0.0
      %v3000 = vmax.f32 %v2936, 0.0
      %v3001 = vmax.f32 %v2937, 0.0
      %v3002 = vmax.f32 %v2938, 0.0
      %v3003 = vmax.f32 %v2939, 0.0
      %v3004 = vmax.f32 %v2940, 0.0
      %v3005 = vmax.f32 %v2941, 0.0
      %v3006 = vmax.f32 %v2942, 0.0
      %v3007 = vmax.f32 %v2943, 0.0
      %v3008 = vmax.f32 %v2944, 0.0
      %v3009 = vmax.f32 %v2945, 0.0
      %v3010 = vmax.f32 %v2946, 0.0
      %v3011 = vmax.f32 %v2947, 0.0
      %v3012 = vmax.f32 %v2948, 0.0
      %v3013 = vmax.f32 %v2949, 0.0
      %v3014 = vmax.f32 %v2950, 0.0
      %v3015 = vmax.f32 %v2951, 0.0
      %v3016 = vmax.f32 %v2952, 0.0
      %v3017 = vpack.c.bf16 %v2957, %v2953
      %v3018 = vpack.c.bf16 %v2958, %v2954
      %v3019 = vpack.c.bf16 %v2959, %v2955
      %v3020 = vpack.c.bf16 %v2960, %v2956
      %v3021 = vpack.c.bf16 %v2965, %v2961
      %v3022 = vpack.c.bf16 %v2966, %v2962
      %v3023 = vpack.c.bf16 %v2967, %v2963
      %v3024 = vpack.c.bf16 %v2968, %v2964
      %v3025 = vpack.c.bf16 %v2973, %v2969
      %v3026 = vpack.c.bf16 %v2974, %v2970
      %v3027 = vpack.c.bf16 %v2975, %v2971
      %v3028 = vpack.c.bf16 %v2976, %v2972
      %v3029 = vpack.c.bf16 %v2981, %v2977
      %v3030 = vpack.c.bf16 %v2982, %v2978
      %v3031 = vpack.c.bf16 %v2983, %v2979
      %v3032 = vpack.c.bf16 %v2984, %v2980
      %v3033 = vpack.c.bf16 %v2989, %v2985
      %v3034 = vpack.c.bf16 %v2990, %v2986
      %v3035 = vpack.c.bf16 %v2991, %v2987
      %v3036 = vpack.c.bf16 %v2992, %v2988
      %v3037 = vpack.c.bf16 %v2997, %v2993
      %v3038 = vpack.c.bf16 %v2998, %v2994
      %v3039 = vpack.c.bf16 %v2999, %v2995
      %v3040 = vpack.c.bf16 %v3000, %v2996
      %v3041 = vpack.c.bf16 %v3005, %v3001
      %v3042 = vpack.c.bf16 %v3006, %v3002
      %v3043 = vpack.c.bf16 %v3007, %v3003
      %v3044 = vpack.c.bf16 %v3008, %v3004
      %v3045 = vpack.c.bf16 %v3013, %v3009
      %v3046 = vpack.c.bf16 %v3014, %v3010
      %v3047 = vpack.c.bf16 %v3015, %v3011
      %v3048 = vpack.c.bf16 %v3016, %v3012
      %v3049 = vld [vmem:[%s13] sm:$0xf]
      %v3050 = vld [vmem:[%s13 + $0x4] sm:$0xf]
      %v3051 = vld [vmem:[%s13 + $0x8] sm:$0xf]
      %v3052 = vld [vmem:[%s13 + $0xc] sm:$0xf]
      %v3053 = vld [vmem:[%s13 + $0x10] sm:$0xf]
      %v3054 = vld [vmem:[%s13 + $0x14] sm:$0xf]
      %v3055 = vld [vmem:[%s13 + $0x18] sm:$0xf]
      %v3056 = vld [vmem:[%s13 + $0x1c] sm:$0xf]
      %v3057 = vld [vmem:[%s13 + $0x20] sm:$0xf]
      %v3058 = vld [vmem:[%s13 + $0x24] sm:$0xf]
      %v3059 = vld [vmem:[%s13 + $0x28] sm:$0xf]
      %v3060 = vld [vmem:[%s13 + $0x2c] sm:$0xf]
      %v3061 = vld [vmem:[%s13 + $0x30] sm:$0xf]
      %v3062 = vld [vmem:[%s13 + $0x34] sm:$0xf]
      %v3063 = vld [vmem:[%s13 + $0x38] sm:$0xf]
      %v3064 = vld [vmem:[%s13 + $0x3c] sm:$0xf]
      %v3065 = vld [vmem:[%s13 + $0x40] sm:$0xf]
      %v3066 = vld [vmem:[%s13 + $0x44] sm:$0xf]
      %v3067 = vld [vmem:[%s13 + $0x48] sm:$0xf]
      %v3068 = vld [vmem:[%s13 + $0x4c] sm:$0xf]
      %v3069 = vld [vmem:[%s13 + $0x50] sm:$0xf]
      %v3070 = vld [vmem:[%s13 + $0x54] sm:$0xf]
      %v3071 = vld [vmem:[%s13 + $0x58] sm:$0xf]
      %v3072 = vld [vmem:[%s13 + $0x5c] sm:$0xf]
      %v3073 = vld [vmem:[%s13 + $0x60] sm:$0xf]
      %v3074 = vld [vmem:[%s13 + $0x64] sm:$0xf]
      %v3075 = vld [vmem:[%s13 + $0x68] sm:$0xf]
      %v3076 = vld [vmem:[%s13 + $0x6c] sm:$0xf]
      %v3077 = vld [vmem:[%s13 + $0x70] sm:$0xf]
      %v3078 = vld [vmem:[%s13 + $0x74] sm:$0xf]
      %v3079 = vld [vmem:[%s13 + $0x78] sm:$0xf]
      %v3080 = vld [vmem:[%s13 + $0x7c] sm:$0xf]
      %v3081 = vld [vmem:[%s13 + $0x80] sm:$0xf]
      %v3082 = vld [vmem:[%s13 + $0x84] sm:$0xf]
      %v3083 = vld [vmem:[%s13 + $0x88] sm:$0xf]
      %v3084 = vld [vmem:[%s13 + $0x8c] sm:$0xf]
      %v3085 = vld [vmem:[%s13 + $0x90] sm:$0xf]
      %v3086 = vld [vmem:[%s13 + $0x94] sm:$0xf]
      %v3087 = vld [vmem:[%s13 + $0x98] sm:$0xf]
      %v3088 = vld [vmem:[%s13 + $0x9c] sm:$0xf]
      %v3089 = vld [vmem:[%s13 + $0xa0] sm:$0xf]
      %v3090 = vld [vmem:[%s13 + $0xa4] sm:$0xf]
      %v3091 = vld [vmem:[%s13 + $0xa8] sm:$0xf]
      %v3092 = vld [vmem:[%s13 + $0xac] sm:$0xf]
      %v3093 = vld [vmem:[%s13 + $0xb0] sm:$0xf]
      %v3094 = vld [vmem:[%s13 + $0xb4] sm:$0xf]
      %v3095 = vld [vmem:[%s13 + $0xb8] sm:$0xf]
      %v3096 = vld [vmem:[%s13 + $0xbc] sm:$0xf]
      %v3097 = vld [vmem:[%s13 + $0xc0] sm:$0xf]
      %v3098 = vld [vmem:[%s13 + $0xc4] sm:$0xf]
      %v3099 = vld [vmem:[%s13 + $0xc8] sm:$0xf]
      %v3100 = vld [vmem:[%s13 + $0xcc] sm:$0xf]
      %v3101 = vld [vmem:[%s13 + $0xd0] sm:$0xf]
      %v3102 = vld [vmem:[%s13 + $0xd4] sm:$0xf]
      %v3103 = vld [vmem:[%s13 + $0xd8] sm:$0xf]
      %v3104 = vld [vmem:[%s13 + $0xdc] sm:$0xf]
      %v3105 = vld [vmem:[%s13 + $0xe0] sm:$0xf]
      %v3106 = vld [vmem:[%s13 + $0xe4] sm:$0xf]
      %v3107 = vld [vmem:[%s13 + $0xe8] sm:$0xf]
      %v3108 = vld [vmem:[%s13 + $0xec] sm:$0xf]
      %v3109 = vld [vmem:[%s13 + $0xf0] sm:$0xf]
      %v3110 = vld [vmem:[%s13 + $0xf4] sm:$0xf]
      %v3111 = vld [vmem:[%s13 + $0xf8] sm:$0xf]
      %v3112 = vld [vmem:[%s13 + $0xfc] sm:$0xf]
      %v3113 = vld [vmem:[%s14] sm:$0x1]
      %v3115 = vlaneseq
      %v3116 = vshrl.u32 %v3115, 7
      %v3117 = vsub.s32 0, %v3116
      %v3118 = vrot.slane %v3113, %v3117
      %v3184 = vunpack.c.l.b16 %v3049
      %v3185 = vunpack.c.l.b16 %v3050
      %v3186 = vunpack.c.l.b16 %v3051
      %v3187 = vunpack.c.l.b16 %v3052
      %v3188 = vunpack.c.l.b16 %v3053
      %v3189 = vunpack.c.l.b16 %v3054
      %v3190 = vunpack.c.l.b16 %v3055
      %v3191 = vunpack.c.l.b16 %v3056
      %v3192 = vunpack.c.l.b16 %v3057
      %v3193 = vunpack.c.l.b16 %v3058
      %v3194 = vunpack.c.l.b16 %v3059
      %v3195 = vunpack.c.l.b16 %v3060
      %v3196 = vunpack.c.l.b16 %v3061
      %v3197 = vunpack.c.l.b16 %v3062
      %v3198 = vunpack.c.l.b16 %v3063
      %v3199 = vunpack.c.l.b16 %v3064
      %v3200 = vunpack.c.l.b16 %v3065
      %v3201 = vunpack.c.l.b16 %v3066
      %v3202 = vunpack.c.l.b16 %v3067
      %v3203 = vunpack.c.l.b16 %v3068
      %v3204 = vunpack.c.l.b16 %v3069
      %v3205 = vunpack.c.l.b16 %v3070
      %v3206 = vunpack.c.l.b16 %v3071
      %v3207 = vunpack.c.l.b16 %v3072
      %v3208 = vunpack.c.l.b16 %v3073
      %v3209 = vunpack.c.l.b16 %v3074
      %v3210 = vunpack.c.l.b16 %v3075
      %v3211 = vunpack.c.l.b16 %v3076
      %v3212 = vunpack.c.l.b16 %v3077
      %v3213 = vunpack.c.l.b16 %v3078
      %v3214 = vunpack.c.l.b16 %v3079
      %v3215 = vunpack.c.l.b16 %v3080
      %v3216 = vunpack.c.l.b16 %v3081
      %v3217 = vunpack.c.l.b16 %v3082
      %v3218 = vunpack.c.l.b16 %v3083
      %v3219 = vunpack.c.l.b16 %v3084
      %v3220 = vunpack.c.l.b16 %v3085
      %v3221 = vunpack.c.l.b16 %v3086
      %v3222 = vunpack.c.l.b16 %v3087
      %v3223 = vunpack.c.l.b16 %v3088
      %v3224 = vunpack.c.l.b16 %v3089
      %v3225 = vunpack.c.l.b16 %v3090
      %v3226 = vunpack.c.l.b16 %v3091
      %v3227 = vunpack.c.l.b16 %v3092
      %v3228 = vunpack.c.l.b16 %v3093
      %v3229 = vunpack.c.l.b16 %v3094
      %v3230 = vunpack.c.l.b16 %v3095
      %v3231 = vunpack.c.l.b16 %v3096
      %v3232 = vunpack.c.l.b16 %v3097
      %v3233 = vunpack.c.l.b16 %v3098
      %v3234 = vunpack.c.l.b16 %v3099
      %v3235 = vunpack.c.l.b16 %v3100
      %v3236 = vunpack.c.l.b16 %v3101
      %v3237 = vunpack.c.l.b16 %v3102
      %v3238 = vunpack.c.l.b16 %v3103
      %v3239 = vunpack.c.l.b16 %v3104
      %v3240 = vunpack.c.l.b16 %v3105
      %v3241 = vunpack.c.l.b16 %v3106
      %v3242 = vunpack.c.l.b16 %v3107
      %v3243 = vunpack.c.l.b16 %v3108
      %v3244 = vunpack.c.l.b16 %v3109
      %v3245 = vunpack.c.l.b16 %v3110
      %v3246 = vunpack.c.l.b16 %v3111
      %v3247 = vunpack.c.l.b16 %v3112
      %v3248 = vpack.c.b16 %v3185, %v3184
      %v3249 = vpack.c.b16 %v3187, %v3186
      %v3250 = vpack.c.b16 %v3189, %v3188
      %v3251 = vpack.c.b16 %v3191, %v3190
      %v3252 = vpack.c.b16 %v3193, %v3192
      %v3253 = vpack.c.b16 %v3195, %v3194
      %v3254 = vpack.c.b16 %v3197, %v3196
      %v3255 = vpack.c.b16 %v3199, %v3198
      %v3256 = vpack.c.b16 %v3201, %v3200
      %v3257 = vpack.c.b16 %v3203, %v3202
      %v3258 = vpack.c.b16 %v3205, %v3204
      %v3259 = vpack.c.b16 %v3207, %v3206
      %v3260 = vpack.c.b16 %v3209, %v3208
      %v3261 = vpack.c.b16 %v3211, %v3210
      %v3262 = vpack.c.b16 %v3213, %v3212
      %v3263 = vpack.c.b16 %v3215, %v3214
      %v3264 = vpack.c.b16 %v3217, %v3216
      %v3265 = vpack.c.b16 %v3219, %v3218
      %v3266 = vpack.c.b16 %v3221, %v3220
      %v3267 = vpack.c.b16 %v3223, %v3222
      %v3268 = vpack.c.b16 %v3225, %v3224
      %v3269 = vpack.c.b16 %v3227, %v3226
      %v3270 = vpack.c.b16 %v3229, %v3228
      %v3271 = vpack.c.b16 %v3231, %v3230
      %v3272 = vpack.c.b16 %v3233, %v3232
      %v3273 = vpack.c.b16 %v3235, %v3234
      %v3274 = vpack.c.b16 %v3237, %v3236
      %v3275 = vpack.c.b16 %v3239, %v3238
      %v3276 = vpack.c.b16 %v3241, %v3240
      %v3277 = vpack.c.b16 %v3243, %v3242
      %v3278 = vpack.c.b16 %v3245, %v3244
      %v3279 = vpack.c.b16 %v3247, %v3246
      %3312 = vmatprep.subr.bf16.mxu0 0
      %3313 = vmatpush1.bf16.msra.mxu0 %v3255
      %3314 = vmatprep.subr.bf16.mxu0 0
      %3315 = vmatpush1.bf16.msra.mxu0 %v3254
      %3316 = vmatprep.subr.bf16.mxu0 0
      %3317 = vmatpush1.bf16.msra.mxu0 %v3253
      %3318 = vmatprep.subr.bf16.mxu0 0
      %3319 = vmatpush1.bf16.msra.mxu0 %v3252
      %3320 = vmatprep.subr.bf16.mxu0 0
      %3321 = vmatpush1.bf16.msra.mxu0 %v3251
      %3322 = vmatprep.subr.bf16.mxu0 0
      %3323 = vmatpush1.bf16.msra.mxu0 %v3250
      %3324 = vmatprep.subr.bf16.mxu0 0
      %3325 = vmatpush1.bf16.msra.mxu0 %v3249
      %3326 = vmatprep.subr.bf16.mxu0 0
      %3327 = vmatpush1.bf16.msra.mxu0 %v3248
      %3328 = vmatprep.subr.bf16.mxu0 0
      %3329 = vmatpush2.bf16.msra.mxu0 %v3263
      %3330 = vmatprep.subr.bf16.mxu0 0
      %3331 = vmatpush2.bf16.msra.mxu0 %v3262
      %3332 = vmatprep.subr.bf16.mxu0 0
      %3333 = vmatpush2.bf16.msra.mxu0 %v3261
      %3334 = vmatprep.subr.bf16.mxu0 0
      %3335 = vmatpush2.bf16.msra.mxu0 %v3260
      %3336 = vmatprep.subr.bf16.mxu0 0
      %3337 = vmatpush2.bf16.msra.mxu0 %v3259
      %3338 = vmatprep.subr.bf16.mxu0 0
      %3339 = vmatpush2.bf16.msra.mxu0 %v3258
      %3340 = vmatprep.subr.bf16.mxu0 0
      %3341 = vmatpush2.bf16.msra.mxu0 %v3257
      %3342 = vmatprep.subr.bf16.mxu0 0
      %3343 = vmatpush2.bf16.msra.mxu0 %v3256
      %3344 = vmatprep.mubr.bf16.mxu0 %v3018
      %3345 = vmatmul.mubr.bf16.gmra.mxu0 %v3017
      %v3346 = vpop.f32.mrf.mxu0
      %v3347 = vadd.f32 %v3118, %v3346
      %v3348 = vpop.f32.mrf.mxu0
      %v3349 = vpop.f32.mrf.mxu0
      %v3350 = vadd.f32 %v3118, %v3349
      %v3351 = vpop.f32.mrf.mxu0
      %3352 = vmatprep.mubr.bf16.mxu0 %v3022
      %3353 = vmatmul.mubr.bf16.gmra.mxu0 %v3021
      %v3354 = vpop.f32.mrf.mxu0
      %v3355 = vadd.f32 %v3118, %v3354
      %v3356 = vpop.f32.mrf.mxu0
      %v3357 = vpop.f32.mrf.mxu0
      %v3358 = vadd.f32 %v3118, %v3357
      %v3359 = vpop.f32.mrf.mxu0
      %3360 = vmatprep.mubr.bf16.mxu0 %v3026
      %3361 = vmatmul.mubr.bf16.gmra.mxu0 %v3025
      %v3362 = vpop.f32.mrf.mxu0
      %v3363 = vadd.f32 %v3118, %v3362
      %v3364 = vpop.f32.mrf.mxu0
      %v3365 = vpop.f32.mrf.mxu0
      %v3366 = vadd.f32 %v3118, %v3365
      %v3367 = vpop.f32.mrf.mxu0
      %3368 = vmatprep.mubr.bf16.mxu0 %v3030
      %3369 = vmatmul.mubr.bf16.gmra.mxu0 %v3029
      %v3370 = vpop.f32.mrf.mxu0
      %v3371 = vadd.f32 %v3118, %v3370
      %v3372 = vpop.f32.mrf.mxu0
      %v3373 = vpop.f32.mrf.mxu0
      %v3374 = vadd.f32 %v3118, %v3373
      %v3375 = vpop.f32.mrf.mxu0
      %3376 = vmatprep.mubr.bf16.mxu0 %v3034
      %3377 = vmatmul.mubr.bf16.gmra.mxu0 %v3033
      %v3378 = vpop.f32.mrf.mxu0
      %v3379 = vadd.f32 %v3118, %v3378
      %v3380 = vpop.f32.mrf.mxu0
      %v3381 = vpop.f32.mrf.mxu0
      %v3382 = vadd.f32 %v3118, %v3381
      %v3383 = vpop.f32.mrf.mxu0
      %3384 = vmatprep.mubr.bf16.mxu0 %v3038
      %3385 = vmatmul.mubr.bf16.gmra.mxu0 %v3037
      %v3386 = vpop.f32.mrf.mxu0
      %v3387 = vadd.f32 %v3118, %v3386
      %v3388 = vpop.f32.mrf.mxu0
      %v3389 = vpop.f32.mrf.mxu0
      %v3390 = vadd.f32 %v3118, %v3389
      %v3391 = vpop.f32.mrf.mxu0
      %3392 = vmatprep.mubr.bf16.mxu0 %v3042
      %3393 = vmatmul.mubr.bf16.gmra.mxu0 %v3041
      %v3394 = vpop.f32.mrf.mxu0
      %v3395 = vadd.f32 %v3118, %v3394
      %v3396 = vpop.f32.mrf.mxu0
      %v3397 = vpop.f32.mrf.mxu0
      %v3398 = vadd.f32 %v3118, %v3397
      %v3399 = vpop.f32.mrf.mxu0
      %3400 = vmatprep.mubr.bf16.mxu0 %v3046
      %3401 = vmatmul.mubr.bf16.gmra.mxu0 %v3045
      %v3402 = vpop.f32.mrf.mxu0
      %v3403 = vadd.f32 %v3118, %v3402
      %v3404 = vpop.f32.mrf.mxu0
      %v3405 = vpop.f32.mrf.mxu0
      %v3406 = vadd.f32 %v3118, %v3405
      %v3407 = vpop.f32.mrf.mxu0
      %3408 = vdwg.mxu0
      %3409 = vmatprep.subr.bf16.mxu0 0
      %3410 = vmatpush1.bf16.msra.mxu0 %v3271
      %3411 = vmatprep.subr.bf16.mxu0 0
      %3412 = vmatpush1.bf16.msra.mxu0 %v3270
      %3413 = vmatprep.subr.bf16.mxu0 0
      %3414 = vmatpush1.bf16.msra.mxu0 %v3269
      %3415 = vmatprep.subr.bf16.mxu0 0
      %3416 = vmatpush1.bf16.msra.mxu0 %v3268
      %3417 = vmatprep.subr.bf16.mxu0 0
      %3418 = vmatpush1.bf16.msra.mxu0 %v3267
      %3419 = vmatprep.subr.bf16.mxu0 0
      %3420 = vmatpush1.bf16.msra.mxu0 %v3266
      %3421 = vmatprep.subr.bf16.mxu0 0
      %3422 = vmatpush1.bf16.msra.mxu0 %v3265
      %3423 = vmatprep.subr.bf16.mxu0 0
      %3424 = vmatpush1.bf16.msra.mxu0 %v3264
      %3425 = vmatprep.subr.bf16.mxu0 0
      %3426 = vmatpush2.bf16.msra.mxu0 %v3279
      %3427 = vmatprep.subr.bf16.mxu0 0
      %3428 = vmatpush2.bf16.msra.mxu0 %v3278
      %3429 = vmatprep.subr.bf16.mxu0 0
      %3430 = vmatpush2.bf16.msra.mxu0 %v3277
      %3431 = vmatprep.subr.bf16.mxu0 0
      %3432 = vmatpush2.bf16.msra.mxu0 %v3276
      %3433 = vmatprep.subr.bf16.mxu0 0
      %3434 = vmatpush2.bf16.msra.mxu0 %v3275
      %3435 = vmatprep.subr.bf16.mxu0 0
      %3436 = vmatpush2.bf16.msra.mxu0 %v3274
      %3437 = vmatprep.subr.bf16.mxu0 0
      %3438 = vmatpush2.bf16.msra.mxu0 %v3273
      %3439 = vmatprep.subr.bf16.mxu0 0
      %3440 = vmatpush2.bf16.msra.mxu0 %v3272
      %3441 = vmatprep.mubr.bf16.mxu0 %v3020
      %3442 = vmatmul.mubr.bf16.gmra.mxu0 %v3019
      %v3443 = vpop.f32.mrf.mxu0
      %v3444 = vadd.f32 %v3347, %v3443
      %v3445 = vpop.f32.mrf.mxu0
      %v3446 = vpop.f32.mrf.mxu0
      %v3447 = vadd.f32 %v3350, %v3446
      %v3448 = vpop.f32.mrf.mxu0
      %3449 = vmatprep.mubr.bf16.mxu0 %v3024
      %3450 = vmatmul.mubr.bf16.gmra.mxu0 %v3023
      %v3451 = vpop.f32.mrf.mxu0
      %v3452 = vadd.f32 %v3355, %v3451
      %v3453 = vpop.f32.mrf.mxu0
      %v3454 = vpop.f32.mrf.mxu0
      %v3455 = vadd.f32 %v3358, %v3454
      %v3456 = vpop.f32.mrf.mxu0
      %3457 = vmatprep.mubr.bf16.mxu0 %v3028
      %3458 = vmatmul.mubr.bf16.gmra.mxu0 %v3027
      %v3459 = vpop.f32.mrf.mxu0
      %v3460 = vadd.f32 %v3363, %v3459
      %v3461 = vpop.f32.mrf.mxu0
      %v3462 = vpop.f32.mrf.mxu0
      %v3463 = vadd.f32 %v3366, %v3462
      %v3464 = vpop.f32.mrf.mxu0
      %3465 = vmatprep.mubr.bf16.mxu0 %v3032
      %3466 = vmatmul.mubr.bf16.gmra.mxu0 %v3031
      %v3467 = vpop.f32.mrf.mxu0
      %v3468 = vadd.f32 %v3371, %v3467
      %v3469 = vpop.f32.mrf.mxu0
      %v3470 = vpop.f32.mrf.mxu0
      %v3471 = vadd.f32 %v3374, %v3470
      %v3472 = vpop.f32.mrf.mxu0
      %3473 = vmatprep.mubr.bf16.mxu0 %v3036
      %3474 = vmatmul.mubr.bf16.gmra.mxu0 %v3035
      %v3475 = vpop.f32.mrf.mxu0
      %v3476 = vadd.f32 %v3379, %v3475
      %v3477 = vpop.f32.mrf.mxu0
      %v3478 = vpop.f32.mrf.mxu0
      %v3479 = vadd.f32 %v3382, %v3478
      %v3480 = vpop.f32.mrf.mxu0
      %3481 = vmatprep.mubr.bf16.mxu0 %v3040
      %3482 = vmatmul.mubr.bf16.gmra.mxu0 %v3039
      %v3483 = vpop.f32.mrf.mxu0
      %v3484 = vadd.f32 %v3387, %v3483
      %v3485 = vpop.f32.mrf.mxu0
      %v3486 = vpop.f32.mrf.mxu0
      %v3487 = vadd.f32 %v3390, %v3486
      %v3488 = vpop.f32.mrf.mxu0
      %3489 = vmatprep.mubr.bf16.mxu0 %v3044
      %3490 = vmatmul.mubr.bf16.gmra.mxu0 %v3043
      %v3491 = vpop.f32.mrf.mxu0
      %v3492 = vadd.f32 %v3395, %v3491
      %v3493 = vpop.f32.mrf.mxu0
      %v3494 = vpop.f32.mrf.mxu0
      %v3495 = vadd.f32 %v3398, %v3494
      %v3496 = vpop.f32.mrf.mxu0
      %3497 = vmatprep.mubr.bf16.mxu0 %v3048
      %3498 = vmatmul.mubr.bf16.gmra.mxu0 %v3047
      %v3499 = vpop.f32.mrf.mxu0
      %v3500 = vadd.f32 %v3403, %v3499
      %v3501 = vpop.f32.mrf.mxu0
      %v3502 = vpop.f32.mrf.mxu0
      %v3503 = vadd.f32 %v3406, %v3502
      %v3504 = vpop.f32.mrf.mxu0
      %3505 = vdwg.mxu0
      %vm3506 = vcmask 261120
      %v3507 = vsel %vm3506, %v3444, -inf
      %v3508 = vsel %vm3506, %v3447, -inf
      %v3509 = vmax.f32 %v3507, %v3508
      %v3510 = vrot.slane %v3509, 4
      %v3511 = vmax.f32 %v3509, %v3510
      %v3512 = vrot.slane %v3511, 2
      %v3513 = vmax.f32 %v3511, %v3512
      %v3514 = vrot.slane %v3513, 1
      %v3515 = vmax.f32 %v3513, %v3514
      %v3516 = vsel %vm3506, %v3452, -inf
      %v3517 = vsel %vm3506, %v3455, -inf
      %v3518 = vmax.f32 %v3516, %v3517
      %v3519 = vrot.slane %v3518, 4
      %v3520 = vmax.f32 %v3518, %v3519
      %v3521 = vrot.slane %v3520, 2
      %v3522 = vmax.f32 %v3520, %v3521
      %v3523 = vrot.slane %v3522, 1
      %v3524 = vmax.f32 %v3522, %v3523
      %v3525 = vsel %vm3506, %v3460, -inf
      %v3526 = vsel %vm3506, %v3463, -inf
      %v3527 = vmax.f32 %v3525, %v3526
      %v3528 = vrot.slane %v3527, 4
      %v3529 = vmax.f32 %v3527, %v3528
      %v3530 = vrot.slane %v3529, 2
      %v3531 = vmax.f32 %v3529, %v3530
      %v3532 = vrot.slane %v3531, 1
      %v3533 = vmax.f32 %v3531, %v3532
      %v3534 = vsel %vm3506, %v3468, -inf
      %v3535 = vsel %vm3506, %v3471, -inf
      %v3536 = vmax.f32 %v3534, %v3535
      %v3537 = vrot.slane %v3536, 4
      %v3538 = vmax.f32 %v3536, %v3537
      %v3539 = vrot.slane %v3538, 2
      %v3540 = vmax.f32 %v3538, %v3539
      %v3541 = vrot.slane %v3540, 1
      %v3542 = vmax.f32 %v3540, %v3541
      %v3543 = vsel %vm3506, %v3476, -inf
      %v3544 = vsel %vm3506, %v3479, -inf
      %v3545 = vmax.f32 %v3543, %v3544
      %v3546 = vrot.slane %v3545, 4
      %v3547 = vmax.f32 %v3545, %v3546
      %v3548 = vrot.slane %v3547, 2
      %v3549 = vmax.f32 %v3547, %v3548
      %v3550 = vrot.slane %v3549, 1
      %v3551 = vmax.f32 %v3549, %v3550
      %v3552 = vsel %vm3506, %v3484, -inf
      %v3553 = vsel %vm3506, %v3487, -inf
      %v3554 = vmax.f32 %v3552, %v3553
      %v3555 = vrot.slane %v3554, 4
      %v3556 = vmax.f32 %v3554, %v3555
      %v3557 = vrot.slane %v3556, 2
      %v3558 = vmax.f32 %v3556, %v3557
      %v3559 = vrot.slane %v3558, 1
      %v3560 = vmax.f32 %v3558, %v3559
      %v3561 = vsel %vm3506, %v3492, -inf
      %v3562 = vsel %vm3506, %v3495, -inf
      %v3563 = vmax.f32 %v3561, %v3562
      %v3564 = vrot.slane %v3563, 4
      %v3565 = vmax.f32 %v3563, %v3564
      %v3566 = vrot.slane %v3565, 2
      %v3567 = vmax.f32 %v3565, %v3566
      %v3568 = vrot.slane %v3567, 1
      %v3569 = vmax.f32 %v3567, %v3568
      %v3570 = vsel %vm3506, %v3500, -inf
      %v3571 = vsel %vm3506, %v3503, -inf
      %v3572 = vmax.f32 %v3570, %v3571
      %v3573 = vrot.slane %v3572, 4
      %v3574 = vmax.f32 %v3572, %v3573
      %v3575 = vrot.slane %v3574, 2
      %v3576 = vmax.f32 %v3574, %v3575
      %v3577 = vrot.slane %v3576, 1
      %v3578 = vmax.f32 %v3576, %v3577
      %v3579 = vpack.c.bf16 %v3515, %v3515
      %v3580 = vpack.c.bf16 %v3524, %v3524
      %v3581 = vpack.c.bf16 %v3533, %v3533
      %v3582 = vpack.c.bf16 %v3542, %v3542
      %v3583 = vpack.c.bf16 %v3551, %v3551
      %v3584 = vpack.c.bf16 %v3560, %v3560
      %v3585 = vpack.c.bf16 %v3569, %v3569
      %v3586 = vpack.c.bf16 %v3578, %v3578
      %v3587 = vld [vmem:[%s15] sm:$0xf]
      %v3588 = vld [vmem:[%s15 + $0x4] sm:$0xf]
      %v3589 = vld [vmem:[%s15 + $0x8] sm:$0xf]
      %v3590 = vld [vmem:[%s15 + $0xc] sm:$0xf]
      %v3591 = vld [vmem:[%s16] sm:$0x1]
      %v3593 = vlaneseq
      %v3594 = vshrl.u32 %v3593, 7
      %v3595 = vsub.s32 0, %v3594
      %v3596 = vrot.slane %v3591, %v3595
      %v3606 = vunpack.c.l.b16 %v3579
      %v3607 = vunpack.c.l.b16 %v3580
      %v3608 = vunpack.c.l.b16 %v3581
      %v3609 = vunpack.c.l.b16 %v3582
      %v3610 = vunpack.c.l.b16 %v3583
      %v3611 = vunpack.c.l.b16 %v3584
      %v3612 = vunpack.c.l.b16 %v3585
      %v3613 = vunpack.c.l.b16 %v3586
      %v3614 = vsel %vm1346, %v3607, %v3606
      %v3615 = vsel %vm1348, %v3608, %v3614
      %v3616 = vsel %vm1350, %v3609, %v3615
      %v3617 = vsel %vm1352, %v3610, %v3616
      %v3618 = vsel %vm1354, %v3611, %v3617
      %v3619 = vsel %vm1356, %v3612, %v3618
      %v3620 = vsel %vm1358, %v3613, %v3619
      %v3621 = vpack.c.b16 %v3620, %v3620
      %v3626 = vunpack.c.l.b16 %v3587
      %v3627 = vunpack.c.l.b16 %v3588
      %v3628 = vunpack.c.l.b16 %v3589
      %v3629 = vunpack.c.l.b16 %v3590
      %v3630 = vpack.c.b16 %v3627, %v3626
      %v3631 = vpack.c.b16 %v3629, %v3628
      %v3635 = vsel %vm3506, %v3621, 0
      %3637 = vmatprep.subr.bf16.mxu0 0
      %3638 = vmatpush1.bf16.msra.mxu0 0
      %3639 = vmatprep.subr.bf16.mxu0 0
      %3640 = vmatpush1.bf16.msra.mxu0 0
      %3641 = vmatprep.subr.bf16.mxu0 0
      %3642 = vmatpush1.bf16.msra.mxu0 0
      %3643 = vmatprep.subr.bf16.mxu0 0
      %3644 = vmatpush1.bf16.msra.mxu0 0
      %3645 = vmatprep.subr.bf16.mxu0 0
      %3646 = vmatpush1.bf16.msra.mxu0 0
      %3647 = vmatprep.subr.bf16.mxu0 0
      %3648 = vmatpush1.bf16.msra.mxu0 0
      %3649 = vmatprep.subr.bf16.mxu0 0
      %3650 = vmatpush1.bf16.msra.mxu0 %v3631
      %3651 = vmatprep.subr.bf16.mxu0 0
      %3652 = vmatpush1.bf16.msra.mxu0 %v3630
      %3653 = vmatprep.subr.bf16.mxu0 0
      %3654 = vmatpush2.bf16.msra.mxu0 0
      %3655 = vmatprep.subr.bf16.mxu0 0
      %3656 = vmatpush2.bf16.msra.mxu0 0
      %3657 = vmatprep.subr.bf16.mxu0 0
      %3658 = vmatpush2.bf16.msra.mxu0 0
      %3659 = vmatprep.subr.bf16.mxu0 0
      %3660 = vmatpush2.bf16.msra.mxu0 0
      %3661 = vmatprep.subr.bf16.mxu0 0
      %3662 = vmatpush2.bf16.msra.mxu0 0
      %3663 = vmatprep.subr.bf16.mxu0 0
      %3664 = vmatpush2.bf16.msra.mxu0 0
      %3665 = vmatprep.subr.bf16.mxu0 0
      %3666 = vmatpush2.bf16.msra.mxu0 0
      %3667 = vmatprep.subr.bf16.mxu0 0
      %3668 = vmatpush2.bf16.msra.mxu0 0
      %3669 = vmatprep.mubr.bf16.mxu0 0
      %3670 = vmatmul.mubr.bf16.gmra.mxu0 %v3635
      %v3671 = vpop.f32.mrf.mxu0
      %v3672 = vadd.f32 %v3596, %v3671
      %v3673 = vpop.f32.mrf.mxu0
      %v3674 = vpop.f32.mrf.mxu0
      %v3675 = vpop.f32.mrf.mxu0
      %3676 = vdwg.mxu0
      %v3677 = vld [vmem:[%s667] sm:$0xff]
      %v3678 = vpack.c.bf16 %v3677, %v3677
      %v3679 = vld [vmem:[%s17] sm:$0x3]
      %v3680 = vld [vmem:[%s18] sm:$0x1]
      %v3682 = vlaneseq
      %v3683 = vshrl.u32 %v3682, 7
      %v3684 = vsub.s32 0, %v3683
      %v3685 = vrot.slane %v3680, %v3684
      %vm3687 = vcmask 23552
      %v3689 = vsel %vm3687, %v3678, 0
      %vm3691 = vcmask 1040384
      %vm3692 = vcmask 1041408
      %v3693 = vsel %vm3691, 4294967295, 65535
      %v3694 = vsel %vm3692, %v3693, 0
      %v3696 = vand.u32 %v3679, %v3694
      %3698 = vmatprep.subr.bf16.mxu0 0
      %3699 = vmatpush1.bf16.msra.mxu0 0
      %3700 = vmatprep.subr.bf16.mxu0 0
      %3701 = vmatpush1.bf16.msra.mxu0 0
      %3702 = vmatprep.subr.bf16.mxu0 0
      %3703 = vmatpush1.bf16.msra.mxu0 0
      %3704 = vmatprep.subr.bf16.mxu0 0
      %3705 = vmatpush1.bf16.msra.mxu0 0
      %3706 = vmatprep.subr.bf16.mxu0 0
      %3707 = vmatpush1.bf16.msra.mxu0 0
      %3708 = vmatprep.subr.bf16.mxu0 0
      %3709 = vmatpush1.bf16.msra.mxu0 0
      %3710 = vmatprep.subr.bf16.mxu0 0
      %3711 = vmatpush1.bf16.msra.mxu0 0
      %3712 = vmatprep.subr.bf16.mxu0 0
      %3713 = vmatpush1.bf16.msra.mxu0 %v3696
      %3714 = vmatprep.subr.bf16.mxu0 0
      %3715 = vmatpush2.bf16.msra.mxu0 0
      %3716 = vmatprep.subr.bf16.mxu0 0
      %3717 = vmatpush2.bf16.msra.mxu0 0
      %3718 = vmatprep.subr.bf16.mxu0 0
      %3719 = vmatpush2.bf16.msra.mxu0 0
      %3720 = vmatprep.subr.bf16.mxu0 0
      %3721 = vmatpush2.bf16.msra.mxu0 0
      %3722 = vmatprep.subr.bf16.mxu0 0
      %3723 = vmatpush2.bf16.msra.mxu0 0
      %3724 = vmatprep.subr.bf16.mxu0 0
      %3725 = vmatpush2.bf16.msra.mxu0 0
      %3726 = vmatprep.subr.bf16.mxu0 0
      %3727 = vmatpush2.bf16.msra.mxu0 0
      %3728 = vmatprep.subr.bf16.mxu0 0
      %3729 = vmatpush2.bf16.msra.mxu0 0
      %3730 = vmatprep.mubr.bf16.mxu0 0
      %3731 = vmatmul.mubr.bf16.gmra.mxu0 %v3689
      %v3732 = vpop.f32.mrf.mxu0
      %v3733 = vadd.f32 %v3685, %v3732
      %v3734 = vpop.f32.mrf.mxu0
      %v3735 = vpop.f32.mrf.mxu0
      %v3736 = vpop.f32.mrf.mxu0
      %3737 = vdwg.mxu0
      %v3738 = vmul.f32 %v3733, 0.5
      %v3739 = vmul.f32 %v3733, 0.044715
      %v3740 = vmul.f32 %v3739, %v3733
      %v3741 = vmul.f32 %v3740, %v3733
      %v3742 = vadd.f32 %v3733, %v3741
      %v3743 = vmul.f32 %v3742, 0.7978846
      %v3744 = vtanh.pop %v3743
      %v3745 = vadd.f32 %v3744, 1.0
      %v3746 = vmul.f32 %v3738, %v3745
      %v3747 = vpack.c.bf16 %v3746, %v3746
      %v3748 = vld [vmem:[%s19] sm:$0xf]
      %v3749 = vld [vmem:[%s19 + $0x4] sm:$0xf]
      %v3750 = vld [vmem:[%s19 + $0x8] sm:$0xf]
      %v3751 = vld [vmem:[%s19 + $0xc] sm:$0xf]
      %v3752 = vld [vmem:[%s19 + $0x10] sm:$0xf]
      %v3753 = vld [vmem:[%s19 + $0x14] sm:$0xf]
      %v3754 = vld [vmem:[%s19 + $0x18] sm:$0xf]
      %v3755 = vld [vmem:[%s19 + $0x1c] sm:$0xf]
      %v3756 = vld [vmem:[%s19 + $0x20] sm:$0xf]
      %v3757 = vld [vmem:[%s19 + $0x24] sm:$0xf]
      %v3758 = vld [vmem:[%s19 + $0x28] sm:$0xf]
      %v3759 = vld [vmem:[%s19 + $0x2c] sm:$0xf]
      %v3760 = vld [vmem:[%s19 + $0x30] sm:$0xf]
      %v3761 = vld [vmem:[%s19 + $0x34] sm:$0xf]
      %v3762 = vld [vmem:[%s19 + $0x38] sm:$0xf]
      %v3763 = vld [vmem:[%s19 + $0x3c] sm:$0xf]
      %v3764 = vld [vmem:[%s20] sm:$0x1]
      %v3766 = vlaneseq
      %v3767 = vshrl.u32 %v3766, 7
      %v3768 = vsub.s32 0, %v3767
      %v3769 = vrot.slane %v3764, %v3768
      %v3787 = vunpack.c.l.b16 %v3748
      %v3788 = vunpack.c.l.b16 %v3749
      %v3789 = vunpack.c.l.b16 %v3750
      %v3790 = vunpack.c.l.b16 %v3751
      %v3791 = vunpack.c.l.b16 %v3752
      %v3792 = vunpack.c.l.b16 %v3753
      %v3793 = vunpack.c.l.b16 %v3754
      %v3794 = vunpack.c.l.b16 %v3755
      %v3795 = vunpack.c.l.b16 %v3756
      %v3796 = vunpack.c.l.b16 %v3757
      %v3797 = vunpack.c.l.b16 %v3758
      %v3798 = vunpack.c.l.b16 %v3759
      %v3799 = vunpack.c.l.b16 %v3760
      %v3800 = vunpack.c.l.b16 %v3761
      %v3801 = vunpack.c.l.b16 %v3762
      %v3802 = vunpack.c.l.b16 %v3763
      %v3803 = vpack.c.b16 %v3788, %v3787
      %v3804 = vpack.c.b16 %v3790, %v3789
      %v3805 = vpack.c.b16 %v3792, %v3791
      %v3806 = vpack.c.b16 %v3794, %v3793
      %v3807 = vpack.c.b16 %v3796, %v3795
      %v3808 = vpack.c.b16 %v3798, %v3797
      %v3809 = vpack.c.b16 %v3800, %v3799
      %v3810 = vpack.c.b16 %v3802, %v3801
      %3819 = vmatprep.subr.bf16.mxu0 0
      %3820 = vmatpush1.bf16.msra.mxu0 %v3810
      %3821 = vmatprep.subr.bf16.mxu0 0
      %3822 = vmatpush1.bf16.msra.mxu0 %v3809
      %3823 = vmatprep.subr.bf16.mxu0 0
      %3824 = vmatpush1.bf16.msra.mxu0 %v3808
      %3825 = vmatprep.subr.bf16.mxu0 0
      %3826 = vmatpush1.bf16.msra.mxu0 %v3807
      %3827 = vmatprep.subr.bf16.mxu0 0
      %3828 = vmatpush1.bf16.msra.mxu0 %v3806
      %3829 = vmatprep.subr.bf16.mxu0 0
      %3830 = vmatpush1.bf16.msra.mxu0 %v3805
      %3831 = vmatprep.subr.bf16.mxu0 0
      %3832 = vmatpush1.bf16.msra.mxu0 %v3804
      %3833 = vmatprep.subr.bf16.mxu0 0
      %3834 = vmatpush1.bf16.msra.mxu0 %v3803
      %3835 = vmatprep.subr.bf16.mxu0 0
      %3836 = vmatpush2.bf16.msra.mxu0 0
      %3837 = vmatprep.subr.bf16.mxu0 0
      %3838 = vmatpush2.bf16.msra.mxu0 0
      %3839 = vmatprep.subr.bf16.mxu0 0
      %3840 = vmatpush2.bf16.msra.mxu0 0
      %3841 = vmatprep.subr.bf16.mxu0 0
      %3842 = vmatpush2.bf16.msra.mxu0 0
      %3843 = vmatprep.subr.bf16.mxu0 0
      %3844 = vmatpush2.bf16.msra.mxu0 0
      %3845 = vmatprep.subr.bf16.mxu0 0
      %3846 = vmatpush2.bf16.msra.mxu0 0
      %3847 = vmatprep.subr.bf16.mxu0 0
      %3848 = vmatpush2.bf16.msra.mxu0 0
      %3849 = vmatprep.subr.bf16.mxu0 0
      %3850 = vmatpush2.bf16.msra.mxu0 0
      %3851 = vmatprep.mubr.bf16.mxu0 0
      %3852 = vmatmul.mubr.bf16.gmra.mxu0 %v3747
      %v3853 = vpop.f32.mrf.mxu0
      %v3854 = vadd.f32 %v3769, %v3853
      %v3855 = vpop.f32.mrf.mxu0
      %v3856 = vpop.f32.mrf.mxu0
      %v3857 = vpop.f32.mrf.mxu0
      %3858 = vdwg.mxu0
      %3860 = vrot.lane.b32.xlu0 %v3854, 32
      %v3861 = vpop.permute.xlu0 %3860
      %v3863 = vsel %vm3506, %v3672, %v3861
      %vm3864 = vcmask 523264
      %3865 = vst.msk [vmem:[%s671] sm:$0xff] %vm3864, %v3863
      %p3866 = scmp.lt.s32.totalorder %s32, 1
      %s3867 = scalar_select %p3866, %s32, 1
      %s3868 = smul.addr %s3867, 8
      %s3869 = scalar_lea.vmem %s21, %s3868
      // Predicated region
      $region105: #{pointcloud_encoder_forward.2} parent=103 // pred_check
        %p3870 = pneg %p501
      $region106: #{pointcloud_encoder_forward.2} parent=103 // pred_check_branch
        %3872 = sbr.rel (%p3870) target = $region108
      $region107: #{pointcloud_encoder_forward.2} parent=103 // pred_region
        _
      $region108: #{pointcloud_encoder_forward.2} parent=103 // pred_fallthru
        _
    $region104: #{pointcloud_encoder_forward.2} parent=5 // pred_fallthru
      _
    %p3873 = scmp.le.s32.totalorder 2, %s27
    // Predicated region
    $region109: #{pointcloud_encoder_forward.2} parent=5 // pred_check
      %p3874 = pneg %p3873
    $region110: #{pointcloud_encoder_forward.2} parent=5 // pred_check_branch
      %3876 = sbr.rel (%p3874) target = $region112
    $region111: #{pointcloud_encoder_forward.2} parent=5 // pred_region
      %s3877 = ssub.s32 %s27, 2
      // Predicated region
      $region113: #{pointcloud_encoder_forward.2} parent=111 // pred_check
        %p3878 = pneg %p507
      $region114: #{pointcloud_encoder_forward.2} parent=111 // pred_check_branch
        %3880 = sbr.rel (%p3878) target = $region116
      $region115: #{pointcloud_encoder_forward.2} parent=111 // pred_region
        %p3881 = scmp.lt.s32.totalorder %s33, 1
        %s3882 = scalar_select %p3881, %s33, 1
        %s3883 = smul.addr %s3882, 8
        %s3884 = scalar_lea.vmem %s21, %s3883
      $region116: #{pointcloud_encoder_forward.2} parent=111 // pred_fallthru
        _
    $region112: #{pointcloud_encoder_forward.2} parent=5 // pred_fallthru
      _
  $region6: #{pointcloud_encoder_forward.2} parent=0 // loop_footer
    %s31 = sadd.s32 1, %s27
  $region7: #{pointcloud_encoder_forward.2} parent=0 // loop_footer_branch
    %26 = sbr.rel target = $region3
  $region8: #{pointcloud_encoder_forward.2} parent=0 // loop_exit
    _

// kernel: pointcloud_encoder_forward.3
$region0: #{pointcloud_encoder_forward.3}
  #allocation0 [shape = 'u32[]', space=smem, size = 0x4, offset = 0x4, fixed_abs, tag = 'smem constant byte address 0x4 - core index']
  #allocation1 [shape = 'u32[144,128]{1,0:T(1,128)}', space=vmem, size = 0x12000, scoped, tag = 'internal scratch']
  %s0 = inlined_call_operand.vmem [shape: f32[16,32], index: 0, kind: input, shape index: {}]
  %s1 = inlined_call_operand.vmem [shape: f32[16,16], index: 1, kind: input, shape index: {}]
  %s2 = inlined_call_operand.vmem [shape: f32[2,1,32], index: 2, kind: input, shape index: {}]
  %s3 = inlined_call_operand.vmem [shape: f32[2,1,32], index: 3, kind: input, shape index: {}]
  %s4 = inlined_call_operand.vmem [shape: bf16[2,32,96], index: 4, kind: input, shape index: {}]
  %s5 = inlined_call_operand.vmem [shape: f32[2,1,96], index: 5, kind: input, shape index: {}]
  %s6 = inlined_call_operand.vmem [shape: bf16[2,32,32], index: 6, kind: input, shape index: {}]
  %s7 = inlined_call_operand.vmem [shape: f32[2,1,32], index: 7, kind: input, shape index: {}]
  %s8 = inlined_call_operand.vmem [shape: f32[2,1,32], index: 8, kind: input, shape index: {}]
  %s9 = inlined_call_operand.vmem [shape: f32[2,1,32], index: 9, kind: input, shape index: {}]
  %s10 = inlined_call_operand.vmem [shape: bf16[2,32,128], index: 10, kind: input, shape index: {}]
  %s11 = inlined_call_operand.vmem [shape: f32[2,1,128], index: 11, kind: input, shape index: {}]
  %s12 = inlined_call_operand.vmem [shape: bf16[2,128,32], index: 12, kind: input, shape index: {}]
  %s13 = inlined_call_operand.vmem [shape: f32[2,1,32], index: 13, kind: input, shape index: {}]
  %s14 = inlined_call_operand.vmem [shape: f32[1,32], index: 14, kind: input, shape index: {}]
  %s15 = inlined_call_operand.vmem [shape: f32[1,32], index: 15, kind: input, shape index: {}]
  %s16 = inlined_call_operand.vmem [shape: f32[16,32], index: 16, kind: output, shape index: {}]
  %s17 = sld [smem:[#allocation0]]
  $region105: #{pointcloud_encoder_forward.3} parent=0
    _
  %s19 = ssub.s32 1, %s17
  %s20 = scalar_select 0, %s19, %s17
  loop: start=0, step=1, limit=4
  $region2: #{pointcloud_encoder_forward.3} parent=0 // loop_pre_header
    _
  $region3: #{pointcloud_encoder_forward.3} parent=0 // loop_header
    %s22 = sphi 0, %s26
    %p23 = scmp.ge.s32.totalorder %s22, 4
    %s30 = sphi 0, %s30
    %s32 = sphi 0, %s30
    %s33 = sphi 0, %s32
    %s47 = sphi 0, %s33
    %s51 = sphi 0, %s51
    %s53 = sphi 0, %s51
    %s54 = sphi 0, %s53
    %s68 = sphi 0, %s54
    %s74 = sphi 0, %s76
    %s77 = sphi 0, %s74
    %s78 = sphi 0, %s77
    %s94 = sphi 0, %s78
    %s100 = sphi 0, %s102
    %s103 = sphi 0, %s100
    %s104 = sphi 0, %s103
    %s120 = sphi 0, %s104
    %s126 = sphi 0, %s128
    %s129 = sphi 0, %s126
    %s130 = sphi 0, %s129
    %s146 = sphi 0, %s130
    %s152 = sphi 0, %s154
    %s155 = sphi 0, %s152
    %s156 = sphi 0, %s155
    %s172 = sphi 0, %s156
    %s178 = sphi 0, %s180
    %s181 = sphi 0, %s178
    %s182 = sphi 0, %s181
    %s198 = sphi 0, %s182
    %s204 = sphi 0, %s206
    %s207 = sphi 0, %s204
    %s208 = sphi 0, %s207
    %s224 = sphi 0, %s208
    %s230 = sphi 0, %s232
    %s233 = sphi 0, %s230
    %s234 = sphi 0, %s233
    %s250 = sphi 0, %s234
    %s256 = sphi 0, %s258
    %s259 = sphi 0, %s256
    %s260 = sphi 0, %s259
    %s276 = sphi 0, %s260
    %s282 = sphi 0, %s284
    %s285 = sphi 0, %s282
    %s286 = sphi 0, %s285
    %s302 = sphi 0, %s286
    %s308 = sphi 0, %s310
    %s311 = sphi 0, %s308
    %s312 = sphi 0, %s311
    %s328 = sphi 0, %s312
    %s334 = sphi 0, %s336
    %s337 = sphi 0, %s334
    %s338 = sphi 0, %s337
    %s354 = sphi 0, %s338
    %s360 = sphi 0, %s362
    %s363 = sphi 0, %s360
    %s364 = sphi 0, %s363
    %s380 = sphi 0, %s364
    %s384 = sphi 0, %s384
    %s386 = sphi 0, %s384
    %s387 = sphi 0, %s386
    %s401 = sphi 0, %s387
    %s405 = sphi 0, %s405
    %s407 = sphi 0, %s405
    %s408 = sphi 0, %s407
    %s422 = sphi 0, %s408
    %s426 = sphi 0, %s426
    %s428 = sphi 0, %s426
    %s429 = sphi 0, %s428
    %s443 = sphi 0, %s429
  $region4: #{pointcloud_encoder_forward.3} parent=0 // loop_header_branch
    %25 = sbr.rel (%p23) target = $region8
  $region5: #{pointcloud_encoder_forward.3} parent=0 // loop_body
    %s27 = ssub.s32 %s22, 1
    %s28 = ssub.s32 %s22, 2
    %s29 = sadd.s32 %s22, 1
    %s31 = sadd.s32 %s30, 1
    %p34 = scmp.eq.s32.totalorder %s22, 1
    %p35 = scmp.ne.s32.totalorder %s30, %s32
    %p36 = scmp.eq.s32.totalorder %s22, 0
    %p37 = por %p35, %p36
    %p38 = scmp.ne.s32.totalorder %s30, %s32
    %p39 = scmp.eq.s32.totalorder %s27, 1
    %p40 = por %p38, %p39
    %p41 = scmp.ne.s32.totalorder %s32, %s33
    %p42 = scmp.eq.s32.totalorder %s27, 0
    %p43 = por %p41, %p42
    %p44 = scmp.ne.s32.totalorder %s32, %s33
    %p45 = scmp.eq.s32.totalorder %s28, 1
    %p46 = por %p44, %p45
    %p48 = scmp.ne.s32.totalorder %s33, %s47
    %p49 = scmp.eq.s32.totalorder %s28, 0
    %p50 = por %p48, %p49
    %s52 = sadd.s32 %s51, 1
    %p55 = scmp.eq.s32.totalorder %s22, 1
    %p56 = scmp.ne.s32.totalorder %s51, %s53
    %p57 = scmp.eq.s32.totalorder %s22, 0
    %p58 = por %p56, %p57
    %p59 = scmp.ne.s32.totalorder %s51, %s53
    %p60 = scmp.eq.s32.totalorder %s27, 1
    %p61 = por %p59, %p60
    %p62 = scmp.ne.s32.totalorder %s53, %s54
    %p63 = scmp.eq.s32.totalorder %s27, 0
    %p64 = por %p62, %p63
    %p65 = scmp.ne.s32.totalorder %s53, %s54
    %p66 = scmp.eq.s32.totalorder %s28, 1
    %p67 = por %p65, %p66
    %p69 = scmp.ne.s32.totalorder %s54, %s68
    %p70 = scmp.eq.s32.totalorder %s28, 0
    %p71 = por %p69, %p70
    %s72 = ssub.s32 %s22, %s29
    %p73 = scmp.eq.s32.totalorder %s72, 0
    %s75 = sadd.s32 %s74, 1
    %s76 = scalar_select %p73, %s74, %s75
    %p79 = pneg %p73
    %p80 = scmp.eq.s32.totalorder %s22, 1
    %p81 = por %p79, %p80
    %p82 = scmp.ne.s32.totalorder %s74, %s77
    %p83 = scmp.eq.s32.totalorder %s22, 0
    %p84 = por %p82, %p83
    %p85 = scmp.ne.s32.totalorder %s74, %s77
    %p86 = scmp.eq.s32.totalorder %s27, 1
    %p87 = por %p85, %p86
    %p88 = scmp.ne.s32.totalorder %s77, %s78
    %p89 = scmp.eq.s32.totalorder %s27, 0
    %p90 = por %p88, %p89
    %p91 = scmp.ne.s32.totalorder %s77, %s78
    %p92 = scmp.eq.s32.totalorder %s28, 1
    %p93 = por %p91, %p92
    %p95 = scmp.ne.s32.totalorder %s78, %s94
    %p96 = scmp.eq.s32.totalorder %s28, 0
    %p97 = por %p95, %p96
    %s98 = ssub.s32 %s22, %s29
    %p99 = scmp.eq.s32.totalorder %s98, 0
    %s101 = sadd.s32 %s100, 1
    %s102 = scalar_select %p99, %s100, %s101
    %p105 = pneg %p99
    %p106 = scmp.eq.s32.totalorder %s22, 1
    %p107 = por %p105, %p106
    %p108 = scmp.ne.s32.totalorder %s100, %s103
    %p109 = scmp.eq.s32.totalorder %s22, 0
    %p110 = por %p108, %p109
    %p111 = scmp.ne.s32.totalorder %s100, %s103
    %p112 = scmp.eq.s32.totalorder %s27, 1
    %p113 = por %p111, %p112
    %p114 = scmp.ne.s32.totalorder %s103, %s104
    %p115 = scmp.eq.s32.totalorder %s27, 0
    %p116 = por %p114, %p115
    %p117 = scmp.ne.s32.totalorder %s103, %s104
    %p118 = scmp.eq.s32.totalorder %s28, 1
    %p119 = por %p117, %p118
    %p121 = scmp.ne.s32.totalorder %s104, %s120
    %p122 = scmp.eq.s32.totalorder %s28, 0
    %p123 = por %p121, %p122
    %s124 = ssub.s32 %s22, %s29
    %p125 = scmp.eq.s32.totalorder %s124, 0
    %s127 = sadd.s32 %s126, 1
    %s128 = scalar_select %p125, %s126, %s127
    %p131 = pneg %p125
    %p132 = scmp.eq.s32.totalorder %s22, 1
    %p133 = por %p131, %p132
    %p134 = scmp.ne.s32.totalorder %s126, %s129
    %p135 = scmp.eq.s32.totalorder %s22, 0
    %p136 = por %p134, %p135
    %p137 = scmp.ne.s32.totalorder %s126, %s129
    %p138 = scmp.eq.s32.totalorder %s27, 1
    %p139 = por %p137, %p138
    %p140 = scmp.ne.s32.totalorder %s129, %s130
    %p141 = scmp.eq.s32.totalorder %s27, 0
    %p142 = por %p140, %p141
    %p143 = scmp.ne.s32.totalorder %s129, %s130
    %p144 = scmp.eq.s32.totalorder %s28, 1
    %p145 = por %p143, %p144
    %p147 = scmp.ne.s32.totalorder %s130, %s146
    %p148 = scmp.eq.s32.totalorder %s28, 0
    %p149 = por %p147, %p148
    %s150 = ssub.s32 %s22, %s29
    %p151 = scmp.eq.s32.totalorder %s150, 0
    %s153 = sadd.s32 %s152, 1
    %s154 = scalar_select %p151, %s152, %s153
    %p157 = pneg %p151
    %p158 = scmp.eq.s32.totalorder %s22, 1
    %p159 = por %p157, %p158
    %p160 = scmp.ne.s32.totalorder %s152, %s155
    %p161 = scmp.eq.s32.totalorder %s22, 0
    %p162 = por %p160, %p161
    %p163 = scmp.ne.s32.totalorder %s152, %s155
    %p164 = scmp.eq.s32.totalorder %s27, 1
    %p165 = por %p163, %p164
    %p166 = scmp.ne.s32.totalorder %s155, %s156
    %p167 = scmp.eq.s32.totalorder %s27, 0
    %p168 = por %p166, %p167
    %p169 = scmp.ne.s32.totalorder %s155, %s156
    %p170 = scmp.eq.s32.totalorder %s28, 1
    %p171 = por %p169, %p170
    %p173 = scmp.ne.s32.totalorder %s156, %s172
    %p174 = scmp.eq.s32.totalorder %s28, 0
    %p175 = por %p173, %p174
    %s176 = ssub.s32 %s22, %s29
    %p177 = scmp.eq.s32.totalorder %s176, 0
    %s179 = sadd.s32 %s178, 1
    %s180 = scalar_select %p177, %s178, %s179
    %p183 = pneg %p177
    %p184 = scmp.eq.s32.totalorder %s22, 1
    %p185 = por %p183, %p184
    %p186 = scmp.ne.s32.totalorder %s178, %s181
    %p187 = scmp.eq.s32.totalorder %s22, 0
    %p188 = por %p186, %p187
    %p189 = scmp.ne.s32.totalorder %s178, %s181
    %p190 = scmp.eq.s32.totalorder %s27, 1
    %p191 = por %p189, %p190
    %p192 = scmp.ne.s32.totalorder %s181, %s182
    %p193 = scmp.eq.s32.totalorder %s27, 0
    %p194 = por %p192, %p193
    %p195 = scmp.ne.s32.totalorder %s181, %s182
    %p196 = scmp.eq.s32.totalorder %s28, 1
    %p197 = por %p195, %p196
    %p199 = scmp.ne.s32.totalorder %s182, %s198
    %p200 = scmp.eq.s32.totalorder %s28, 0
    %p201 = por %p199, %p200
    %s202 = ssub.s32 %s22, %s29
    %p203 = scmp.eq.s32.totalorder %s202, 0
    %s205 = sadd.s32 %s204, 1
    %s206 = scalar_select %p203, %s204, %s205
    %p209 = pneg %p203
    %p210 = scmp.eq.s32.totalorder %s22, 1
    %p211 = por %p209, %p210
    %p212 = scmp.ne.s32.totalorder %s204, %s207
    %p213 = scmp.eq.s32.totalorder %s22, 0
    %p214 = por %p212, %p213
    %p215 = scmp.ne.s32.totalorder %s204, %s207
    %p216 = scmp.eq.s32.totalorder %s27, 1
    %p217 = por %p215, %p216
    %p218 = scmp.ne.s32.totalorder %s207, %s208
    %p219 = scmp.eq.s32.totalorder %s27, 0
    %p220 = por %p218, %p219
    %p221 = scmp.ne.s32.totalorder %s207, %s208
    %p222 = scmp.eq.s32.totalorder %s28, 1
    %p223 = por %p221, %p222
    %p225 = scmp.ne.s32.totalorder %s208, %s224
    %p226 = scmp.eq.s32.totalorder %s28, 0
    %p227 = por %p225, %p226
    %s228 = ssub.s32 %s22, %s29
    %p229 = scmp.eq.s32.totalorder %s228, 0
    %s231 = sadd.s32 %s230, 1
    %s232 = scalar_select %p229, %s230, %s231
    %p235 = pneg %p229
    %p236 = scmp.eq.s32.totalorder %s22, 1
    %p237 = por %p235, %p236
    %p238 = scmp.ne.s32.totalorder %s230, %s233
    %p239 = scmp.eq.s32.totalorder %s22, 0
    %p240 = por %p238, %p239
    %p241 = scmp.ne.s32.totalorder %s230, %s233
    %p242 = scmp.eq.s32.totalorder %s27, 1
    %p243 = por %p241, %p242
    %p244 = scmp.ne.s32.totalorder %s233, %s234
    %p245 = scmp.eq.s32.totalorder %s27, 0
    %p246 = por %p244, %p245
    %p247 = scmp.ne.s32.totalorder %s233, %s234
    %p248 = scmp.eq.s32.totalorder %s28, 1
    %p249 = por %p247, %p248
    %p251 = scmp.ne.s32.totalorder %s234, %s250
    %p252 = scmp.eq.s32.totalorder %s28, 0
    %p253 = por %p251, %p252
    %s254 = ssub.s32 %s22, %s29
    %p255 = scmp.eq.s32.totalorder %s254, 0
    %s257 = sadd.s32 %s256, 1
    %s258 = scalar_select %p255, %s256, %s257
    %p261 = pneg %p255
    %p262 = scmp.eq.s32.totalorder %s22, 1
    %p263 = por %p261, %p262
    %p264 = scmp.ne.s32.totalorder %s256, %s259
    %p265 = scmp.eq.s32.totalorder %s22, 0
    %p266 = por %p264, %p265
    %p267 = scmp.ne.s32.totalorder %s256, %s259
    %p268 = scmp.eq.s32.totalorder %s27, 1
    %p269 = por %p267, %p268
    %p270 = scmp.ne.s32.totalorder %s259, %s260
    %p271 = scmp.eq.s32.totalorder %s27, 0
    %p272 = por %p270, %p271
    %p273 = scmp.ne.s32.totalorder %s259, %s260
    %p274 = scmp.eq.s32.totalorder %s28, 1
    %p275 = por %p273, %p274
    %p277 = scmp.ne.s32.totalorder %s260, %s276
    %p278 = scmp.eq.s32.totalorder %s28, 0
    %p279 = por %p277, %p278
    %s280 = ssub.s32 %s22, %s29
    %p281 = scmp.eq.s32.totalorder %s280, 0
    %s283 = sadd.s32 %s282, 1
    %s284 = scalar_select %p281, %s282, %s283
    %p287 = pneg %p281
    %p288 = scmp.eq.s32.totalorder %s22, 1
    %p289 = por %p287, %p288
    %p290 = scmp.ne.s32.totalorder %s282, %s285
    %p291 = scmp.eq.s32.totalorder %s22, 0
    %p292 = por %p290, %p291
    %p293 = scmp.ne.s32.totalorder %s282, %s285
    %p294 = scmp.eq.s32.totalorder %s27, 1
    %p295 = por %p293, %p294
    %p296 = scmp.ne.s32.totalorder %s285, %s286
    %p297 = scmp.eq.s32.totalorder %s27, 0
    %p298 = por %p296, %p297
    %p299 = scmp.ne.s32.totalorder %s285, %s286
    %p300 = scmp.eq.s32.totalorder %s28, 1
    %p301 = por %p299, %p300
    %p303 = scmp.ne.s32.totalorder %s286, %s302
    %p304 = scmp.eq.s32.totalorder %s28, 0
    %p305 = por %p303, %p304
    %s306 = ssub.s32 %s22, %s29
    %p307 = scmp.eq.s32.totalorder %s306, 0
    %s309 = sadd.s32 %s308, 1
    %s310 = scalar_select %p307, %s308, %s309
    %p313 = pneg %p307
    %p314 = scmp.eq.s32.totalorder %s22, 1
    %p315 = por %p313, %p314
    %p316 = scmp.ne.s32.totalorder %s308, %s311
    %p317 = scmp.eq.s32.totalorder %s22, 0
    %p318 = por %p316, %p317
    %p319 = scmp.ne.s32.totalorder %s308, %s311
    %p320 = scmp.eq.s32.totalorder %s27, 1
    %p321 = por %p319, %p320
    %p322 = scmp.ne.s32.totalorder %s311, %s312
    %p323 = scmp.eq.s32.totalorder %s27, 0
    %p324 = por %p322, %p323
    %p325 = scmp.ne.s32.totalorder %s311, %s312
    %p326 = scmp.eq.s32.totalorder %s28, 1
    %p327 = por %p325, %p326
    %p329 = scmp.ne.s32.totalorder %s312, %s328
    %p330 = scmp.eq.s32.totalorder %s28, 0
    %p331 = por %p329, %p330
    %s332 = ssub.s32 %s22, %s29
    %p333 = scmp.eq.s32.totalorder %s332, 0
    %s335 = sadd.s32 %s334, 1
    %s336 = scalar_select %p333, %s334, %s335
    %p339 = pneg %p333
    %p340 = scmp.eq.s32.totalorder %s22, 1
    %p341 = por %p339, %p340
    %p342 = scmp.ne.s32.totalorder %s334, %s337
    %p343 = scmp.eq.s32.totalorder %s22, 0
    %p344 = por %p342, %p343
    %p345 = scmp.ne.s32.totalorder %s334, %s337
    %p346 = scmp.eq.s32.totalorder %s27, 1
    %p347 = por %p345, %p346
    %p348 = scmp.ne.s32.totalorder %s337, %s338
    %p349 = scmp.eq.s32.totalorder %s27, 0
    %p350 = por %p348, %p349
    %p351 = scmp.ne.s32.totalorder %s337, %s338
    %p352 = scmp.eq.s32.totalorder %s28, 1
    %p353 = por %p351, %p352
    %p355 = scmp.ne.s32.totalorder %s338, %s354
    %p356 = scmp.eq.s32.totalorder %s28, 0
    %p357 = por %p355, %p356
    %s358 = ssub.s32 %s22, %s29
    %p359 = scmp.eq.s32.totalorder %s358, 0
    %s361 = sadd.s32 %s360, 1
    %s362 = scalar_select %p359, %s360, %s361
    %p365 = pneg %p359
    %p366 = scmp.eq.s32.totalorder %s22, 1
    %p367 = por %p365, %p366
    %p368 = scmp.ne.s32.totalorder %s360, %s363
    %p369 = scmp.eq.s32.totalorder %s22, 0
    %p370 = por %p368, %p369
    %p371 = scmp.ne.s32.totalorder %s360, %s363
    %p372 = scmp.eq.s32.totalorder %s27, 1
    %p373 = por %p371, %p372
    %p374 = scmp.ne.s32.totalorder %s363, %s364
    %p375 = scmp.eq.s32.totalorder %s27, 0
    %p376 = por %p374, %p375
    %p377 = scmp.ne.s32.totalorder %s363, %s364
    %p378 = scmp.eq.s32.totalorder %s28, 1
    %p379 = por %p377, %p378
    %p381 = scmp.ne.s32.totalorder %s364, %s380
    %p382 = scmp.eq.s32.totalorder %s28, 0
    %p383 = por %p381, %p382
    %s385 = sadd.s32 %s384, 1
    %p388 = scmp.eq.s32.totalorder %s22, 1
    %p389 = scmp.ne.s32.totalorder %s384, %s386
    %p390 = scmp.eq.s32.totalorder %s22, 0
    %p391 = por %p389, %p390
    %p392 = scmp.ne.s32.totalorder %s384, %s386
    %p393 = scmp.eq.s32.totalorder %s27, 1
    %p394 = por %p392, %p393
    %p395 = scmp.ne.s32.totalorder %s386, %s387
    %p396 = scmp.eq.s32.totalorder %s27, 0
    %p397 = por %p395, %p396
    %p398 = scmp.ne.s32.totalorder %s386, %s387
    %p399 = scmp.eq.s32.totalorder %s28, 1
    %p400 = por %p398, %p399
    %p402 = scmp.ne.s32.totalorder %s387, %s401
    %p403 = scmp.eq.s32.totalorder %s28, 0
    %p404 = por %p402, %p403
    %s406 = sadd.s32 %s405, 1
    %p409 = scmp.eq.s32.totalorder %s22, 1
    %p410 = scmp.ne.s32.totalorder %s405, %s407
    %p411 = scmp.eq.s32.totalorder %s22, 0
    %p412 = por %p410, %p411
    %p413 = scmp.ne.s32.totalorder %s405, %s407
    %p414 = scmp.eq.s32.totalorder %s27, 1
    %p415 = por %p413, %p414
    %p416 = scmp.ne.s32.totalorder %s407, %s408
    %p417 = scmp.eq.s32.totalorder %s27, 0
    %p418 = por %p416, %p417
    %p419 = scmp.ne.s32.totalorder %s407, %s408
    %p420 = scmp.eq.s32.totalorder %s28, 1
    %p421 = por %p419, %p420
    %p423 = scmp.ne.s32.totalorder %s408, %s422
    %p424 = scmp.eq.s32.totalorder %s28, 0
    %p425 = por %p423, %p424
    %s427 = sadd.s32 %s426, 1
    %p430 = scmp.eq.s32.totalorder %s22, 1
    %p431 = scmp.ne.s32.totalorder %s426, %s428
    %p432 = scmp.eq.s32.totalorder %s22, 0
    %p433 = por %p431, %p432
    %p434 = scmp.ne.s32.totalorder %s426, %s428
    %p435 = scmp.eq.s32.totalorder %s27, 1
    %p436 = por %p434, %p435
    %p437 = scmp.ne.s32.totalorder %s428, %s429
    %p438 = scmp.eq.s32.totalorder %s27, 0
    %p439 = por %p437, %p438
    %p440 = scmp.ne.s32.totalorder %s428, %s429
    %p441 = scmp.eq.s32.totalorder %s28, 1
    %p442 = por %p440, %p441
    %p444 = scmp.ne.s32.totalorder %s429, %s443
    %p445 = scmp.eq.s32.totalorder %s28, 0
    %p446 = por %p444, %p445
    %p447 = scmp.le.s32.totalorder 1, %s22
    %p448 = scmp.lt.s32.totalorder %s22, 3
    %p449 = pnand %p447, %p448
    %p450 = pneg %p449
    // Predicated region
    $region9: #{pointcloud_encoder_forward.3} parent=5 // pred_check
      _
    $region10: #{pointcloud_encoder_forward.3} parent=5 // pred_check_branch
      %452 = sbr.rel (%p449) target = $region12
    $region11: #{pointcloud_encoder_forward.3} parent=5 // pred_region
      %s453 = ssub.s32 %s22, 1
      // Predicated region
      $region13: #{pointcloud_encoder_forward.3} parent=11 // pred_check
        %p454 = pneg %p43
      $region14: #{pointcloud_encoder_forward.3} parent=11 // pred_check_branch
        %456 = sbr.rel (%p454) target = $region16
      $region15: #{pointcloud_encoder_forward.3} parent=11 // pred_region
        _
      $region16: #{pointcloud_encoder_forward.3} parent=11 // pred_fallthru
        _
      // Predicated region
      $region17: #{pointcloud_encoder_forward.3} parent=11 // pred_check
        %p457 = pneg %p64
      $region18: #{pointcloud_encoder_forward.3} parent=11 // pred_check_branch
        %459 = sbr.rel (%p457) target = $region20
      $region19: #{pointcloud_encoder_forward.3} parent=11 // pred_region
        _
      $region20: #{pointcloud_encoder_forward.3} parent=11 // pred_fallthru
        _
      // Predicated region
      $region21: #{pointcloud_encoder_forward.3} parent=11 // pred_check
        %p460 = pneg %p397
      $region22: #{pointcloud_encoder_forward.3} parent=11 // pred_check_branch
        %462 = sbr.rel (%p460) target = $region24
      $region23: #{pointcloud_encoder_forward.3} parent=11 // pred_region
        _
      $region24: #{pointcloud_encoder_forward.3} parent=11 // pred_fallthru
        _
      // Predicated region
      $region25: #{pointcloud_encoder_forward.3} parent=11 // pred_check
        %p463 = pneg %p418
      $region26: #{pointcloud_encoder_forward.3} parent=11 // pred_check_branch
        %465 = sbr.rel (%p463) target = $region28
      $region27: #{pointcloud_encoder_forward.3} parent=11 // pred_region
        _
      $region28: #{pointcloud_encoder_forward.3} parent=11 // pred_fallthru
        _
    $region12: #{pointcloud_encoder_forward.3} parent=5 // pred_fallthru
      _
    %p466 = scmp.lt.s32.totalorder %s22, 2
    // Predicated region
    $region29: #{pointcloud_encoder_forward.3} parent=5 // pred_check
      %p467 = pneg %p466
    $region30: #{pointcloud_encoder_forward.3} parent=5 // pred_check_branch
      %469 = sbr.rel (%p467) target = $region32
    $region31: #{pointcloud_encoder_forward.3} parent=5 // pred_region
      // Predicated region
      $region33: #{pointcloud_encoder_forward.3} parent=31 // pred_check
        %p470 = pneg %p84
      $region34: #{pointcloud_encoder_forward.3} parent=31 // pred_check_branch
        %472 = sbr.rel (%p470) target = $region36
      $region35: #{pointcloud_encoder_forward.3} parent=31 // pred_region
        %p473 = scmp.lt.s32.totalorder %s22, 1
        %s474 = scalar_select %p473, %s22, 1
        %s475 = scalar_lea.vmem %s2, %s474
      $region36: #{pointcloud_encoder_forward.3} parent=31 // pred_fallthru
        _
      // Predicated region
      $region37: #{pointcloud_encoder_forward.3} parent=31 // pred_check
        %p476 = pneg %p110
      $region38: #{pointcloud_encoder_forward.3} parent=31 // pred_check_branch
        %478 = sbr.rel (%p476) target = $region40
      $region39: #{pointcloud_encoder_forward.3} parent=31 // pred_region
        %p479 = scmp.lt.s32.totalorder %s22, 1
        %s480 = scalar_select %p479, %s22, 1
        %s481 = scalar_lea.vmem %s3, %s480
      $region40: #{pointcloud_encoder_forward.3} parent=31 // pred_fallthru
        _
      // Predicated region
      $region41: #{pointcloud_encoder_forward.3} parent=31 // pred_check
        %p482 = pneg %p136
      $region42: #{pointcloud_encoder_forward.3} parent=31 // pred_check_branch
        %484 = sbr.rel (%p482) target = $region44
      $region43: #{pointcloud_encoder_forward.3} parent=31 // pred_region
        %p485 = scmp.lt.s32.totalorder %s22, 1
        %s486 = scalar_select %p485, %s22, 1
        %s487 = smul.addr %s486, 4
        %s488 = smul.addr %s487, 4
        %s489 = scalar_lea.vmem %s4, %s488
      $region44: #{pointcloud_encoder_forward.3} parent=31 // pred_fallthru
        _
      // Predicated region
      $region45: #{pointcloud_encoder_forward.3} parent=31 // pred_check
        %p490 = pneg %p162
      $region46: #{pointcloud_encoder_forward.3} parent=31 // pred_check_branch
        %492 = sbr.rel (%p490) target = $region48
      $region47: #{pointcloud_encoder_forward.3} parent=31 // pred_region
        %p493 = scmp.lt.s32.totalorder %s22, 1
        %s494 = scalar_select %p493, %s22, 1
        %s495 = scalar_lea.vmem %s5, %s494
      $region48: #{pointcloud_encoder_forward.3} parent=31 // pred_fallthru
        _
      // Predicated region
      $region49: #{pointcloud_encoder_forward.3} parent=31 // pred_check
        %p496 = pneg %p188
      $region50: #{pointcloud_encoder_forward.3} parent=31 // pred_check_branch
        %498 = sbr.rel (%p496) target = $region52
      $region51: #{pointcloud_encoder_forward.3} parent=31 // pred_region
        %p499 = scmp.lt.s32.totalorder %s22, 1
        %s500 = scalar_select %p499, %s22, 1
        %s501 = smul.addr %s500, 4
        %s502 = smul.addr %s501, 4
        %s503 = scalar_lea.vmem %s6, %s502
      $region52: #{pointcloud_encoder_forward.3} parent=31 // pred_fallthru
        _
      // Predicated region
      $region53: #{pointcloud_encoder_forward.3} parent=31 // pred_check
        %p504 = pneg %p214
      $region54: #{pointcloud_encoder_forward.3} parent=31 // pred_check_branch
        %506 = sbr.rel (%p504) target = $region56
      $region55: #{pointcloud_encoder_forward.3} parent=31 // pred_region
        %p507 = scmp.lt.s32.totalorder %s22, 1
        %s508 = scalar_select %p507, %s22, 1
        %s509 = scalar_lea.vmem %s7, %s508
      $region56: #{pointcloud_encoder_forward.3} parent=31 // pred_fallthru
        _
      // Predicated region
      $region57: #{pointcloud_encoder_forward.3} parent=31 // pred_check
        %p510 = pneg %p240
      $region58: #{pointcloud_encoder_forward.3} parent=31 // pred_check_branch
        %512 = sbr.rel (%p510) target = $region60
      $region59: #{pointcloud_encoder_forward.3} parent=31 // pred_region
        %p513 = scmp.lt.s32.totalorder %s22, 1
        %s514 = scalar_select %p513, %s22, 1
        %s515 = scalar_lea.vmem %s8, %s514
      $region60: #{pointcloud_encoder_forward.3} parent=31 // pred_fallthru
        _
      // Predicated region
      $region61: #{pointcloud_encoder_forward.3} parent=31 // pred_check
        %p516 = pneg %p266
      $region62: #{pointcloud_encoder_forward.3} parent=31 // pred_check_branch
        %518 = sbr.rel (%p516) target = $region64
      $region63: #{pointcloud_encoder_forward.3} parent=31 // pred_region
        %p519 = scmp.lt.s32.totalorder %s22, 1
        %s520 = scalar_select %p519, %s22, 1
        %s521 = scalar_lea.vmem %s9, %s520
      $region64: #{pointcloud_encoder_forward.3} parent=31 // pred_fallthru
        _
      // Predicated region
      $region65: #{pointcloud_encoder_forward.3} parent=31 // pred_check
        %p522 = pneg %p292
      $region66: #{pointcloud_encoder_forward.3} parent=31 // pred_check_branch
        %524 = sbr.rel (%p522) target = $region68
      $region67: #{pointcloud_encoder_forward.3} parent=31 // pred_region
        %p525 = scmp.lt.s32.totalorder %s22, 1
        %s526 = scalar_select %p525, %s22, 1
        %s527 = smul.addr %s526, 4
        %s528 = smul.addr %s527, 4
        %s529 = scalar_lea.vmem %s10, %s528
      $region68: #{pointcloud_encoder_forward.3} parent=31 // pred_fallthru
        _
      // Predicated region
      $region69: #{pointcloud_encoder_forward.3} parent=31 // pred_check
        %p530 = pneg %p318
      $region70: #{pointcloud_encoder_forward.3} parent=31 // pred_check_branch
        %532 = sbr.rel (%p530) target = $region72
      $region71: #{pointcloud_encoder_forward.3} parent=31 // pred_region
        %p533 = scmp.lt.s32.totalorder %s22, 1
        %s534 = scalar_select %p533, %s22, 1
        %s535 = scalar_lea.vmem %s11, %s534
      $region72: #{pointcloud_encoder_forward.3} parent=31 // pred_fallthru
        _
      // Predicated region
      $region73: #{pointcloud_encoder_forward.3} parent=31 // pred_check
        %p536 = pneg %p344
      $region74: #{pointcloud_encoder_forward.3} parent=31 // pred_check_branch
        %538 = sbr.rel (%p536) target = $region76
      $region75: #{pointcloud_encoder_forward.3} parent=31 // pred_region
        %p539 = scmp.lt.s32.totalorder %s22, 1
        %s540 = scalar_select %p539, %s22, 1
        %s541 = smul.addr %s540, 16
        %s542 = smul.addr %s541, 4
        %s543 = scalar_lea.vmem %s12, %s542
      $region76: #{pointcloud_encoder_forward.3} parent=31 // pred_fallthru
        _
      // Predicated region
      $region77: #{pointcloud_encoder_forward.3} parent=31 // pred_check
        %p544 = pneg %p370
      $region78: #{pointcloud_encoder_forward.3} parent=31 // pred_check_branch
        %546 = sbr.rel (%p544) target = $region80
      $region79: #{pointcloud_encoder_forward.3} parent=31 // pred_region
        %p547 = scmp.lt.s32.totalorder %s22, 1
        %s548 = scalar_select %p547, %s22, 1
        %s549 = scalar_lea.vmem %s13, %s548
      $region80: #{pointcloud_encoder_forward.3} parent=31 // pred_fallthru
        _
    $region32: #{pointcloud_encoder_forward.3} parent=5 // pred_fallthru
      _
    %p550 = scmp.le.s32.totalorder 1, %s22
    %p551 = scmp.lt.s32.totalorder %s22, 3
    %p552 = pnand %p550, %p551
    %p553 = pneg %p552
    // Predicated region
    $region81: #{pointcloud_encoder_forward.3} parent=5 // pred_check
      _
    $region82: #{pointcloud_encoder_forward.3} parent=5 // pred_check_branch
      %555 = sbr.rel (%p552) target = $region84
    $region83: #{pointcloud_encoder_forward.3} parent=5 // pred_region
      %s556 = ssub.s32 %s22, 1
      %p557 = pneg %p43
      %p558 = pneg %p40
      %p559 = pneg %p64
      %p560 = pneg %p61
      %p561 = scmp.lt.s32.totalorder %s27, 1
      %s562 = scalar_select %p561, %s27, 1
      %s563 = scalar_lea.vmem %s2, %s562
      %p564 = pneg %p90
      %p565 = pneg %p87
      %p566 = scmp.lt.s32.totalorder %s27, 1
      %s567 = scalar_select %p566, %s27, 1
      %s568 = scalar_lea.vmem %s3, %s567
      %p569 = pneg %p116
      %p570 = pneg %p113
      %p571 = scmp.lt.s32.totalorder %s27, 1
      %s572 = scalar_select %p571, %s27, 1
      %s573 = smul.addr %s572, 4
      %s574 = smul.addr %s573, 4
      %s575 = scalar_lea.vmem %s4, %s574
      %p576 = pneg %p142
      %p577 = pneg %p139
      %p578 = scmp.lt.s32.totalorder %s27, 1
      %s579 = scalar_select %p578, %s27, 1
      %s580 = scalar_lea.vmem %s5, %s579
      %p581 = pneg %p168
      %p582 = pneg %p165
      %p583 = scmp.lt.s32.totalorder %s27, 1
      %s584 = scalar_select %p583, %s27, 1
      %s585 = smul.addr %s584, 4
      %s586 = smul.addr %s585, 4
      %s587 = scalar_lea.vmem %s6, %s586
      %p588 = pneg %p194
      %p589 = pneg %p191
      %p590 = scmp.lt.s32.totalorder %s27, 1
      %s591 = scalar_select %p590, %s27, 1
      %s592 = scalar_lea.vmem %s7, %s591
      %p593 = pneg %p220
      %p594 = pneg %p217
      %p595 = scmp.lt.s32.totalorder %s27, 1
      %s596 = scalar_select %p595, %s27, 1
      %s597 = scalar_lea.vmem %s8, %s596
      %p598 = pneg %p246
      %p599 = pneg %p243
      %p600 = scmp.lt.s32.totalorder %s27, 1
      %s601 = scalar_select %p600, %s27, 1
      %s602 = scalar_lea.vmem %s9, %s601
      %p603 = pneg %p272
      %p604 = pneg %p269
      %p605 = scmp.lt.s32.totalorder %s27, 1
      %s606 = scalar_select %p605, %s27, 1
      %s607 = smul.addr %s606, 4
      %s608 = smul.addr %s607, 4
      %s609 = scalar_lea.vmem %s10, %s608
      %p610 = pneg %p298
      %p611 = pneg %p295
      %p612 = scmp.lt.s32.totalorder %s27, 1
      %s613 = scalar_select %p612, %s27, 1
      %s614 = scalar_lea.vmem %s11, %s613
      %p615 = pneg %p324
      %p616 = pneg %p321
      %p617 = scmp.lt.s32.totalorder %s27, 1
      %s618 = scalar_select %p617, %s27, 1
      %s619 = smul.addr %s618, 16
      %s620 = smul.addr %s619, 4
      %s621 = scalar_lea.vmem %s12, %s620
      %p622 = pneg %p350
      %p623 = pneg %p347
      %p624 = scmp.lt.s32.totalorder %s27, 1
      %s625 = scalar_select %p624, %s27, 1
      %s626 = scalar_lea.vmem %s13, %s625
      %p627 = pneg %p376
      %p628 = pneg %p373
      %p629 = pneg %p397
      %p630 = pneg %p394
      %p631 = pneg %p418
      %p632 = pneg %p415
      %p633 = pneg %p439
      %p634 = pneg %p436
      %p635 = scmp.lt.s32.totalorder %s27, 1
      %s636 = scalar_select %p635, %s27, 1
      %s637 = scalar_lea.vmem %s2, %s636
      %p638 = scmp.lt.s32.totalorder %s27, 1
      %s639 = scalar_select %p638, %s27, 1
      %s640 = scalar_lea.vmem %s3, %s639
      %p641 = scmp.lt.s32.totalorder %s27, 1
      %s642 = scalar_select %p641, %s27, 1
      %s643 = smul.addr %s642, 4
      %s644 = smul.addr %s643, 4
      %s645 = scalar_lea.vmem %s4, %s644
      %p646 = scmp.lt.s32.totalorder %s27, 1
      %s647 = scalar_select %p646, %s27, 1
      %s648 = scalar_lea.vmem %s5, %s647
      %p649 = scmp.lt.s32.totalorder %s27, 1
      %s650 = scalar_select %p649, %s27, 1
      %s651 = smul.addr %s650, 4
      %s652 = smul.addr %s651, 4
      %s653 = scalar_lea.vmem %s6, %s652
      %p654 = scmp.lt.s32.totalorder %s27, 1
      %s655 = scalar_select %p654, %s27, 1
      %s656 = scalar_lea.vmem %s7, %s655
      %p657 = scmp.lt.s32.totalorder %s27, 1
      %s658 = scalar_select %p657, %s27, 1
      %s659 = scalar_lea.vmem %s8, %s658
      %p660 = scmp.lt.s32.totalorder %s27, 1
      %s661 = scalar_select %p660, %s27, 1
      %s662 = scalar_lea.vmem %s9, %s661
      %p663 = scmp.lt.s32.totalorder %s27, 1
      %s664 = scalar_select %p663, %s27, 1
      %s665 = smul.addr %s664, 4
      %s666 = smul.addr %s665, 4
      %s667 = scalar_lea.vmem %s10, %s666
      %p668 = scmp.lt.s32.totalorder %s27, 1
      %s669 = scalar_select %p668, %s27, 1
      %s670 = scalar_lea.vmem %s11, %s669
      %p671 = scmp.lt.s32.totalorder %s27, 1
      %s672 = scalar_select %p671, %s27, 1
      %s673 = smul.addr %s672, 16
      %s674 = smul.addr %s673, 4
      %s675 = scalar_lea.vmem %s12, %s674
      %p676 = scmp.lt.s32.totalorder %s27, 1
      %s677 = scalar_select %p676, %s27, 1
      %s678 = scalar_lea.vmem %s13, %s677
      %p680 = scmp.eq.s32.totalorder %s27, 0
      // Predicated region
      $region85: #{pointcloud_encoder_forward.3} parent=83 // pred_check
        %p681 = pneg %p680
      $region86: #{pointcloud_encoder_forward.3} parent=83 // pred_check_branch
        %683 = sbr.rel (%p681) target = $region88
      $region87: #{pointcloud_encoder_forward.3} parent=83 // pred_region
        %v684 = vld [vmem:[%s0] sm:$0xff]
        %v685 = vld [vmem:[%s0 + $0x8] sm:$0xff]
        %vm686 = vcmask 261120
        %687 = vst.msk [vmem:[%s16] sm:$0xff] %vm686, %v684
        %688 = vst.msk [vmem:[%s16 + $0x8] sm:$0xff] %vm686, %v685
      $region88: #{pointcloud_encoder_forward.3} parent=83 // pred_fallthru
        _
      %v689 = vld [vmem:[%s16] sm:$0xff]
      %v690 = vld [vmem:[%s16 + $0x8] sm:$0xff]
      %v691 = vld [vmem:[%s637] sm:$0x1]
      %v692 = vld [vmem:[%s640] sm:$0x1]
      %vm693 = vcmask 261120
      %v694 = vsel %vm693, %v689, 0.0
      %695 = vadd.xlane.f32.xlu0 %v694
      %v696 = vpop.xlane.xlu0 %695
      %v697 = vsel %vm693, %v690, 0.0
      %698 = vadd.xlane.f32.xlu0 %v697
      %v699 = vpop.xlane.xlu0 %698
      %v700 = vrcp.pop 32.0
      %v701 = vmul.f32 %v696, %v700
      %v702 = vmul.f32 %v699, %v700
      %v703 = vsub.f32 %v689, %v701
      %v704 = vsub.f32 %v690, %v702
      %v705 = vmul.f32 %v703, %v703
      %v706 = vmul.f32 %v704, %v704
      %v707 = vsel %vm693, %v705, 0.0
      %708 = vadd.xlane.f32.xlu0 %v707
      %v709 = vpop.xlane.xlu0 %708
      %v710 = vsel %vm693, %v706, 0.0
      %711 = vadd.xlane.f32.xlu0 %v710
      %v712 = vpop.xlane.xlu0 %711
      %v713 = vmul.f32 %v709, %v700
      %v714 = vmul.f32 %v712, %v700
      %v715 = vadd.f32 %v713, 1e-05
      %v716 = vadd.f32 %v714, 1e-05
      %v717 = vrsqrt.pop %v715
      %v718 = vrsqrt.pop %v716
      %v719 = vmul.f32 %v703, %v717
      %v720 = vmul.f32 %v704, %v718
      %v722 = vlaneseq
      %v723 = vshrl.u32 %v722, 7
      %v724 = vsub.s32 0, %v723
      %v725 = vrot.slane %v691, %v724
      %v727 = vmul.f32 %v719, %v725
      %v728 = vmul.f32 %v720, %v725
      %v730 = vlaneseq
      %v731 = vshrl.u32 %v730, 7
      %v732 = vsub.s32 0, %v731
      %v733 = vrot.slane %v692, %v732
      %v735 = vadd.f32 %v727, %v733
      %v736 = vadd.f32 %v728, %v733
      %v737 = vpack.c.bf16 %v736, %v735
      %v738 = vld [vmem:[%s645] sm:$0xf]
      %v739 = vld [vmem:[%s645 + $0x4] sm:$0xf]
      %v740 = vld [vmem:[%s645 + $0x8] sm:$0xf]
      %v741 = vld [vmem:[%s645 + $0xc] sm:$0xf]
      %v742 = vld [vmem:[%s648] sm:$0x1]
      %v744 = vlaneseq
      %v745 = vshrl.u32 %v744, 7
      %v746 = vsub.s32 0, %v745
      %v747 = vrot.slane %v742, %v746
      %v753 = vunpack.c.l.b16 %v738
      %v754 = vunpack.c.l.b16 %v739
      %v755 = vunpack.c.l.b16 %v740
      %v756 = vunpack.c.l.b16 %v741
      %v757 = vpack.c.b16 %v754, %v753
      %v758 = vpack.c.b16 %v756, %v755
      %v762 = vsel %vm693, %v737, 0
      %764 = vmatprep.subr.bf16.mxu0 0
      %765 = vmatpush1.bf16.msra.mxu0 0
      %766 = vmatprep.subr.bf16.mxu0 0
      %767 = vmatpush1.bf16.msra.mxu0 0
      %768 = vmatprep.subr.bf16.mxu0 0
      %769 = vmatpush1.bf16.msra.mxu0 0
      %770 = vmatprep.subr.bf16.mxu0 0
      %771 = vmatpush1.bf16.msra.mxu0 0
      %772 = vmatprep.subr.bf16.mxu0 0
      %773 = vmatpush1.bf16.msra.mxu0 0
      %774 = vmatprep.subr.bf16.mxu0 0
      %775 = vmatpush1.bf16.msra.mxu0 0
      %776 = vmatprep.subr.bf16.mxu0 0
      %777 = vmatpush1.bf16.msra.mxu0 %v758
      %778 = vmatprep.subr.bf16.mxu0 0
      %779 = vmatpush1.bf16.msra.mxu0 %v757
      %780 = vmatprep.subr.bf16.mxu0 0
      %781 = vmatpush2.bf16.msra.mxu0 0
      %782 = vmatprep.subr.bf16.mxu0 0
      %783 = vmatpush2.bf16.msra.mxu0 0
      %784 = vmatprep.subr.bf16.mxu0 0
      %785 = vmatpush2.bf16.msra.mxu0 0
      %786 = vmatprep.subr.bf16.mxu0 0
      %787 = vmatpush2.bf16.msra.mxu0 0
      %788 = vmatprep.subr.bf16.mxu0 0
      %789 = vmatpush2.bf16.msra.mxu0 0
      %790 = vmatprep.subr.bf16.mxu0 0
      %791 = vmatpush2.bf16.msra.mxu0 0
      %792 = vmatprep.subr.bf16.mxu0 0
      %793 = vmatpush2.bf16.msra.mxu0 0
      %794 = vmatprep.subr.bf16.mxu0 0
      %795 = vmatpush2.bf16.msra.mxu0 0
      %796 = vmatprep.mubr.bf16.mxu0 0
      %797 = vmatmul.mubr.bf16.gmra.mxu0 %v762
      %v798 = vpop.f32.mrf.mxu0
      %v799 = vadd.f32 %v747, %v798
      %v800 = vpop.f32.mrf.mxu0
      %v801 = vpop.f32.mrf.mxu0
      %v802 = vadd.f32 %v747, %v801
      %v803 = vpop.f32.mrf.mxu0
      %804 = vdwg.mxu0
      %v805 = vld [vmem:[%s1] sm:$0xff]
      %v806 = vld [vmem:[%s1 + $0x8] sm:$0xff]
      %v807 = vpack.c.bf16 %v802, %v799
      %809 = vrot.lane.b32.xlu0 %v807, 96
      %v810 = vpop.permute.xlu0 %809
      %vm811 = vcmask 64512
      %v813 = vsel %vm811, %v807, 0
      %v816 = vsel %vm811, %v810, 0
      %818 = vmatprep.subr.bf16.mxu0 0
      %819 = vmatpush1.bf16.xpose.msra.mxu0 0
      %820 = vmatprep.subr.bf16.mxu0 0
      %821 = vmatpush1.bf16.xpose.msra.mxu0 0
      %822 = vmatprep.subr.bf16.mxu0 0
      %823 = vmatpush1.bf16.xpose.msra.mxu0 0
      %824 = vmatprep.subr.bf16.mxu0 0
      %825 = vmatpush1.bf16.xpose.msra.mxu0 0
      %826 = vmatprep.subr.bf16.mxu0 0
      %827 = vmatpush1.bf16.xpose.msra.mxu0 0
      %828 = vmatprep.subr.bf16.mxu0 0
      %829 = vmatpush1.bf16.xpose.msra.mxu0 0
      %830 = vmatprep.subr.bf16.mxu0 0
      %831 = vmatpush1.bf16.xpose.msra.mxu0 0
      %832 = vmatprep.subr.bf16.mxu0 0
      %833 = vmatpush1.bf16.xpose.msra.mxu0 %v816
      %834 = vmatprep.subr.bf16.mxu0 0
      %835 = vmatpush2.bf16.xpose.msra.mxu0 0
      %836 = vmatprep.subr.bf16.mxu0 0
      %837 = vmatpush2.bf16.xpose.msra.mxu0 0
      %838 = vmatprep.subr.bf16.mxu0 0
      %839 = vmatpush2.bf16.xpose.msra.mxu0 0
      %840 = vmatprep.subr.bf16.mxu0 0
      %841 = vmatpush2.bf16.xpose.msra.mxu0 0
      %842 = vmatprep.subr.bf16.mxu0 0
      %843 = vmatpush2.bf16.xpose.msra.mxu0 0
      %844 = vmatprep.subr.bf16.mxu0 0
      %845 = vmatpush2.bf16.xpose.msra.mxu0 0
      %846 = vmatprep.subr.bf16.mxu0 0
      %847 = vmatpush2.bf16.xpose.msra.mxu0 0
      %848 = vmatprep.subr.bf16.mxu0 0
      %849 = vmatpush2.bf16.xpose.msra.mxu0 0
      %850 = vmatprep.mubr.bf16.mxu0 0
      %851 = vmatmul.mubr.bf16.gmra.mxu0 %v813
      %v852 = vpop.f32.mrf.mxu0
      %v853 = vadd.f32 0.0, %v852
      %v854 = vpop.f32.mrf.mxu0
      %v855 = vpop.f32.mrf.mxu0
      %v856 = vadd.f32 0.0, %v855
      %v857 = vpop.f32.mrf.mxu0
      %858 = vdwg.mxu0
      %v859 = vmul.f32 %v853, 0.35355338
      %v860 = vmul.f32 %v856, 0.35355338
      %v861 = vadd.f32 %v859, %v805
      %v862 = vadd.f32 %v860, %v806
      %vm863 = vcmask 130048
      %v864 = vsel %vm863, %v861, -inf
      %865 = vmax.xlane.f32.xlu0 %v864
      %v866 = vpop.xlane.xlu0 %865
      %v867 = vsel %vm863, %v862, -inf
      %868 = vmax.xlane.f32.xlu0 %v867
      %v869 = vpop.xlane.xlu0 %868
      %v870 = vsub.f32 %v861, %v866
      %v871 = vsub.f32 %v862, %v869
      %v872 = vmul.f32 %v870, 1.442695
      %v873 = vpow.pop %v872
      %v874 = vmul.f32 %v871, 1.442695
      %v875 = vpow.pop %v874
      %v876 = vsel %vm863, %v873, 0.0
      %877 = vadd.xlane.f32.xlu0 %v876
      %v878 = vpop.xlane.xlu0 %877
      %v879 = vsel %vm863, %v875, 0.0
      %880 = vadd.xlane.f32.xlu0 %v879
      %v881 = vpop.xlane.xlu0 %880
      %v882 = vrcp.pop %v878
      %v883 = vrcp.pop %v881
      %v884 = vmul.f32 %v873, %v882
      %v885 = vmul.f32 %v875, %v883
      %v886 = vpack.c.bf16 %v885, %v884
      %887 = vrot.lane.b32.xlu0 %v807, 64
      %v888 = vpop.permute.xlu0 %887
      %v891 = vsel %vm863, %v886, 0
      %893 = vmatprep.subr.bf16.mxu0 0
      %894 = vmatpush1.bf16.msra.mxu0 0
      %895 = vmatprep.subr.bf16.mxu0 0
      %896 = vmatpush1.bf16.msra.mxu0 0
      %897 = vmatprep.subr.bf16.mxu0 0
      %898 = vmatpush1.bf16.msra.mxu0 0
      %899 = vmatprep.subr.bf16.mxu0 0
      %900 = vmatpush1.bf16.msra.mxu0 0
      %901 = vmatprep.subr.bf16.mxu0 0
      %902 = vmatpush1.bf16.msra.mxu0 0
      %903 = vmatprep.subr.bf16.mxu0 0
      %904 = vmatpush1.bf16.msra.mxu0 0
      %905 = vmatprep.subr.bf16.mxu0 0
      %906 = vmatpush1.bf16.msra.mxu0 0
      %907 = vmatprep.subr.bf16.mxu0 0
      %908 = vmatpush1.bf16.msra.mxu0 %v888
      %909 = vmatprep.subr.bf16.mxu0 0
      %910 = vmatpush2.bf16.msra.mxu0 0
      %911 = vmatprep.subr.bf16.mxu0 0
      %912 = vmatpush2.bf16.msra.mxu0 0
      %913 = vmatprep.subr.bf16.mxu0 0
      %914 = vmatpush2.bf16.msra.mxu0 0
      %915 = vmatprep.subr.bf16.mxu0 0
      %916 = vmatpush2.bf16.msra.mxu0 0
      %917 = vmatprep.subr.bf16.mxu0 0
      %918 = vmatpush2.bf16.msra.mxu0 0
      %919 = vmatprep.subr.bf16.mxu0 0
      %920 = vmatpush2.bf16.msra.mxu0 0
      %921 = vmatprep.subr.bf16.mxu0 0
      %922 = vmatpush2.bf16.msra.mxu0 0
      %923 = vmatprep.subr.bf16.mxu0 0
      %924 = vmatpush2.bf16.msra.mxu0 0
      %925 = vmatprep.mubr.bf16.mxu0 0
      %926 = vmatmul.mubr.bf16.gmra.mxu0 %v891
      %v927 = vpop.f32.mrf.mxu0
      %v928 = vadd.f32 0.0, %v927
      %v929 = vpop.f32.mrf.mxu0
      %v930 = vpop.f32.mrf.mxu0
      %v931 = vadd.f32 0.0, %v930
      %v932 = vpop.f32.mrf.mxu0
      %933 = vdwg.mxu0
      %934 = vrot.lane.b32.xlu0 %v807, 120
      %v935 = vpop.permute.xlu0 %934
      %936 = vrot.lane.b32.xlu0 %v807, 88
      %v937 = vpop.permute.xlu0 %936
      %v939 = vsel %vm811, %v935, 0
      %v942 = vsel %vm811, %v937, 0
      %944 = vmatprep.subr.bf16.mxu0 0
      %945 = vmatpush1.bf16.xpose.msra.mxu0 0
      %946 = vmatprep.subr.bf16.mxu0 0
      %947 = vmatpush1.bf16.xpose.msra.mxu0 0
      %948 = vmatprep.subr.bf16.mxu0 0
      %949 = vmatpush1.bf16.xpose.msra.mxu0 0
      %950 = vmatprep.subr.bf16.mxu0 0
      %951 = vmatpush1.bf16.xpose.msra.mxu0 0
      %952 = vmatprep.subr.bf16.mxu0 0
      %953 = vmatpush1.bf16.xpose.msra.mxu0 0
      %954 = vmatprep.subr.bf16.mxu0 0
      %955 = vmatpush1.bf16.xpose.msra.mxu0 0
      %956 = vmatprep.subr.bf16.mxu0 0
      %957 = vmatpush1.bf16.xpose.msra.mxu0 0
      %958 = vmatprep.subr.bf16.mxu0 0
      %959 = vmatpush1.bf16.xpose.msra.mxu0 %v942
      %960 = vmatprep.subr.bf16.mxu0 0
      %961 = vmatpush2.bf16.xpose.msra.mxu0 0
      %962 = vmatprep.subr.bf16.mxu0 0
      %963 = vmatpush2.bf16.xpose.msra.mxu0 0
      %964 = vmatprep.subr.bf16.mxu0 0
      %965 = vmatpush2.bf16.xpose.msra.mxu0 0
      %966 = vmatprep.subr.bf16.mxu0 0
      %967 = vmatpush2.bf16.xpose.msra.mxu0 0
      %968 = vmatprep.subr.bf16.mxu0 0
      %969 = vmatpush2.bf16.xpose.msra.mxu0 0
      %970 = vmatprep.subr.bf16.mxu0 0
      %971 = vmatpush2.bf16.xpose.msra.mxu0 0
      %972 = vmatprep.subr.bf16.mxu0 0
      %973 = vmatpush2.bf16.xpose.msra.mxu0 0
      %974 = vmatprep.subr.bf16.mxu0 0
      %975 = vmatpush2.bf16.xpose.msra.mxu0 0
      %976 = vmatprep.mubr.bf16.mxu0 0
      %977 = vmatmul.mubr.bf16.gmra.mxu0 %v939
      %v978 = vpop.f32.mrf.mxu0
      %v979 = vadd.f32 0.0, %v978
      %v980 = vpop.f32.mrf.mxu0
      %v981 = vpop.f32.mrf.mxu0
      %v982 = vadd.f32 0.0, %v981
      %v983 = vpop.f32.mrf.mxu0
      %984 = vdwg.mxu0
      %v985 = vmul.f32 %v979, 0.35355338
      %v986 = vmul.f32 %v982, 0.35355338
      %v987 = vadd.f32 %v985, %v805
      %v988 = vadd.f32 %v986, %v806
      %v989 = vsel %vm863, %v987, -inf
      %990 = vmax.xlane.f32.xlu0 %v989
      %v991 = vpop.xlane.xlu0 %990
      %v992 = vsel %vm863, %v988, -inf
      %993 = vmax.xlane.f32.xlu0 %v992
      %v994 = vpop.xlane.xlu0 %993
      %v995 = vsub.f32 %v987, %v991
      %v996 = vsub.f32 %v988, %v994
      %v997 = vmul.f32 %v995, 1.442695
      %v998 = vpow.pop %v997
      %v999 = vmul.f32 %v996, 1.442695
      %v1000 = vpow.pop %v999
      %v1001 = vsel %vm863, %v998, 0.0
      %1002 = vadd.xlane.f32.xlu0 %v1001
      %v1003 = vpop.xlane.xlu0 %1002
      %v1004 = vsel %vm863, %v1000, 0.0
      %1005 = vadd.xlane.f32.xlu0 %v1004
      %v1006 = vpop.xlane.xlu0 %1005
      %v1007 = vrcp.pop %v1003
      %v1008 = vrcp.pop %v1006
      %v1009 = vmul.f32 %v998, %v1007
      %v1010 = vmul.f32 %v1000, %v1008
      %v1011 = vpack.c.bf16 %v1010, %v1009
      %1012 = vrot.lane.b32.xlu0 %v807, 56
      %v1013 = vpop.permute.xlu0 %1012
      %v1016 = vsel %vm863, %v1011, 0
      %1018 = vmatprep.subr.bf16.mxu0 0
      %1019 = vmatpush1.bf16.msra.mxu0 0
      %1020 = vmatprep.subr.bf16.mxu0 0
      %1021 = vmatpush1.bf16.msra.mxu0 0
      %1022 = vmatprep.subr.bf16.mxu0 0
      %1023 = vmatpush1.bf16.msra.mxu0 0
      %1024 = vmatprep.subr.bf16.mxu0 0
      %1025 = vmatpush1.bf16.msra.mxu0 0
      %1026 = vmatprep.subr.bf16.mxu0 0
      %1027 = vmatpush1.bf16.msra.mxu0 0
      %1028 = vmatprep.subr.bf16.mxu0 0
      %1029 = vmatpush1.bf16.msra.mxu0 0
      %1030 = vmatprep.subr.bf16.mxu0 0
      %1031 = vmatpush1.bf16.msra.mxu0 0
      %1032 = vmatprep.subr.bf16.mxu0 0
      %1033 = vmatpush1.bf16.msra.mxu0 %v1013
      %1034 = vmatprep.subr.bf16.mxu0 0
      %1035 = vmatpush2.bf16.msra.mxu0 0
      %1036 = vmatprep.subr.bf16.mxu0 0
      %1037 = vmatpush2.bf16.msra.mxu0 0
      %1038 = vmatprep.subr.bf16.mxu0 0
      %1039 = vmatpush2.bf16.msra.mxu0 0
      %1040 = vmatprep.subr.bf16.mxu0 0
      %1041 = vmatpush2.bf16.msra.mxu0 0
      %1042 = vmatprep.subr.bf16.mxu0 0
      %1043 = vmatpush2.bf16.msra.mxu0 0
      %1044 = vmatprep.subr.bf16.mxu0 0
      %1045 = vmatpush2.bf16.msra.mxu0 0
      %1046 = vmatprep.subr.bf16.mxu0 0
      %1047 = vmatpush2.bf16.msra.mxu0 0
      %1048 = vmatprep.subr.bf16.mxu0 0
      %1049 = vmatpush2.bf16.msra.mxu0 0
      %1050 = vmatprep.mubr.bf16.mxu0 0
      %1051 = vmatmul.mubr.bf16.gmra.mxu0 %v1016
      %v1052 = vpop.f32.mrf.mxu0
      %v1053 = vadd.f32 0.0, %v1052
      %v1054 = vpop.f32.mrf.mxu0
      %v1055 = vpop.f32.mrf.mxu0
      %v1056 = vadd.f32 0.0, %v1055
      %v1057 = vpop.f32.mrf.mxu0
      %1058 = vdwg.mxu0
      %1059 = vrot.lane.b32.xlu0 %v807, 112
      %v1060 = vpop.permute.xlu0 %1059
      %1061 = vrot.lane.b32.xlu0 %v807, 80
      %v1062 = vpop.permute.xlu0 %1061
      %v1064 = vsel %vm811, %v1060, 0
      %v1067 = vsel %vm811, %v1062, 0
      %1069 = vmatprep.subr.bf16.mxu0 0
      %1070 = vmatpush1.bf16.xpose.msra.mxu0 0
      %1071 = vmatprep.subr.bf16.mxu0 0
      %1072 = vmatpush1.bf16.xpose.msra.mxu0 0
      %1073 = vmatprep.subr.bf16.mxu0 0
      %1074 = vmatpush1.bf16.xpose.msra.mxu0 0
      %1075 = vmatprep.subr.bf16.mxu0 0
      %1076 = vmatpush1.bf16.xpose.msra.mxu0 0
      %1077 = vmatprep.subr.bf16.mxu0 0
      %1078 = vmatpush1.bf16.xpose.msra.mxu0 0
      %1079 = vmatprep.subr.bf16.mxu0 0
      %1080 = vmatpush1.bf16.xpose.msra.mxu0 0
      %1081 = vmatprep.subr.bf16.mxu0 0
      %1082 = vmatpush1.bf16.xpose.msra.mxu0 0
      %1083 = vmatprep.subr.bf16.mxu0 0
      %1084 = vmatpush1.bf16.xpose.msra.mxu0 %v1067
      %1085 = vmatprep.subr.bf16.mxu0 0
      %1086 = vmatpush2.bf16.xpose.msra.mxu0 0
      %1087 = vmatprep.subr.bf16.mxu0 0
      %1088 = vmatpush2.bf16.xpose.msra.mxu0 0
      %1089 = vmatprep.subr.bf16.mxu0 0
      %1090 = vmatpush2.bf16.xpose.msra.mxu0 0
      %1091 = vmatprep.subr.bf16.mxu0 0
      %1092 = vmatpush2.bf16.xpose.msra.mxu0 0
      %1093 = vmatprep.subr.bf16.mxu0 0
      %1094 = vmatpush2.bf16.xpose.msra.mxu0 0
      %1095 = vmatprep.subr.bf16.mxu0 0
      %1096 = vmatpush2.bf16.xpose.msra.mxu0 0
      %1097 = vmatprep.subr.bf16.mxu0 0
      %1098 = vmatpush2.bf16.xpose.msra.mxu0 0
      %1099 = vmatprep.subr.bf16.mxu0 0
      %1100 = vmatpush2.bf16.xpose.msra.mxu0 0
      %1101 = vmatprep.mubr.bf16.mxu0 0
      %1102 = vmatmul.mubr.bf16.gmra.mxu0 %v1064
      %v1103 = vpop.f32.mrf.mxu0
      %v1104 = vadd.f32 0.0, %v1103
      %v1105 = vpop.f32.mrf.mxu0
      %v1106 = vpop.f32.mrf.mxu0
      %v1107 = vadd.f32 0.0, %v1106
      %v1108 = vpop.f32.mrf.mxu0
      %1109 = vdwg.mxu0
      %v1110 = vmul.f32 %v1104, 0.35355338
      %v1111 = vmul.f32 %v1107, 0.35355338
      %v1112 = vadd.f32 %v1110, %v805
      %v1113 = vadd.f32 %v1111, %v806
      %v1114 = vsel %vm863, %v1112, -inf
      %1115 = vmax.xlane.f32.xlu0 %v1114
      %v1116 = vpop.xlane.xlu0 %1115
      %v1117 = vsel %vm863, %v1113, -inf
      %1118 = vmax.xlane.f32.xlu0 %v1117
      %v1119 = vpop.xlane.xlu0 %1118
      %v1120 = vsub.f32 %v1112, %v1116
      %v1121 = vsub.f32 %v1113, %v1119
      %v1122 = vmul.f32 %v1120, 1.442695
      %v1123 = vpow.pop %v1122
      %v1124 = vmul.f32 %v1121, 1.442695
      %v1125 = vpow.pop %v1124
      %v1126 = vsel %vm863, %v1123, 0.0
      %1127 = vadd.xlane.f32.xlu0 %v1126
      %v1128 = vpop.xlane.xlu0 %1127
      %v1129 = vsel %vm863, %v1125, 0.0
      %1130 = vadd.xlane.f32.xlu0 %v1129
      %v1131 = vpop.xlane.xlu0 %1130
      %v1132 = vrcp.pop %v1128
      %v1133 = vrcp.pop %v1131
      %v1134 = vmul.f32 %v1123, %v1132
      %v1135 = vmul.f32 %v1125, %v1133
      %v1136 = vpack.c.bf16 %v1135, %v1134
      %1137 = vrot.lane.b32.xlu0 %v807, 48
      %v1138 = vpop.permute.xlu0 %1137
      %v1141 = vsel %vm863, %v1136, 0
      %1143 = vmatprep.subr.bf16.mxu0 0
      %1144 = vmatpush1.bf16.msra.mxu0 0
      %1145 = vmatprep.subr.bf16.mxu0 0
      %1146 = vmatpush1.bf16.msra.mxu0 0
      %1147 = vmatprep.subr.bf16.mxu0 0
      %1148 = vmatpush1.bf16.msra.mxu0 0
      %1149 = vmatprep.subr.bf16.mxu0 0
      %1150 = vmatpush1.bf16.msra.mxu0 0
      %1151 = vmatprep.subr.bf16.mxu0 0
      %1152 = vmatpush1.bf16.msra.mxu0 0
      %1153 = vmatprep.subr.bf16.mxu0 0
      %1154 = vmatpush1.bf16.msra.mxu0 0
      %1155 = vmatprep.subr.bf16.mxu0 0
      %1156 = vmatpush1.bf16.msra.mxu0 0
      %1157 = vmatprep.subr.bf16.mxu0 0
      %1158 = vmatpush1.bf16.msra.mxu0 %v1138
      %1159 = vmatprep.subr.bf16.mxu0 0
      %1160 = vmatpush2.bf16.msra.mxu0 0
      %1161 = vmatprep.subr.bf16.mxu0 0
      %1162 = vmatpush2.bf16.msra.mxu0 0
      %1163 = vmatprep.subr.bf16.mxu0 0
      %1164 = vmatpush2.bf16.msra.mxu0 0
      %1165 = vmatprep.subr.bf16.mxu0 0
      %1166 = vmatpush2.bf16.msra.mxu0 0
      %1167 = vmatprep.subr.bf16.mxu0 0
      %1168 = vmatpush2.bf16.msra.mxu0 0
      %1169 = vmatprep.subr.bf16.mxu0 0
      %1170 = vmatpush2.bf16.msra.mxu0 0
      %1171 = vmatprep.subr.bf16.mxu0 0
      %1172 = vmatpush2.bf16.msra.mxu0 0
      %1173 = vmatprep.subr.bf16.mxu0 0
      %1174 = vmatpush2.bf16.msra.mxu0 0
      %1175 = vmatprep.mubr.bf16.mxu0 0
      %1176 = vmatmul.mubr.bf16.gmra.mxu0 %v1141
      %v1177 = vpop.f32.mrf.mxu0
      %v1178 = vadd.f32 0.0, %v1177
      %v1179 = vpop.f32.mrf.mxu0
      %v1180 = vpop.f32.mrf.mxu0
      %v1181 = vadd.f32 0.0, %v1180
      %v1182 = vpop.f32.mrf.mxu0
      %1183 = vdwg.mxu0
      %1184 = vrot.lane.b32.xlu0 %v807, 104
      %v1185 = vpop.permute.xlu0 %1184
      %1186 = vrot.lane.b32.xlu0 %v807, 72
      %v1187 = vpop.permute.xlu0 %1186
      %v1189 = vsel %vm811, %v1185, 0
      %v1192 = vsel %vm811, %v1187, 0
      %1194 = vmatprep.subr.bf16.mxu0 0
      %1195 = vmatpush1.bf16.xpose.msra.mxu0 0
      %1196 = vmatprep.subr.bf16.mxu0 0
      %1197 = vmatpush1.bf16.xpose.msra.mxu0 0
      %1198 = vmatprep.subr.bf16.mxu0 0
      %1199 = vmatpush1.bf16.xpose.msra.mxu0 0
      %1200 = vmatprep.subr.bf16.mxu0 0
      %1201 = vmatpush1.bf16.xpose.msra.mxu0 0
      %1202 = vmatprep.subr.bf16.mxu0 0
      %1203 = vmatpush1.bf16.xpose.msra.mxu0 0
      %1204 = vmatprep.subr.bf16.mxu0 0
      %1205 = vmatpush1.bf16.xpose.msra.mxu0 0
      %1206 = vmatprep.subr.bf16.mxu0 0
      %1207 = vmatpush1.bf16.xpose.msra.mxu0 0
      %1208 = vmatprep.subr.bf16.mxu0 0
      %1209 = vmatpush1.bf16.xpose.msra.mxu0 %v1192
      %1210 = vmatprep.subr.bf16.mxu0 0
      %1211 = vmatpush2.bf16.xpose.msra.mxu0 0
      %1212 = vmatprep.subr.bf16.mxu0 0
      %1213 = vmatpush2.bf16.xpose.msra.mxu0 0
      %1214 = vmatprep.subr.bf16.mxu0 0
      %1215 = vmatpush2.bf16.xpose.msra.mxu0 0
      %1216 = vmatprep.subr.bf16.mxu0 0
      %1217 = vmatpush2.bf16.xpose.msra.mxu0 0
      %1218 = vmatprep.subr.bf16.mxu0 0
      %1219 = vmatpush2.bf16.xpose.msra.mxu0 0
      %1220 = vmatprep.subr.bf16.mxu0 0
      %1221 = vmatpush2.bf16.xpose.msra.mxu0 0
      %1222 = vmatprep.subr.bf16.mxu0 0
      %1223 = vmatpush2.bf16.xpose.msra.mxu0 0
      %1224 = vmatprep.subr.bf16.mxu0 0
      %1225 = vmatpush2.bf16.xpose.msra.mxu0 0
      %1226 = vmatprep.mubr.bf16.mxu0 0
      %1227 = vmatmul.mubr.bf16.gmra.mxu0 %v1189
      %v1228 = vpop.f32.mrf.mxu0
      %v1229 = vadd.f32 0.0, %v1228
      %v1230 = vpop.f32.mrf.mxu0
      %v1231 = vpop.f32.mrf.mxu0
      %v1232 = vadd.f32 0.0, %v1231
      %v1233 = vpop.f32.mrf.mxu0
      %1234 = vdwg.mxu0
      %v1235 = vmul.f32 %v1229, 0.35355338
      %v1236 = vmul.f32 %v1232, 0.35355338
      %v1237 = vadd.f32 %v1235, %v805
      %v1238 = vadd.f32 %v1236, %v806
      %v1239 = vsel %vm863, %v1237, -inf
      %1240 = vmax.xlane.f32.xlu0 %v1239
      %v1241 = vpop.xlane.xlu0 %1240
      %v1242 = vsel %vm863, %v1238, -inf
      %1243 = vmax.xlane.f32.xlu0 %v1242
      %v1244 = vpop.xlane.xlu0 %1243
      %v1245 = vsub.f32 %v1237, %v1241
      %v1246 = vsub.f32 %v1238, %v1244
      %v1247 = vmul.f32 %v1245, 1.442695
      %v1248 = vpow.pop %v1247
      %v1249 = vmul.f32 %v1246, 1.442695
      %v1250 = vpow.pop %v1249
      %v1251 = vsel %vm863, %v1248, 0.0
      %1252 = vadd.xlane.f32.xlu0 %v1251
      %v1253 = vpop.xlane.xlu0 %1252
      %v1254 = vsel %vm863, %v1250, 0.0
      %1255 = vadd.xlane.f32.xlu0 %v1254
      %v1256 = vpop.xlane.xlu0 %1255
      %v1257 = vrcp.pop %v1253
      %v1258 = vrcp.pop %v1256
      %v1259 = vmul.f32 %v1248, %v1257
      %v1260 = vmul.f32 %v1250, %v1258
      %v1261 = vpack.c.bf16 %v1260, %v1259
      %1262 = vrot.lane.b32.xlu0 %v807, 40
      %v1263 = vpop.permute.xlu0 %1262
      %v1266 = vsel %vm863, %v1261, 0
      %1268 = vmatprep.subr.bf16.mxu0 0
      %1269 = vmatpush1.bf16.msra.mxu0 0
      %1270 = vmatprep.subr.bf16.mxu0 0
      %1271 = vmatpush1.bf16.msra.mxu0 0
      %1272 = vmatprep.subr.bf16.mxu0 0
      %1273 = vmatpush1.bf16.msra.mxu0 0
      %1274 = vmatprep.subr.bf16.mxu0 0
      %1275 = vmatpush1.bf16.msra.mxu0 0
      %1276 = vmatprep.subr.bf16.mxu0 0
      %1277 = vmatpush1.bf16.msra.mxu0 0
      %1278 = vmatprep.subr.bf16.mxu0 0
      %1279 = vmatpush1.bf16.msra.mxu0 0
      %1280 = vmatprep.subr.bf16.mxu0 0
      %1281 = vmatpush1.bf16.msra.mxu0 0
      %1282 = vmatprep.subr.bf16.mxu0 0
      %1283 = vmatpush1.bf16.msra.mxu0 %v1263
      %1284 = vmatprep.subr.bf16.mxu0 0
      %1285 = vmatpush2.bf16.msra.mxu0 0
      %1286 = vmatprep.subr.bf16.mxu0 0
      %1287 = vmatpush2.bf16.msra.mxu0 0
      %1288 = vmatprep.subr.bf16.mxu0 0
      %1289 = vmatpush2.bf16.msra.mxu0 0
      %1290 = vmatprep.subr.bf16.mxu0 0
      %1291 = vmatpush2.bf16.msra.mxu0 0
      %1292 = vmatprep.subr.bf16.mxu0 0
      %1293 = vmatpush2.bf16.msra.mxu0 0
      %1294 = vmatprep.subr.bf16.mxu0 0
      %1295 = vmatpush2.bf16.msra.mxu0 0
      %1296 = vmatprep.subr.bf16.mxu0 0
      %1297 = vmatpush2.bf16.msra.mxu0 0
      %1298 = vmatprep.subr.bf16.mxu0 0
      %1299 = vmatpush2.bf16.msra.mxu0 0
      %1300 = vmatprep.mubr.bf16.mxu0 0
      %1301 = vmatmul.mubr.bf16.gmra.mxu0 %v1266
      %v1302 = vpop.f32.mrf.mxu0
      %v1303 = vadd.f32 0.0, %v1302
      %v1304 = vpop.f32.mrf.mxu0
      %v1305 = vpop.f32.mrf.mxu0
      %v1306 = vadd.f32 0.0, %v1305
      %v1307 = vpop.f32.mrf.mxu0
      %1308 = vdwg.mxu0
      %1311 = vrot.lane.b32.xlu0 %v1053, 8
      %v1312 = vpop.permute.xlu0 %1311
      %1313 = vrot.lane.b32.xlu0 %v1056, 8
      %v1314 = vpop.permute.xlu0 %1313
      %1319 = vrot.lane.b32.xlu0 %v1178, 16
      %v1320 = vpop.permute.xlu0 %1319
      %1321 = vrot.lane.b32.xlu0 %v1181, 16
      %v1322 = vpop.permute.xlu0 %1321
      %1327 = vrot.lane.b32.xlu0 %v1303, 24
      %v1328 = vpop.permute.xlu0 %1327
      %1329 = vrot.lane.b32.xlu0 %v1306, 24
      %v1330 = vpop.permute.xlu0 %1329
      %v1333 = vsel %vm811, %v928, %v1312
      %v1334 = vsel %vm811, %v931, %v1314
      %v1335 = vsel %vm863, %v1333, %v1320
      %v1336 = vsel %vm863, %v1334, %v1322
      %vm1337 = vcmask 195584
      %v1338 = vsel %vm1337, %v1335, %v1328
      %v1339 = vsel %vm1337, %v1336, %v1330
      %v1340 = vpack.c.bf16 %v1339, %v1338
      %v1341 = vld [vmem:[%s653] sm:$0xf]
      %v1342 = vld [vmem:[%s653 + $0x4] sm:$0xf]
      %v1343 = vld [vmem:[%s653 + $0x8] sm:$0xf]
      %v1344 = vld [vmem:[%s653 + $0xc] sm:$0xf]
      %v1349 = vunpack.c.l.b16 %v1341
      %v1350 = vunpack.c.l.b16 %v1342
      %v1351 = vunpack.c.l.b16 %v1343
      %v1352 = vunpack.c.l.b16 %v1344
      %v1353 = vpack.c.b16 %v1350, %v1349
      %v1354 = vpack.c.b16 %v1352, %v1351
      %v1358 = vsel %vm693, %v1340, 0
      %1360 = vmatprep.subr.bf16.mxu0 0
      %1361 = vmatpush1.bf16.msra.mxu0 0
      %1362 = vmatprep.subr.bf16.mxu0 0
      %1363 = vmatpush1.bf16.msra.mxu0 0
      %1364 = vmatprep.subr.bf16.mxu0 0
      %1365 = vmatpush1.bf16.msra.mxu0 0
      %1366 = vmatprep.subr.bf16.mxu0 0
      %1367 = vmatpush1.bf16.msra.mxu0 0
      %1368 = vmatprep.subr.bf16.mxu0 0
      %1369 = vmatpush1.bf16.msra.mxu0 0
      %1370 = vmatprep.subr.bf16.mxu0 0
      %1371 = vmatpush1.bf16.msra.mxu0 0
      %1372 = vmatprep.subr.bf16.mxu0 0
      %1373 = vmatpush1.bf16.msra.mxu0 %v1354
      %1374 = vmatprep.subr.bf16.mxu0 0
      %1375 = vmatpush1.bf16.msra.mxu0 %v1353
      %1376 = vmatprep.subr.bf16.mxu0 0
      %1377 = vmatpush2.bf16.msra.mxu0 0
      %1378 = vmatprep.subr.bf16.mxu0 0
      %1379 = vmatpush2.bf16.msra.mxu0 0
      %1380 = vmatprep.subr.bf16.mxu0 0
      %1381 = vmatpush2.bf16.msra.mxu0 0
      %1382 = vmatprep.subr.bf16.mxu0 0
      %1383 = vmatpush2.bf16.msra.mxu0 0
      %1384 = vmatprep.subr.bf16.mxu0 0
      %1385 = vmatpush2.bf16.msra.mxu0 0
      %1386 = vmatprep.subr.bf16.mxu0 0
      %1387 = vmatpush2.bf16.msra.mxu0 0
      %1388 = vmatprep.subr.bf16.mxu0 0
      %1389 = vmatpush2.bf16.msra.mxu0 0
      %1390 = vmatprep.subr.bf16.mxu0 0
      %1391 = vmatpush2.bf16.msra.mxu0 0
      %1392 = vmatprep.mubr.bf16.mxu0 0
      %1393 = vmatmul.mubr.bf16.gmra.mxu0 %v1358
      %v1394 = vpop.f32.mrf.mxu0
      %v1395 = vadd.f32 0.0, %v1394
      %v1396 = vpop.f32.mrf.mxu0
      %v1397 = vpop.f32.mrf.mxu0
      %v1398 = vadd.f32 0.0, %v1397
      %v1399 = vpop.f32.mrf.mxu0
      %1400 = vdwg.mxu0
      %v1401 = vadd.f32 %v689, %v1395
      %v1402 = vadd.f32 %v690, %v1398
      %v1403 = vld [vmem:[%s656] sm:$0x1]
      %v1405 = vlaneseq
      %v1406 = vshrl.u32 %v1405, 7
      %v1407 = vsub.s32 0, %v1406
      %v1408 = vrot.slane %v1403, %v1407
      %v1410 = vadd.f32 %v1401, %v1408
      %v1411 = vadd.f32 %v1402, %v1408
      %v1412 = vld [vmem:[%s659] sm:$0x1]
      %v1413 = vld [vmem:[%s662] sm:$0x1]
      %v1414 = vsel %vm693, %v1410, 0.0
      %1415 = vadd.xlane.f32.xlu0 %v1414
      %v1416 = vpop.xlane.xlu0 %1415
      %v1417 = vsel %vm693, %v1411, 0.0
      %1418 = vadd.xlane.f32.xlu0 %v1417
      %v1419 = vpop.xlane.xlu0 %1418
      %v1420 = vmul.f32 %v1416, %v700
      %v1421 = vmul.f32 %v1419, %v700
      %v1422 = vsub.f32 %v1410, %v1420
      %v1423 = vsub.f32 %v1411, %v1421
      %v1424 = vmul.f32 %v1422, %v1422
      %v1425 = vmul.f32 %v1423, %v1423
      %v1426 = vsel %vm693, %v1424, 0.0
      %1427 = vadd.xlane.f32.xlu0 %v1426
      %v1428 = vpop.xlane.xlu0 %1427
      %v1429 = vsel %vm693, %v1425, 0.0
      %1430 = vadd.xlane.f32.xlu0 %v1429
      %v1431 = vpop.xlane.xlu0 %1430
      %v1432 = vmul.f32 %v1428, %v700
      %v1433 = vmul.f32 %v1431, %v700
      %v1434 = vadd.f32 %v1432, 1e-05
      %v1435 = vadd.f32 %v1433, 1e-05
      %v1436 = vrsqrt.pop %v1434
      %v1437 = vrsqrt.pop %v1435
      %v1438 = vmul.f32 %v1422, %v1436
      %v1439 = vmul.f32 %v1423, %v1437
      %v1441 = vlaneseq
      %v1442 = vshrl.u32 %v1441, 7
      %v1443 = vsub.s32 0, %v1442
      %v1444 = vrot.slane %v1412, %v1443
      %v1446 = vmul.f32 %v1438, %v1444
      %v1447 = vmul.f32 %v1439, %v1444
      %v1449 = vlaneseq
      %v1450 = vshrl.u32 %v1449, 7
      %v1451 = vsub.s32 0, %v1450
      %v1452 = vrot.slane %v1413, %v1451
      %v1454 = vadd.f32 %v1446, %v1452
      %v1455 = vadd.f32 %v1447, %v1452
      %v1456 = vpack.c.bf16 %v1455, %v1454
      %v1457 = vld [vmem:[%s667] sm:$0xf]
      %v1458 = vld [vmem:[%s667 + $0x4] sm:$0xf]
      %v1459 = vld [vmem:[%s667 + $0x8] sm:$0xf]
      %v1460 = vld [vmem:[%s667 + $0xc] sm:$0xf]
      %v1461 = vld [vmem:[%s670] sm:$0x1]
      %v1463 = vlaneseq
      %v1464 = vshrl.u32 %v1463, 7
      %v1465 = vsub.s32 0, %v1464
      %v1466 = vrot.slane %v1461, %v1465
      %v1472 = vunpack.c.l.b16 %v1457
      %v1473 = vunpack.c.l.b16 %v1458
      %v1474 = vunpack.c.l.b16 %v1459
      %v1475 = vunpack.c.l.b16 %v1460
      %v1476 = vpack.c.b16 %v1473, %v1472
      %v1477 = vpack.c.b16 %v1475, %v1474
      %v1481 = vsel %vm693, %v1456, 0
      %1483 = vmatprep.subr.bf16.mxu0 0
      %1484 = vmatpush1.bf16.msra.mxu0 0
      %1485 = vmatprep.subr.bf16.mxu0 0
      %1486 = vmatpush1.bf16.msra.mxu0 0
      %1487 = vmatprep.subr.bf16.mxu0 0
      %1488 = vmatpush1.bf16.msra.mxu0 0
      %1489 = vmatprep.subr.bf16.mxu0 0
      %1490 = vmatpush1.bf16.msra.mxu0 0
      %1491 = vmatprep.subr.bf16.mxu0 0
      %1492 = vmatpush1.bf16.msra.mxu0 0
      %1493 = vmatprep.subr.bf16.mxu0 0
      %1494 = vmatpush1.bf16.msra.mxu0 0
      %1495 = vmatprep.subr.bf16.mxu0 0
      %1496 = vmatpush1.bf16.msra.mxu0 %v1477
      %1497 = vmatprep.subr.bf16.mxu0 0
      %1498 = vmatpush1.bf16.msra.mxu0 %v1476
      %1499 = vmatprep.subr.bf16.mxu0 0
      %1500 = vmatpush2.bf16.msra.mxu0 0
      %1501 = vmatprep.subr.bf16.mxu0 0
      %1502 = vmatpush2.bf16.msra.mxu0 0
      %1503 = vmatprep.subr.bf16.mxu0 0
      %1504 = vmatpush2.bf16.msra.mxu0 0
      %1505 = vmatprep.subr.bf16.mxu0 0
      %1506 = vmatpush2.bf16.msra.mxu0 0
      %1507 = vmatprep.subr.bf16.mxu0 0
      %1508 = vmatpush2.bf16.msra.mxu0 0
      %1509 = vmatprep.subr.bf16.mxu0 0
      %1510 = vmatpush2.bf16.msra.mxu0 0
      %1511 = vmatprep.subr.bf16.mxu0 0
      %1512 = vmatpush2.bf16.msra.mxu0 0
      %1513 = vmatprep.subr.bf16.mxu0 0
      %1514 = vmatpush2.bf16.msra.mxu0 0
      %1515 = vmatprep.mubr.bf16.mxu0 0
      %1516 = vmatmul.mubr.bf16.gmra.mxu0 %v1481
      %v1517 = vpop.f32.mrf.mxu0
      %v1518 = vadd.f32 %v1466, %v1517
      %v1519 = vpop.f32.mrf.mxu0
      %v1520 = vpop.f32.mrf.mxu0
      %v1521 = vadd.f32 %v1466, %v1520
      %v1522 = vpop.f32.mrf.mxu0
      %1523 = vdwg.mxu0
      %v1524 = vmul.f32 %v1518, 0.5
      %v1525 = vmul.f32 %v1521, 0.5
      %v1526 = vmul.f32 %v1518, 0.044715
      %v1527 = vmul.f32 %v1521, 0.044715
      %v1528 = vmul.f32 %v1526, %v1518
      %v1529 = vmul.f32 %v1527, %v1521
      %v1530 = vmul.f32 %v1528, %v1518
      %v1531 = vmul.f32 %v1529, %v1521
      %v1532 = vadd.f32 %v1518, %v1530
      %v1533 = vadd.f32 %v1521, %v1531
      %v1534 = vmul.f32 %v1532, 0.7978846
      %v1535 = vmul.f32 %v1533, 0.7978846
      %v1536 = vtanh.pop %v1534
      %v1537 = vtanh.pop %v1535
      %v1538 = vadd.f32 %v1536, 1.0
      %v1539 = vadd.f32 %v1537, 1.0
      %v1540 = vmul.f32 %v1524, %v1538
      %v1541 = vmul.f32 %v1525, %v1539
      %v1542 = vpack.c.bf16 %v1541, %v1540
      %v1543 = vld [vmem:[%s675] sm:$0xf]
      %v1544 = vld [vmem:[%s675 + $0x4] sm:$0xf]
      %v1545 = vld [vmem:[%s675 + $0x8] sm:$0xf]
      %v1546 = vld [vmem:[%s675 + $0xc] sm:$0xf]
      %v1547 = vld [vmem:[%s675 + $0x10] sm:$0xf]
      %v1548 = vld [vmem:[%s675 + $0x14] sm:$0xf]
      %v1549 = vld [vmem:[%s675 + $0x18] sm:$0xf]
      %v1550 = vld [vmem:[%s675 + $0x1c] sm:$0xf]
      %v1551 = vld [vmem:[%s675 + $0x20] sm:$0xf]
      %v1552 = vld [vmem:[%s675 + $0x24] sm:$0xf]
      %v1553 = vld [vmem:[%s675 + $0x28] sm:$0xf]
      %v1554 = vld [vmem:[%s675 + $0x2c] sm:$0xf]
      %v1555 = vld [vmem:[%s675 + $0x30] sm:$0xf]
      %v1556 = vld [vmem:[%s675 + $0x34] sm:$0xf]
      %v1557 = vld [vmem:[%s675 + $0x38] sm:$0xf]
      %v1558 = vld [vmem:[%s675 + $0x3c] sm:$0xf]
      %v1575 = vunpack.c.l.b16 %v1543
      %v1576 = vunpack.c.l.b16 %v1544
      %v1577 = vunpack.c.l.b16 %v1545
      %v1578 = vunpack.c.l.b16 %v1546
      %v1579 = vunpack.c.l.b16 %v1547
      %v1580 = vunpack.c.l.b16 %v1548
      %v1581 = vunpack.c.l.b16 %v1549
      %v1582 = vunpack.c.l.b16 %v1550
      %v1583 = vunpack.c.l.b16 %v1551
      %v1584 = vunpack.c.l.b16 %v1552
      %v1585 = vunpack.c.l.b16 %v1553
      %v1586 = vunpack.c.l.b16 %v1554
      %v1587 = vunpack.c.l.b16 %v1555
      %v1588 = vunpack.c.l.b16 %v1556
      %v1589 = vunpack.c.l.b16 %v1557
      %v1590 = vunpack.c.l.b16 %v1558
      %v1591 = vpack.c.b16 %v1576, %v1575
      %v1592 = vpack.c.b16 %v1578, %v1577
      %v1593 = vpack.c.b16 %v1580, %v1579
      %v1594 = vpack.c.b16 %v1582, %v1581
      %v1595 = vpack.c.b16 %v1584, %v1583
      %v1596 = vpack.c.b16 %v1586, %v1585
      %v1597 = vpack.c.b16 %v1588, %v1587
      %v1598 = vpack.c.b16 %v1590, %v1589
      %1607 = vmatprep.subr.bf16.mxu0 0
      %1608 = vmatpush1.bf16.msra.mxu0 %v1598
      %1609 = vmatprep.subr.bf16.mxu0 0
      %1610 = vmatpush1.bf16.msra.mxu0 %v1597
      %1611 = vmatprep.subr.bf16.mxu0 0
      %1612 = vmatpush1.bf16.msra.mxu0 %v1596
      %1613 = vmatprep.subr.bf16.mxu0 0
      %1614 = vmatpush1.bf16.msra.mxu0 %v1595
      %1615 = vmatprep.subr.bf16.mxu0 0
      %1616 = vmatpush1.bf16.msra.mxu0 %v1594
      %1617 = vmatprep.subr.bf16.mxu0 0
      %1618 = vmatpush1.bf16.msra.mxu0 %v1593
      %1619 = vmatprep.subr.bf16.mxu0 0
      %1620 = vmatpush1.bf16.msra.mxu0 %v1592
      %1621 = vmatprep.subr.bf16.mxu0 0
      %1622 = vmatpush1.bf16.msra.mxu0 %v1591
      %1623 = vmatprep.subr.bf16.mxu0 0
      %1624 = vmatpush2.bf16.msra.mxu0 0
      %1625 = vmatprep.subr.bf16.mxu0 0
      %1626 = vmatpush2.bf16.msra.mxu0 0
      %1627 = vmatprep.subr.bf16.mxu0 0
      %1628 = vmatpush2.bf16.msra.mxu0 0
      %1629 = vmatprep.subr.bf16.mxu0 0
      %1630 = vmatpush2.bf16.msra.mxu0 0
      %1631 = vmatprep.subr.bf16.mxu0 0
      %1632 = vmatpush2.bf16.msra.mxu0 0
      %1633 = vmatprep.subr.bf16.mxu0 0
      %1634 = vmatpush2.bf16.msra.mxu0 0
      %1635 = vmatprep.subr.bf16.mxu0 0
      %1636 = vmatpush2.bf16.msra.mxu0 0
      %1637 = vmatprep.subr.bf16.mxu0 0
      %1638 = vmatpush2.bf16.msra.mxu0 0
      %1639 = vmatprep.mubr.bf16.mxu0 0
      %1640 = vmatmul.mubr.bf16.gmra.mxu0 %v1542
      %v1641 = vpop.f32.mrf.mxu0
      %v1642 = vadd.f32 0.0, %v1641
      %v1643 = vpop.f32.mrf.mxu0
      %v1644 = vpop.f32.mrf.mxu0
      %v1645 = vadd.f32 0.0, %v1644
      %v1646 = vpop.f32.mrf.mxu0
      %1647 = vdwg.mxu0
      %v1648 = vadd.f32 %v1410, %v1642
      %v1649 = vadd.f32 %v1411, %v1645
      %v1650 = vld [vmem:[%s678] sm:$0x1]
      %v1652 = vlaneseq
      %v1653 = vshrl.u32 %v1652, 7
      %v1654 = vsub.s32 0, %v1653
      %v1655 = vrot.slane %v1650, %v1654
      %v1657 = vadd.f32 %v1648, %v1655
      %v1658 = vadd.f32 %v1649, %v1655
      %1659 = vst.msk [vmem:[%s16] sm:$0xff] %vm693, %v1657
      %1660 = vst.msk [vmem:[%s16 + $0x8] sm:$0xff] %vm693, %v1658
      %p1661 = scmp.eq.s32.totalorder %s27, 1
      // Predicated region
      $region89: #{pointcloud_encoder_forward.3} parent=83 // pred_check
        %p1662 = pneg %p1661
      $region90: #{pointcloud_encoder_forward.3} parent=83 // pred_check_branch
        %1664 = sbr.rel (%p1662) target = $region92
      $region91: #{pointcloud_encoder_forward.3} parent=83 // pred_region
        %v1665 = vld [vmem:[%s14] sm:$0x1]
        %v1666 = vld [vmem:[%s15] sm:$0x1]
        %v1667 = vsel %vm693, %v1657, 0.0
        %1668 = vadd.xlane.f32.xlu0 %v1667
        %v1669 = vpop.xlane.xlu0 %1668
        %v1670 = vsel %vm693, %v1658, 0.0
        %1671 = vadd.xlane.f32.xlu0 %v1670
        %v1672 = vpop.xlane.xlu0 %1671
        %v1673 = vmul.f32 %v1669, %v700
        %v1674 = vmul.f32 %v1672, %v700
        %v1675 = vsub.f32 %v1657, %v1673
        %v1676 = vsub.f32 %v1658, %v1674
        %v1677 = vmul.f32 %v1675, %v1675
        %v1678 = vmul.f32 %v1676, %v1676
        %v1679 = vsel %vm693, %v1677, 0.0
        %1680 = vadd.xlane.f32.xlu0 %v1679
        %v1681 = vpop.xlane.xlu0 %1680
        %v1682 = vsel %vm693, %v1678, 0.0
        %1683 = vadd.xlane.f32.xlu0 %v1682
        %v1684 = vpop.xlane.xlu0 %1683
        %v1685 = vmul.f32 %v1681, %v700
        %v1686 = vmul.f32 %v1684, %v700
        %v1687 = vadd.f32 %v1685, 1e-05
        %v1688 = vadd.f32 %v1686, 1e-05
        %v1689 = vrsqrt.pop %v1687
        %v1690 = vrsqrt.pop %v1688
        %v1691 = vmul.f32 %v1675, %v1689
        %v1692 = vmul.f32 %v1676, %v1690
        %v1694 = vlaneseq
        %v1695 = vshrl.u32 %v1694, 7
        %v1696 = vsub.s32 0, %v1695
        %v1697 = vrot.slane %v1665, %v1696
        %v1699 = vmul.f32 %v1691, %v1697
        %v1700 = vmul.f32 %v1692, %v1697
        %v1702 = vlaneseq
        %v1703 = vshrl.u32 %v1702, 7
        %v1704 = vsub.s32 0, %v1703
        %v1705 = vrot.slane %v1666, %v1704
        %v1707 = vadd.f32 %v1699, %v1705
        %v1708 = vadd.f32 %v1700, %v1705
        %1709 = vst.msk [vmem:[%s16] sm:$0xff] %vm693, %v1707
        %1710 = vst.msk [vmem:[%s16 + $0x8] sm:$0xff] %vm693, %v1708
      $region92: #{pointcloud_encoder_forward.3} parent=83 // pred_fallthru
        _
      // Predicated region
      $region93: #{pointcloud_encoder_forward.3} parent=83 // pred_check
        %p1711 = pneg %p436
      $region94: #{pointcloud_encoder_forward.3} parent=83 // pred_check_branch
        %1713 = sbr.rel (%p1711) target = $region96
      $region95: #{pointcloud_encoder_forward.3} parent=83 // pred_region
        _
      $region96: #{pointcloud_encoder_forward.3} parent=83 // pred_fallthru
        _
      // Predicated region
      $region97: #{pointcloud_encoder_forward.3} parent=83 // pred_check
        %p1714 = pneg %p436
      $region98: #{pointcloud_encoder_forward.3} parent=83 // pred_check_branch
        %1716 = sbr.rel (%p1714) target = $region100
      $region99: #{pointcloud_encoder_forward.3} parent=83 // pred_region
        _
      $region100: #{pointcloud_encoder_forward.3} parent=83 // pred_fallthru
        _
    $region84: #{pointcloud_encoder_forward.3} parent=5 // pred_fallthru
      _
    %p1717 = scmp.le.s32.totalorder 2, %s22
    // Predicated region
    $region101: #{pointcloud_encoder_forward.3} parent=5 // pred_check
      %p1718 = pneg %p1717
    $region102: #{pointcloud_encoder_forward.3} parent=5 // pred_check_branch
      %1720 = sbr.rel (%p1718) target = $region104
    $region103: #{pointcloud_encoder_forward.3} parent=5 // pred_region
      %s1721 = ssub.s32 %s22, 2
    $region104: #{pointcloud_encoder_forward.3} parent=5 // pred_fallthru
      _
  $region6: #{pointcloud_encoder_forward.3} parent=0 // loop_footer
    %s26 = sadd.s32 1, %s22
  $region7: #{pointcloud_encoder_forward.3} parent=0 // loop_footer_branch
    %21 = sbr.rel target = $region3
  $region8: #{pointcloud_encoder_forward.3} parent=0 // loop_exit
    _

</llo_original>
